<compile_context>
chip_gen: v7x
topology: tpu7x:2x2x1
jax: 0.10.0
libtpu: 0.0.40
codegen_flags: <defaults>
</compile_context>

<pallas_src>
import functools
import random

import jax
import jax.numpy as jnp
from jax.experimental import pallas as pl
from jax.experimental.pallas import tpu as pltpu

H, W = 56, 56
CIN, COUT = 64, 64
KW, L = 3, 2
NPIX = H * W          # 3136 lanes, r = o*56 + n
KDIM = KW * CIN       # 192 contraction size (tap-major: k*64 + j)


def _conv_roll_kernel(x_ref, w_ref, m_ref, o_ref, *, r0, r1):
    """x_ref: (64, 3136) f32   input channels x (H*W), r = o*56 + n
       w_ref: (128, 192) bf16  fused weights, row = l*64 + i, col = k*64 + j
       m_ref: (2, 3136)  bf16  tap edge masks (row 0 kills n==0, row 1 kills n==55)
       o_ref: (64, 3136) f32   output channels x (H*W)
    """
    xb = x_ref[...].astype(jnp.bfloat16)                    # (64, 3136)
    m0 = m_ref[0:1, :]                                      # (1, 3136)
    m2 = m_ref[1:2, :]

    # conv taps: k=0 -> x[., n-1], k=1 -> x[., n], k=2 -> x[., n+1];
    # columns that would cross an H-row boundary are zeroed by the masks
    # (this reproduces the zero padding of the width-3 unfold).
    x_km1 = jnp.roll(xb, 1, axis=1) * m0                    # tap k = 0
    x_kp1 = jnp.roll(xb, -1, axis=1) * m2                   # tap k = 2

    # in-VMEM im2col tile: rows = k*64 + j
    x3 = jnp.concatenate([x_km1, xb, x_kp1], axis=0)        # (192, 3136) bf16

    # single fused MXU matmul -> (128, 3136) f32; rows 0:64 = l=0, 64:128 = l=1
    acc = jnp.dot(w_ref[...], x3, preferred_element_type=jnp.float32)

    # roll/reshape/sum/roll tail:
    #   y[:, r] = acc_l0[:, (r - 56*r0) % 3136] + acc_l1[:, (r - 56*r1) % 3136]
    # Emit as up-to-3 segmented stores (static slices), so each output lane is
    # written exactly once and no rolled temporaries are materialized.
    R0 = (W * r0) % NPIX
    R1 = (W * r1) % NPIX
    cuts = sorted({0, R0, R1, NPIX})
    for a, b in zip(cuts[:-1], cuts[1:]):
        if b <= a:
            continue
        s0 = (a - R0) % NPIX
        s1 = (a - R1) % NPIX
        width = b - a
        o_ref[:, a:b] = (acc[0:COUT, s0:s0 + width]
                         + acc[COUT:2 * COUT, s1:s1 + width])


def kernel_generated_0_forward(x, w, shift_direction):
    """x: (1, 64, 56, 56) f32 NCHW, w: (64, 64, 2, 3) f32, shift in {-1, +1}."""
    # Native NCHW flattening: lanes r = o*56 + n (pure view, no data movement).
    x_flat = x[0].reshape(CIN, NPIX)                                  # (64, 3136)

    # Fused bf16 weights: row c = l*64 + i, col = k*64 + j.
    w_fused = (jnp.transpose(w, (2, 0, 3, 1))                         # (l, i, k, j)
               .reshape(L * COUT, KW * CIN)
               .astype(jnp.bfloat16))                                 # (128, 192)

    # Tap boundary masks (constant; folded at compile time under jit).
    n_idx = jnp.arange(NPIX, dtype=jnp.int32) % W
    masks = jnp.stack([n_idx != 0, n_idx != W - 1]).astype(jnp.bfloat16)  # (2, 3136)

    # Derived roll amounts (static Python ints — shift_direction must stay static).
    r0, r1 = (1, 2) if shift_direction == 1 else (-2, -1)

    y_flat = pl.pallas_call(
        functools.partial(_conv_roll_kernel, r0=r0, r1=r1),
        out_shape=jax.ShapeDtypeStruct((COUT, NPIX), jnp.float32),
        compiler_params=pltpu.CompilerParams(
            vmem_limit_bytes=32 * 1024 * 1024),
        cost_estimate=pl.CostEstimate(
            flops=2 * (L * COUT) * KDIM * NPIX,        # ~154 MFLOP
            transcendentals=0,
            bytes_accessed=(CIN * NPIX * 4              # x  (f32 in)
                            + (L * COUT) * KDIM * 2     # fused weights (bf16)
                            + 2 * NPIX * 2              # masks
                            + COUT * NPIX * 4)),        # y  (f32 out)
    )(x_flat, w_fused, masks)

    # back to NCHW — pure reshape, no transpose/slice needed.
    return y_flat.reshape(1, COUT, H, W)


def reference_forward(x, w, shift):
    """Direct JAX transcription of the torch forward (validation only)."""
    t2 = x.reshape(1, 3584, 56, 1)
    tp = jnp.pad(t2, ((0, 0), (0, 0), (1, 1), (0, 0)))
    patches = jnp.stack([tp[:, :, k:k + 56, 0] for k in range(3)], axis=2)
    t2 = patches.reshape(1, 64, 56, 3, 56)
    t3 = jnp.einsum('mjokn,ijlk->mioln', t2, w,
                    precision=jax.lax.Precision.HIGHEST)
    t4 = t3.reshape(1, 64, 112, 56)
    t4 = jnp.roll(t4, shift, axis=2)
    t4 = t4.reshape(1, 64, 56, 2, 56)
    t4 = jnp.sum(t4, axis=3)
    return jnp.roll(t4, shift, axis=2)


if __name__ == "__main__":
    # torch module picks shift_direction randomly; fix it deterministically.
    random.seed(0)
    module_shift = int(random.random() > 0.5) * 2 - 1

    key = jax.random.PRNGKey(0)
    kx, kw = jax.random.split(key)
    # shapes are hard-coded by the module (3584 = 64*56): x must be (1, 64, 56, 56)
    x = jax.random.normal(kx, (1, CIN, H, W), dtype=jnp.float32)
    w = jax.random.normal(kw, (COUT, CIN, L, KW), dtype=jnp.float32)

    fwd = jax.jit(kernel_generated_0_forward, static_argnums=2)

    # validate both roll directions (the module chooses one at random)
    for shift in (module_shift, -module_shift):
        y = jax.block_until_ready(fwd(x, w, shift))
        y_ref = reference_forward(x, w, shift)
        assert y.shape == (1, COUT, H, W) and y.dtype == jnp.float32
        max_err = float(jnp.max(jnp.abs(y - y_ref)))
        assert jnp.allclose(y, y_ref, rtol=2e-2, atol=2.5e-1), (shift, max_err)

    print("KERNEL_OK")
</pallas_src>

<mosaic_0001>
module attributes {stable_mosaic.version = 11 : i64} {
  func.func @_conv_roll_kernel(%arg0: memref<64x3136xf32, #tpu.memory_space<vmem>>, %arg1: memref<128x192xbf16, #tpu.memory_space<vmem>>, %arg2: memref<2x3136xbf16, #tpu.memory_space<vmem>>, %arg3: memref<64x3136xf32, #tpu.memory_space<vmem>>) attributes {dimension_semantics = [], scalar_prefetch = 0 : i64, scratch_operands = 0 : i64, tpu.core_type = #tpu.core_type<tc>} {
    %c0 = arith.constant 0 : index
    %c0_0 = arith.constant 0 : index
    %0 = vector.load %arg0[%c0, %c0_0] : memref<64x3136xf32, #tpu.memory_space<vmem>>, vector<64x3136xf32>
    %1 = arith.truncf %0 : vector<64x3136xf32> to vector<64x3136xbf16>
    %c0_1 = arith.constant 0 : index
    %c0_2 = arith.constant 0 : index
    %2 = vector.load %arg2[%c0_1, %c0_2] : memref<2x3136xbf16, #tpu.memory_space<vmem>>, vector<1x3136xbf16>
    %c1 = arith.constant 1 : index
    %c0_3 = arith.constant 0 : index
    %3 = vector.load %arg2[%c1, %c0_3] : memref<2x3136xbf16, #tpu.memory_space<vmem>>, vector<1x3136xbf16>
    %4 = vector.extract_strided_slice %1 {offsets = [0, 3135], sizes = [64, 1], strides = [1, 1]} : vector<64x3136xbf16> to vector<64x1xbf16>
    %5 = vector.extract_strided_slice %1 {offsets = [0, 0], sizes = [64, 3135], strides = [1, 1]} : vector<64x3136xbf16> to vector<64x3135xbf16>
    %6 = tpu.concatenate %4, %5 in 1 : vector<64x1xbf16>, vector<64x3135xbf16> -> vector<64x3136xbf16>
    %7 = vector.broadcast %2 : vector<1x3136xbf16> to vector<64x3136xbf16>
    %8 = arith.mulf %6, %7 : vector<64x3136xbf16>
    %9 = vector.extract_strided_slice %1 {offsets = [0, 1], sizes = [64, 3135], strides = [1, 1]} : vector<64x3136xbf16> to vector<64x3135xbf16>
    %10 = vector.extract_strided_slice %1 {offsets = [0, 0], sizes = [64, 1], strides = [1, 1]} : vector<64x3136xbf16> to vector<64x1xbf16>
    %11 = tpu.concatenate %9, %10 in 1 : vector<64x3135xbf16>, vector<64x1xbf16> -> vector<64x3136xbf16>
    %12 = vector.broadcast %3 : vector<1x3136xbf16> to vector<64x3136xbf16>
    %13 = arith.mulf %11, %12 : vector<64x3136xbf16>
    %14 = tpu.concatenate %8, %1, %13 in 0 : vector<64x3136xbf16>, vector<64x3136xbf16>, vector<64x3136xbf16> -> vector<192x3136xbf16>
    %c0_4 = arith.constant 0 : index
    %c0_5 = arith.constant 0 : index
    %15 = vector.load %arg1[%c0_4, %c0_5] : memref<128x192xbf16, #tpu.memory_space<vmem>>, vector<128x192xbf16>
    %cst = arith.constant dense<0.000000e+00> : vector<128x3136xf32>
    %16 = tpu.matmul %15, %14, %cst {dimension_numbers = #tpu.dot_dimension_numbers<[1], [0], [0], [1], [0, 0, 1, 1], [], []>} : vector<128x192xbf16>, vector<192x3136xbf16>, vector<128x3136xf32> -> vector<128x3136xf32>
    %17 = vector.extract_strided_slice %16 {offsets = [0, 3080], sizes = [64, 56], strides = [1, 1]} : vector<128x3136xf32> to vector<64x56xf32>
    %18 = vector.extract_strided_slice %16 {offsets = [64, 3024], sizes = [64, 56], strides = [1, 1]} : vector<128x3136xf32> to vector<64x56xf32>
    %19 = arith.addf %17, %18 : vector<64x56xf32>
    %c0_6 = arith.constant 0 : index
    %c0_7 = arith.constant 0 : index
    %20 = vector.load %arg3[%c0_6, %c0_7] : memref<64x3136xf32, #tpu.memory_space<vmem>>, vector<64x56xf32>
    tpu.vector_store %arg3[%c0_6, %c0_7], %19 {strides = array<i32>} : memref<64x3136xf32, #tpu.memory_space<vmem>>, vector<64x56xf32>,
    %21 = vector.extract_strided_slice %16 {offsets = [0, 0], sizes = [64, 56], strides = [1, 1]} : vector<128x3136xf32> to vector<64x56xf32>
    %22 = vector.extract_strided_slice %16 {offsets = [64, 3080], sizes = [64, 56], strides = [1, 1]} : vector<128x3136xf32> to vector<64x56xf32>
    %23 = arith.addf %21, %22 : vector<64x56xf32>
    %c0_8 = arith.constant 0 : index
    %c56 = arith.constant 56 : index
    %24 = vector.load %arg3[%c0_8, %c56] : memref<64x3136xf32, #tpu.memory_space<vmem>>, vector<64x56xf32>
    tpu.vector_store %arg3[%c0_8, %c56], %23 {strides = array<i32>} : memref<64x3136xf32, #tpu.memory_space<vmem>>, vector<64x56xf32>,
    %25 = vector.extract_strided_slice %16 {offsets = [0, 56], sizes = [64, 3024], strides = [1, 1]} : vector<128x3136xf32> to vector<64x3024xf32>
    %26 = vector.extract_strided_slice %16 {offsets = [64, 0], sizes = [64, 3024], strides = [1, 1]} : vector<128x3136xf32> to vector<64x3024xf32>
    %27 = arith.addf %25, %26 : vector<64x3024xf32>
    %c0_9 = arith.constant 0 : index
    %c112 = arith.constant 112 : index
    %28 = vector.load %arg3[%c0_9, %c112] : memref<64x3136xf32, #tpu.memory_space<vmem>>, vector<64x3024xf32>
    tpu.vector_store %arg3[%c0_9, %c112], %27 {strides = array<i32>} : memref<64x3136xf32, #tpu.memory_space<vmem>>, vector<64x3024xf32>,
    return
  }
}

</mosaic_0001>

<llo_original>
// kernel: kernel_generated_0_forward.1
$region0: #{kernel_generated_0_forward.1}
  #allocation0 [shape = 'u32[]', space=smem, size = 0x4, offset = 0x4, fixed_abs, tag = 'smem constant byte address 0x4 - core index']
  #allocation1 [shape = 'u32[144,128]{1,0:T(1,128)}', space=vmem, size = 0x12000, scoped, tag = 'internal scratch']
  %s0 = inlined_call_operand.vmem [shape: f32[64,3136], index: 0, kind: input, shape index: {}]
  %s1 = inlined_call_operand.vmem [shape: bf16[128,192], index: 1, kind: input, shape index: {}]
  %s2 = inlined_call_operand.vmem [shape: bf16[2,3136], index: 2, kind: input, shape index: {}]
  %s3 = inlined_call_operand.vmem [shape: f32[64,3136], index: 3, kind: output, shape index: {}]
  %s4 = sld [smem:[#allocation0]]
  $region22: #{kernel_generated_0_forward.1} parent=0
    _
  %s6 = ssub.s32 1, %s4
  %s7 = scalar_select 0, %s6, %s4
  // Predicated region
  $region2: #{kernel_generated_0_forward.1} parent=0 // pred_check
    _
  $region3: #{kernel_generated_0_forward.1} parent=0 // pred_check_branch
    %9 = sbr.rel (0) target = $region5
  $region4: #{kernel_generated_0_forward.1} parent=0 // pred_region
    _
  $region5: #{kernel_generated_0_forward.1} parent=0 // pred_fallthru
    _
  // Predicated region
  $region6: #{kernel_generated_0_forward.1} parent=0 // pred_check
    _
  $region7: #{kernel_generated_0_forward.1} parent=0 // pred_check_branch
    %11 = sbr.rel (0) target = $region9
  $region8: #{kernel_generated_0_forward.1} parent=0 // pred_region
    _
  $region9: #{kernel_generated_0_forward.1} parent=0 // pred_fallthru
    _
  // Predicated region
  $region10: #{kernel_generated_0_forward.1} parent=0 // pred_check
    _
  $region11: #{kernel_generated_0_forward.1} parent=0 // pred_check_branch
    %13 = sbr.rel (0) target = $region13
  $region12: #{kernel_generated_0_forward.1} parent=0 // pred_region
    _
  $region13: #{kernel_generated_0_forward.1} parent=0 // pred_fallthru
    _
  %v15 = vld [vmem:[%s0] sm:$0xff]
  %v16 = vld [vmem:[%s0 + $0x8] sm:$0xff]
  %v17 = vld [vmem:[%s0 + $0x10] sm:$0xff]
  %v18 = vld [vmem:[%s0 + $0x18] sm:$0xff]
  %v19 = vld [vmem:[%s0 + $0x20] sm:$0xff]
  %v20 = vld [vmem:[%s0 + $0x28] sm:$0xff]
  %v21 = vld [vmem:[%s0 + $0x30] sm:$0xff]
  %v22 = vld [vmem:[%s0 + $0x38] sm:$0xff]
  %v23 = vld [vmem:[%s0 + $0x40] sm:$0xff]
  %v24 = vld [vmem:[%s0 + $0x48] sm:$0xff]
  %v25 = vld [vmem:[%s0 + $0x50] sm:$0xff]
  %v26 = vld [vmem:[%s0 + $0x58] sm:$0xff]
  %v27 = vld [vmem:[%s0 + $0x60] sm:$0xff]
  %v28 = vld [vmem:[%s0 + $0x68] sm:$0xff]
  %v29 = vld [vmem:[%s0 + $0x70] sm:$0xff]
  %v30 = vld [vmem:[%s0 + $0x78] sm:$0xff]
  %v31 = vld [vmem:[%s0 + $0x80] sm:$0xff]
  %v32 = vld [vmem:[%s0 + $0x88] sm:$0xff]
  %v33 = vld [vmem:[%s0 + $0x90] sm:$0xff]
  %v34 = vld [vmem:[%s0 + $0x98] sm:$0xff]
  %v35 = vld [vmem:[%s0 + $0xa0] sm:$0xff]
  %v36 = vld [vmem:[%s0 + $0xa8] sm:$0xff]
  %v37 = vld [vmem:[%s0 + $0xb0] sm:$0xff]
  %v38 = vld [vmem:[%s0 + $0xb8] sm:$0xff]
  %v39 = vld [vmem:[%s0 + $0xc0] sm:$0xff]
  %v40 = vld [vmem:[%s0 + $0xc8] sm:$0xff]
  %v41 = vld [vmem:[%s0 + $0xd0] sm:$0xff]
  %v42 = vld [vmem:[%s0 + $0xd8] sm:$0xff]
  %v43 = vld [vmem:[%s0 + $0xe0] sm:$0xff]
  %v44 = vld [vmem:[%s0 + $0xe8] sm:$0xff]
  %v45 = vld [vmem:[%s0 + $0xf0] sm:$0xff]
  %v46 = vld [vmem:[%s0 + $0xf8] sm:$0xff]
  %v47 = vld [vmem:[%s0 + $0x100] sm:$0xff]
  %v48 = vld [vmem:[%s0 + $0x108] sm:$0xff]
  %v49 = vld [vmem:[%s0 + $0x110] sm:$0xff]
  %v50 = vld [vmem:[%s0 + $0x118] sm:$0xff]
  %v51 = vld [vmem:[%s0 + $0x120] sm:$0xff]
  %v52 = vld [vmem:[%s0 + $0x128] sm:$0xff]
  %v53 = vld [vmem:[%s0 + $0x130] sm:$0xff]
  %v54 = vld [vmem:[%s0 + $0x138] sm:$0xff]
  %v55 = vld [vmem:[%s0 + $0x140] sm:$0xff]
  %v56 = vld [vmem:[%s0 + $0x148] sm:$0xff]
  %v57 = vld [vmem:[%s0 + $0x150] sm:$0xff]
  %v58 = vld [vmem:[%s0 + $0x158] sm:$0xff]
  %v59 = vld [vmem:[%s0 + $0x160] sm:$0xff]
  %v60 = vld [vmem:[%s0 + $0x168] sm:$0xff]
  %v61 = vld [vmem:[%s0 + $0x170] sm:$0xff]
  %v62 = vld [vmem:[%s0 + $0x178] sm:$0xff]
  %v63 = vld [vmem:[%s0 + $0x180] sm:$0xff]
  %v64 = vld [vmem:[%s0 + $0x188] sm:$0xff]
  %v65 = vld [vmem:[%s0 + $0x190] sm:$0xff]
  %v66 = vld [vmem:[%s0 + $0x198] sm:$0xff]
  %v67 = vld [vmem:[%s0 + $0x1a0] sm:$0xff]
  %v68 = vld [vmem:[%s0 + $0x1a8] sm:$0xff]
  %v69 = vld [vmem:[%s0 + $0x1b0] sm:$0xff]
  %v70 = vld [vmem:[%s0 + $0x1b8] sm:$0xff]
  %v71 = vld [vmem:[%s0 + $0x1c0] sm:$0xff]
  %v72 = vld [vmem:[%s0 + $0x1c8] sm:$0xff]
  %v73 = vld [vmem:[%s0 + $0x1d0] sm:$0xff]
  %v74 = vld [vmem:[%s0 + $0x1d8] sm:$0xff]
  %v75 = vld [vmem:[%s0 + $0x1e0] sm:$0xff]
  %v76 = vld [vmem:[%s0 + $0x1e8] sm:$0xff]
  %v77 = vld [vmem:[%s0 + $0x1f0] sm:$0xff]
  %v78 = vld [vmem:[%s0 + $0x1f8] sm:$0xff]
  %v79 = vld [vmem:[%s0 + $0x200] sm:$0xff]
  %v80 = vld [vmem:[%s0 + $0x208] sm:$0xff]
  %v81 = vld [vmem:[%s0 + $0x210] sm:$0xff]
  %v82 = vld [vmem:[%s0 + $0x218] sm:$0xff]
  %v83 = vld [vmem:[%s0 + $0x220] sm:$0xff]
  %v84 = vld [vmem:[%s0 + $0x228] sm:$0xff]
  %v85 = vld [vmem:[%s0 + $0x230] sm:$0xff]
  %v86 = vld [vmem:[%s0 + $0x238] sm:$0xff]
  %v87 = vld [vmem:[%s0 + $0x240] sm:$0xff]
  %v88 = vld [vmem:[%s0 + $0x248] sm:$0xff]
  %v89 = vld [vmem:[%s0 + $0x250] sm:$0xff]
  %v90 = vld [vmem:[%s0 + $0x258] sm:$0xff]
  %v91 = vld [vmem:[%s0 + $0x260] sm:$0xff]
  %v92 = vld [vmem:[%s0 + $0x268] sm:$0xff]
  %v93 = vld [vmem:[%s0 + $0x270] sm:$0xff]
  %v94 = vld [vmem:[%s0 + $0x278] sm:$0xff]
  %v95 = vld [vmem:[%s0 + $0x280] sm:$0xff]
  %v96 = vld [vmem:[%s0 + $0x288] sm:$0xff]
  %v97 = vld [vmem:[%s0 + $0x290] sm:$0xff]
  %v98 = vld [vmem:[%s0 + $0x298] sm:$0xff]
  %v99 = vld [vmem:[%s0 + $0x2a0] sm:$0xff]
  %v100 = vld [vmem:[%s0 + $0x2a8] sm:$0xff]
  %v101 = vld [vmem:[%s0 + $0x2b0] sm:$0xff]
  %v102 = vld [vmem:[%s0 + $0x2b8] sm:$0xff]
  %v103 = vld [vmem:[%s0 + $0x2c0] sm:$0xff]
  %v104 = vld [vmem:[%s0 + $0x2c8] sm:$0xff]
  %v105 = vld [vmem:[%s0 + $0x2d0] sm:$0xff]
  %v106 = vld [vmem:[%s0 + $0x2d8] sm:$0xff]
  %v107 = vld [vmem:[%s0 + $0x2e0] sm:$0xff]
  %v108 = vld [vmem:[%s0 + $0x2e8] sm:$0xff]
  %v109 = vld [vmem:[%s0 + $0x2f0] sm:$0xff]
  %v110 = vld [vmem:[%s0 + $0x2f8] sm:$0xff]
  %v111 = vld [vmem:[%s0 + $0x300] sm:$0xff]
  %v112 = vld [vmem:[%s0 + $0x308] sm:$0xff]
  %v113 = vld [vmem:[%s0 + $0x310] sm:$0xff]
  %v114 = vld [vmem:[%s0 + $0x318] sm:$0xff]
  %v115 = vld [vmem:[%s0 + $0x320] sm:$0xff]
  %v116 = vld [vmem:[%s0 + $0x328] sm:$0xff]
  %v117 = vld [vmem:[%s0 + $0x330] sm:$0xff]
  %v118 = vld [vmem:[%s0 + $0x338] sm:$0xff]
  %v119 = vld [vmem:[%s0 + $0x340] sm:$0xff]
  %v120 = vld [vmem:[%s0 + $0x348] sm:$0xff]
  %v121 = vld [vmem:[%s0 + $0x350] sm:$0xff]
  %v122 = vld [vmem:[%s0 + $0x358] sm:$0xff]
  %v123 = vld [vmem:[%s0 + $0x360] sm:$0xff]
  %v124 = vld [vmem:[%s0 + $0x368] sm:$0xff]
  %v125 = vld [vmem:[%s0 + $0x370] sm:$0xff]
  %v126 = vld [vmem:[%s0 + $0x378] sm:$0xff]
  %v127 = vld [vmem:[%s0 + $0x380] sm:$0xff]
  %v128 = vld [vmem:[%s0 + $0x388] sm:$0xff]
  %v129 = vld [vmem:[%s0 + $0x390] sm:$0xff]
  %v130 = vld [vmem:[%s0 + $0x398] sm:$0xff]
  %v131 = vld [vmem:[%s0 + $0x3a0] sm:$0xff]
  %v132 = vld [vmem:[%s0 + $0x3a8] sm:$0xff]
  %v133 = vld [vmem:[%s0 + $0x3b0] sm:$0xff]
  %v134 = vld [vmem:[%s0 + $0x3b8] sm:$0xff]
  %v135 = vld [vmem:[%s0 + $0x3c0] sm:$0xff]
  %v136 = vld [vmem:[%s0 + $0x3c8] sm:$0xff]
  %v137 = vld [vmem:[%s0 + $0x3d0] sm:$0xff]
  %v138 = vld [vmem:[%s0 + $0x3d8] sm:$0xff]
  %v139 = vld [vmem:[%s0 + $0x3e0] sm:$0xff]
  %v140 = vld [vmem:[%s0 + $0x3e8] sm:$0xff]
  %v141 = vld [vmem:[%s0 + $0x3f0] sm:$0xff]
  %v142 = vld [vmem:[%s0 + $0x3f8] sm:$0xff]
  %v143 = vld [vmem:[%s0 + $0x400] sm:$0xff]
  %v144 = vld [vmem:[%s0 + $0x408] sm:$0xff]
  %v145 = vld [vmem:[%s0 + $0x410] sm:$0xff]
  %v146 = vld [vmem:[%s0 + $0x418] sm:$0xff]
  %v147 = vld [vmem:[%s0 + $0x420] sm:$0xff]
  %v148 = vld [vmem:[%s0 + $0x428] sm:$0xff]
  %v149 = vld [vmem:[%s0 + $0x430] sm:$0xff]
  %v150 = vld [vmem:[%s0 + $0x438] sm:$0xff]
  %v151 = vld [vmem:[%s0 + $0x440] sm:$0xff]
  %v152 = vld [vmem:[%s0 + $0x448] sm:$0xff]
  %v153 = vld [vmem:[%s0 + $0x450] sm:$0xff]
  %v154 = vld [vmem:[%s0 + $0x458] sm:$0xff]
  %v155 = vld [vmem:[%s0 + $0x460] sm:$0xff]
  %v156 = vld [vmem:[%s0 + $0x468] sm:$0xff]
  %v157 = vld [vmem:[%s0 + $0x470] sm:$0xff]
  %v158 = vld [vmem:[%s0 + $0x478] sm:$0xff]
  %v159 = vld [vmem:[%s0 + $0x480] sm:$0xff]
  %v160 = vld [vmem:[%s0 + $0x488] sm:$0xff]
  %v161 = vld [vmem:[%s0 + $0x490] sm:$0xff]
  %v162 = vld [vmem:[%s0 + $0x498] sm:$0xff]
  %v163 = vld [vmem:[%s0 + $0x4a0] sm:$0xff]
  %v164 = vld [vmem:[%s0 + $0x4a8] sm:$0xff]
  %v165 = vld [vmem:[%s0 + $0x4b0] sm:$0xff]
  %v166 = vld [vmem:[%s0 + $0x4b8] sm:$0xff]
  %v167 = vld [vmem:[%s0 + $0x4c0] sm:$0xff]
  %v168 = vld [vmem:[%s0 + $0x4c8] sm:$0xff]
  %v169 = vld [vmem:[%s0 + $0x4d0] sm:$0xff]
  %v170 = vld [vmem:[%s0 + $0x4d8] sm:$0xff]
  %v171 = vld [vmem:[%s0 + $0x4e0] sm:$0xff]
  %v172 = vld [vmem:[%s0 + $0x4e8] sm:$0xff]
  %v173 = vld [vmem:[%s0 + $0x4f0] sm:$0xff]
  %v174 = vld [vmem:[%s0 + $0x4f8] sm:$0xff]
  %v175 = vld [vmem:[%s0 + $0x500] sm:$0xff]
  %v176 = vld [vmem:[%s0 + $0x508] sm:$0xff]
  %v177 = vld [vmem:[%s0 + $0x510] sm:$0xff]
  %v178 = vld [vmem:[%s0 + $0x518] sm:$0xff]
  %v179 = vld [vmem:[%s0 + $0x520] sm:$0xff]
  %v180 = vld [vmem:[%s0 + $0x528] sm:$0xff]
  %v181 = vld [vmem:[%s0 + $0x530] sm:$0xff]
  %v182 = vld [vmem:[%s0 + $0x538] sm:$0xff]
  %v183 = vld [vmem:[%s0 + $0x540] sm:$0xff]
  %v184 = vld [vmem:[%s0 + $0x548] sm:$0xff]
  %v185 = vld [vmem:[%s0 + $0x550] sm:$0xff]
  %v186 = vld [vmem:[%s0 + $0x558] sm:$0xff]
  %v187 = vld [vmem:[%s0 + $0x560] sm:$0xff]
  %v188 = vld [vmem:[%s0 + $0x568] sm:$0xff]
  %v189 = vld [vmem:[%s0 + $0x570] sm:$0xff]
  %v190 = vld [vmem:[%s0 + $0x578] sm:$0xff]
  %v191 = vld [vmem:[%s0 + $0x580] sm:$0xff]
  %v192 = vld [vmem:[%s0 + $0x588] sm:$0xff]
  %v193 = vld [vmem:[%s0 + $0x590] sm:$0xff]
  %v194 = vld [vmem:[%s0 + $0x598] sm:$0xff]
  %v195 = vld [vmem:[%s0 + $0x5a0] sm:$0xff]
  %v196 = vld [vmem:[%s0 + $0x5a8] sm:$0xff]
  %v197 = vld [vmem:[%s0 + $0x5b0] sm:$0xff]
  %v198 = vld [vmem:[%s0 + $0x5b8] sm:$0xff]
  %v199 = vld [vmem:[%s0 + $0x5c0] sm:$0xff]
  %v200 = vld [vmem:[%s0 + $0x5c8] sm:$0xff]
  %v201 = vld [vmem:[%s0 + $0x5d0] sm:$0xff]
  %v202 = vld [vmem:[%s0 + $0x5d8] sm:$0xff]
  %v203 = vld [vmem:[%s0 + $0x5e0] sm:$0xff]
  %v204 = vld [vmem:[%s0 + $0x5e8] sm:$0xff]
  %v205 = vld [vmem:[%s0 + $0x5f0] sm:$0xff]
  %v206 = vld [vmem:[%s0 + $0x5f8] sm:$0xff]
  %v207 = vld [vmem:[%s0 + $0x600] sm:$0xff]
  %v208 = vld [vmem:[%s0 + $0x608] sm:$0xff]
  %v209 = vld [vmem:[%s0 + $0x610] sm:$0xff]
  %v210 = vld [vmem:[%s0 + $0x618] sm:$0xff]
  %v211 = vld [vmem:[%s0 + $0x620] sm:$0xff]
  %v212 = vld [vmem:[%s0 + $0x628] sm:$0xff]
  %v213 = vld [vmem:[%s0 + $0x630] sm:$0xff]
  %v214 = vld [vmem:[%s0 + $0x638] sm:$0xff]
  %v215 = vpack.c.bf16 %v40, %v15
  %v216 = vpack.c.bf16 %v41, %v16
  %v217 = vpack.c.bf16 %v42, %v17
  %v218 = vpack.c.bf16 %v43, %v18
  %v219 = vpack.c.bf16 %v44, %v19
  %v220 = vpack.c.bf16 %v45, %v20
  %v221 = vpack.c.bf16 %v46, %v21
  %v222 = vpack.c.bf16 %v47, %v22
  %v223 = vpack.c.bf16 %v48, %v23
  %v224 = vpack.c.bf16 %v49, %v24
  %v225 = vpack.c.bf16 %v50, %v25
  %v226 = vpack.c.bf16 %v51, %v26
  %v227 = vpack.c.bf16 %v52, %v27
  %v228 = vpack.c.bf16 %v53, %v28
  %v229 = vpack.c.bf16 %v54, %v29
  %v230 = vpack.c.bf16 %v55, %v30
  %v231 = vpack.c.bf16 %v56, %v31
  %v232 = vpack.c.bf16 %v57, %v32
  %v233 = vpack.c.bf16 %v58, %v33
  %v234 = vpack.c.bf16 %v59, %v34
  %v235 = vpack.c.bf16 %v60, %v35
  %v236 = vpack.c.bf16 %v61, %v36
  %v237 = vpack.c.bf16 %v62, %v37
  %v238 = vpack.c.bf16 %v63, %v38
  %v239 = vpack.c.bf16 %v64, %v39
  %v240 = vpack.c.bf16 %v90, %v65
  %v241 = vpack.c.bf16 %v91, %v66
  %v242 = vpack.c.bf16 %v92, %v67
  %v243 = vpack.c.bf16 %v93, %v68
  %v244 = vpack.c.bf16 %v94, %v69
  %v245 = vpack.c.bf16 %v95, %v70
  %v246 = vpack.c.bf16 %v96, %v71
  %v247 = vpack.c.bf16 %v97, %v72
  %v248 = vpack.c.bf16 %v98, %v73
  %v249 = vpack.c.bf16 %v99, %v74
  %v250 = vpack.c.bf16 %v100, %v75
  %v251 = vpack.c.bf16 %v101, %v76
  %v252 = vpack.c.bf16 %v102, %v77
  %v253 = vpack.c.bf16 %v103, %v78
  %v254 = vpack.c.bf16 %v104, %v79
  %v255 = vpack.c.bf16 %v105, %v80
  %v256 = vpack.c.bf16 %v106, %v81
  %v257 = vpack.c.bf16 %v107, %v82
  %v258 = vpack.c.bf16 %v108, %v83
  %v259 = vpack.c.bf16 %v109, %v84
  %v260 = vpack.c.bf16 %v110, %v85
  %v261 = vpack.c.bf16 %v111, %v86
  %v262 = vpack.c.bf16 %v112, %v87
  %v263 = vpack.c.bf16 %v113, %v88
  %v264 = vpack.c.bf16 %v114, %v89
  %v265 = vpack.c.bf16 %v140, %v115
  %v266 = vpack.c.bf16 %v141, %v116
  %v267 = vpack.c.bf16 %v142, %v117
  %v268 = vpack.c.bf16 %v143, %v118
  %v269 = vpack.c.bf16 %v144, %v119
  %v270 = vpack.c.bf16 %v145, %v120
  %v271 = vpack.c.bf16 %v146, %v121
  %v272 = vpack.c.bf16 %v147, %v122
  %v273 = vpack.c.bf16 %v148, %v123
  %v274 = vpack.c.bf16 %v149, %v124
  %v275 = vpack.c.bf16 %v150, %v125
  %v276 = vpack.c.bf16 %v151, %v126
  %v277 = vpack.c.bf16 %v152, %v127
  %v278 = vpack.c.bf16 %v153, %v128
  %v279 = vpack.c.bf16 %v154, %v129
  %v280 = vpack.c.bf16 %v155, %v130
  %v281 = vpack.c.bf16 %v156, %v131
  %v282 = vpack.c.bf16 %v157, %v132
  %v283 = vpack.c.bf16 %v158, %v133
  %v284 = vpack.c.bf16 %v159, %v134
  %v285 = vpack.c.bf16 %v160, %v135
  %v286 = vpack.c.bf16 %v161, %v136
  %v287 = vpack.c.bf16 %v162, %v137
  %v288 = vpack.c.bf16 %v163, %v138
  %v289 = vpack.c.bf16 %v164, %v139
  %v290 = vpack.c.bf16 %v190, %v165
  %v291 = vpack.c.bf16 %v191, %v166
  %v292 = vpack.c.bf16 %v192, %v167
  %v293 = vpack.c.bf16 %v193, %v168
  %v294 = vpack.c.bf16 %v194, %v169
  %v295 = vpack.c.bf16 %v195, %v170
  %v296 = vpack.c.bf16 %v196, %v171
  %v297 = vpack.c.bf16 %v197, %v172
  %v298 = vpack.c.bf16 %v198, %v173
  %v299 = vpack.c.bf16 %v199, %v174
  %v300 = vpack.c.bf16 %v200, %v175
  %v301 = vpack.c.bf16 %v201, %v176
  %v302 = vpack.c.bf16 %v202, %v177
  %v303 = vpack.c.bf16 %v203, %v178
  %v304 = vpack.c.bf16 %v204, %v179
  %v305 = vpack.c.bf16 %v205, %v180
  %v306 = vpack.c.bf16 %v206, %v181
  %v307 = vpack.c.bf16 %v207, %v182
  %v308 = vpack.c.bf16 %v208, %v183
  %v309 = vpack.c.bf16 %v209, %v184
  %v310 = vpack.c.bf16 %v210, %v185
  %v311 = vpack.c.bf16 %v211, %v186
  %v312 = vpack.c.bf16 %v212, %v187
  %v313 = vpack.c.bf16 %v213, %v188
  %v314 = vpack.c.bf16 %v214, %v189
  %v315 = vld [vmem:[%s2] sm:$0xff]
  %v316 = vld [vmem:[%s2 + $0x8] sm:$0xff]
  %v317 = vld [vmem:[%s2 + $0x10] sm:$0xff]
  %v318 = vld [vmem:[%s2 + $0x18] sm:$0x1]
  %323 = vrot.lane.b32.xlu0 %v239, 65
  %v324 = vpop.permute.xlu0 %323
  %325 = vrot.lane.b32.xlu0 %v264, 65
  %v326 = vpop.permute.xlu0 %325
  %327 = vrot.lane.b32.xlu0 %v289, 65
  %v328 = vpop.permute.xlu0 %327
  %329 = vrot.lane.b32.xlu0 %v314, 65
  %v330 = vpop.permute.xlu0 %329
  %427 = vrot.lane.b32.xlu0 %v215, 1
  %v428 = vpop.permute.xlu0 %427
  %429 = vrot.lane.b32.xlu0 %v216, 1
  %v430 = vpop.permute.xlu0 %429
  %431 = vrot.lane.b32.xlu0 %v217, 1
  %v432 = vpop.permute.xlu0 %431
  %433 = vrot.lane.b32.xlu0 %v218, 1
  %v434 = vpop.permute.xlu0 %433
  %435 = vrot.lane.b32.xlu0 %v219, 1
  %v436 = vpop.permute.xlu0 %435
  %437 = vrot.lane.b32.xlu0 %v220, 1
  %v438 = vpop.permute.xlu0 %437
  %439 = vrot.lane.b32.xlu0 %v221, 1
  %v440 = vpop.permute.xlu0 %439
  %441 = vrot.lane.b32.xlu0 %v222, 1
  %v442 = vpop.permute.xlu0 %441
  %443 = vrot.lane.b32.xlu0 %v223, 1
  %v444 = vpop.permute.xlu0 %443
  %445 = vrot.lane.b32.xlu0 %v224, 1
  %v446 = vpop.permute.xlu0 %445
  %447 = vrot.lane.b32.xlu0 %v225, 1
  %v448 = vpop.permute.xlu0 %447
  %449 = vrot.lane.b32.xlu0 %v226, 1
  %v450 = vpop.permute.xlu0 %449
  %451 = vrot.lane.b32.xlu0 %v227, 1
  %v452 = vpop.permute.xlu0 %451
  %453 = vrot.lane.b32.xlu0 %v228, 1
  %v454 = vpop.permute.xlu0 %453
  %455 = vrot.lane.b32.xlu0 %v229, 1
  %v456 = vpop.permute.xlu0 %455
  %457 = vrot.lane.b32.xlu0 %v230, 1
  %v458 = vpop.permute.xlu0 %457
  %459 = vrot.lane.b32.xlu0 %v231, 1
  %v460 = vpop.permute.xlu0 %459
  %461 = vrot.lane.b32.xlu0 %v232, 1
  %v462 = vpop.permute.xlu0 %461
  %463 = vrot.lane.b32.xlu0 %v233, 1
  %v464 = vpop.permute.xlu0 %463
  %465 = vrot.lane.b32.xlu0 %v234, 1
  %v466 = vpop.permute.xlu0 %465
  %467 = vrot.lane.b32.xlu0 %v235, 1
  %v468 = vpop.permute.xlu0 %467
  %469 = vrot.lane.b32.xlu0 %v236, 1
  %v470 = vpop.permute.xlu0 %469
  %471 = vrot.lane.b32.xlu0 %v237, 1
  %v472 = vpop.permute.xlu0 %471
  %473 = vrot.lane.b32.xlu0 %v238, 1
  %v474 = vpop.permute.xlu0 %473
  %475 = vrot.lane.b32.xlu0 %v239, 1
  %v476 = vpop.permute.xlu0 %475
  %477 = vrot.lane.b32.xlu0 %v240, 1
  %v478 = vpop.permute.xlu0 %477
  %479 = vrot.lane.b32.xlu0 %v241, 1
  %v480 = vpop.permute.xlu0 %479
  %481 = vrot.lane.b32.xlu0 %v242, 1
  %v482 = vpop.permute.xlu0 %481
  %483 = vrot.lane.b32.xlu0 %v243, 1
  %v484 = vpop.permute.xlu0 %483
  %485 = vrot.lane.b32.xlu0 %v244, 1
  %v486 = vpop.permute.xlu0 %485
  %487 = vrot.lane.b32.xlu0 %v245, 1
  %v488 = vpop.permute.xlu0 %487
  %489 = vrot.lane.b32.xlu0 %v246, 1
  %v490 = vpop.permute.xlu0 %489
  %491 = vrot.lane.b32.xlu0 %v247, 1
  %v492 = vpop.permute.xlu0 %491
  %493 = vrot.lane.b32.xlu0 %v248, 1
  %v494 = vpop.permute.xlu0 %493
  %495 = vrot.lane.b32.xlu0 %v249, 1
  %v496 = vpop.permute.xlu0 %495
  %497 = vrot.lane.b32.xlu0 %v250, 1
  %v498 = vpop.permute.xlu0 %497
  %499 = vrot.lane.b32.xlu0 %v251, 1
  %v500 = vpop.permute.xlu0 %499
  %501 = vrot.lane.b32.xlu0 %v252, 1
  %v502 = vpop.permute.xlu0 %501
  %503 = vrot.lane.b32.xlu0 %v253, 1
  %v504 = vpop.permute.xlu0 %503
  %505 = vrot.lane.b32.xlu0 %v254, 1
  %v506 = vpop.permute.xlu0 %505
  %507 = vrot.lane.b32.xlu0 %v255, 1
  %v508 = vpop.permute.xlu0 %507
  %509 = vrot.lane.b32.xlu0 %v256, 1
  %v510 = vpop.permute.xlu0 %509
  %511 = vrot.lane.b32.xlu0 %v257, 1
  %v512 = vpop.permute.xlu0 %511
  %513 = vrot.lane.b32.xlu0 %v258, 1
  %v514 = vpop.permute.xlu0 %513
  %515 = vrot.lane.b32.xlu0 %v259, 1
  %v516 = vpop.permute.xlu0 %515
  %517 = vrot.lane.b32.xlu0 %v260, 1
  %v518 = vpop.permute.xlu0 %517
  %519 = vrot.lane.b32.xlu0 %v261, 1
  %v520 = vpop.permute.xlu0 %519
  %521 = vrot.lane.b32.xlu0 %v262, 1
  %v522 = vpop.permute.xlu0 %521
  %523 = vrot.lane.b32.xlu0 %v263, 1
  %v524 = vpop.permute.xlu0 %523
  %525 = vrot.lane.b32.xlu0 %v264, 1
  %v526 = vpop.permute.xlu0 %525
  %527 = vrot.lane.b32.xlu0 %v265, 1
  %v528 = vpop.permute.xlu0 %527
  %529 = vrot.lane.b32.xlu0 %v266, 1
  %v530 = vpop.permute.xlu0 %529
  %531 = vrot.lane.b32.xlu0 %v267, 1
  %v532 = vpop.permute.xlu0 %531
  %533 = vrot.lane.b32.xlu0 %v268, 1
  %v534 = vpop.permute.xlu0 %533
  %535 = vrot.lane.b32.xlu0 %v269, 1
  %v536 = vpop.permute.xlu0 %535
  %537 = vrot.lane.b32.xlu0 %v270, 1
  %v538 = vpop.permute.xlu0 %537
  %539 = vrot.lane.b32.xlu0 %v271, 1
  %v540 = vpop.permute.xlu0 %539
  %541 = vrot.lane.b32.xlu0 %v272, 1
  %v542 = vpop.permute.xlu0 %541
  %543 = vrot.lane.b32.xlu0 %v273, 1
  %v544 = vpop.permute.xlu0 %543
  %545 = vrot.lane.b32.xlu0 %v274, 1
  %v546 = vpop.permute.xlu0 %545
  %547 = vrot.lane.b32.xlu0 %v275, 1
  %v548 = vpop.permute.xlu0 %547
  %549 = vrot.lane.b32.xlu0 %v276, 1
  %v550 = vpop.permute.xlu0 %549
  %551 = vrot.lane.b32.xlu0 %v277, 1
  %v552 = vpop.permute.xlu0 %551
  %553 = vrot.lane.b32.xlu0 %v278, 1
  %v554 = vpop.permute.xlu0 %553
  %555 = vrot.lane.b32.xlu0 %v279, 1
  %v556 = vpop.permute.xlu0 %555
  %557 = vrot.lane.b32.xlu0 %v280, 1
  %v558 = vpop.permute.xlu0 %557
  %559 = vrot.lane.b32.xlu0 %v281, 1
  %v560 = vpop.permute.xlu0 %559
  %561 = vrot.lane.b32.xlu0 %v282, 1
  %v562 = vpop.permute.xlu0 %561
  %563 = vrot.lane.b32.xlu0 %v283, 1
  %v564 = vpop.permute.xlu0 %563
  %565 = vrot.lane.b32.xlu0 %v284, 1
  %v566 = vpop.permute.xlu0 %565
  %567 = vrot.lane.b32.xlu0 %v285, 1
  %v568 = vpop.permute.xlu0 %567
  %569 = vrot.lane.b32.xlu0 %v286, 1
  %v570 = vpop.permute.xlu0 %569
  %571 = vrot.lane.b32.xlu0 %v287, 1
  %v572 = vpop.permute.xlu0 %571
  %573 = vrot.lane.b32.xlu0 %v288, 1
  %v574 = vpop.permute.xlu0 %573
  %575 = vrot.lane.b32.xlu0 %v289, 1
  %v576 = vpop.permute.xlu0 %575
  %577 = vrot.lane.b32.xlu0 %v290, 1
  %v578 = vpop.permute.xlu0 %577
  %579 = vrot.lane.b32.xlu0 %v291, 1
  %v580 = vpop.permute.xlu0 %579
  %581 = vrot.lane.b32.xlu0 %v292, 1
  %v582 = vpop.permute.xlu0 %581
  %583 = vrot.lane.b32.xlu0 %v293, 1
  %v584 = vpop.permute.xlu0 %583
  %585 = vrot.lane.b32.xlu0 %v294, 1
  %v586 = vpop.permute.xlu0 %585
  %587 = vrot.lane.b32.xlu0 %v295, 1
  %v588 = vpop.permute.xlu0 %587
  %589 = vrot.lane.b32.xlu0 %v296, 1
  %v590 = vpop.permute.xlu0 %589
  %591 = vrot.lane.b32.xlu0 %v297, 1
  %v592 = vpop.permute.xlu0 %591
  %593 = vrot.lane.b32.xlu0 %v298, 1
  %v594 = vpop.permute.xlu0 %593
  %595 = vrot.lane.b32.xlu0 %v299, 1
  %v596 = vpop.permute.xlu0 %595
  %597 = vrot.lane.b32.xlu0 %v300, 1
  %v598 = vpop.permute.xlu0 %597
  %599 = vrot.lane.b32.xlu0 %v301, 1
  %v600 = vpop.permute.xlu0 %599
  %601 = vrot.lane.b32.xlu0 %v302, 1
  %v602 = vpop.permute.xlu0 %601
  %603 = vrot.lane.b32.xlu0 %v303, 1
  %v604 = vpop.permute.xlu0 %603
  %605 = vrot.lane.b32.xlu0 %v304, 1
  %v606 = vpop.permute.xlu0 %605
  %607 = vrot.lane.b32.xlu0 %v305, 1
  %v608 = vpop.permute.xlu0 %607
  %609 = vrot.lane.b32.xlu0 %v306, 1
  %v610 = vpop.permute.xlu0 %609
  %611 = vrot.lane.b32.xlu0 %v307, 1
  %v612 = vpop.permute.xlu0 %611
  %613 = vrot.lane.b32.xlu0 %v308, 1
  %v614 = vpop.permute.xlu0 %613
  %615 = vrot.lane.b32.xlu0 %v309, 1
  %v616 = vpop.permute.xlu0 %615
  %617 = vrot.lane.b32.xlu0 %v310, 1
  %v618 = vpop.permute.xlu0 %617
  %619 = vrot.lane.b32.xlu0 %v311, 1
  %v620 = vpop.permute.xlu0 %619
  %621 = vrot.lane.b32.xlu0 %v312, 1
  %v622 = vpop.permute.xlu0 %621
  %623 = vrot.lane.b32.xlu0 %v313, 1
  %v624 = vpop.permute.xlu0 %623
  %625 = vrot.lane.b32.xlu0 %v314, 1
  %v626 = vpop.permute.xlu0 %625
  %vm627 = vcmask 7168
  %v628 = vsel %vm627, %v428, %v430
  %v629 = vsel %vm627, %v430, %v432
  %v630 = vsel %vm627, %v432, %v434
  %v631 = vsel %vm627, %v434, %v436
  %v632 = vsel %vm627, %v436, %v438
  %v633 = vsel %vm627, %v438, %v440
  %v634 = vsel %vm627, %v440, %v442
  %v635 = vsel %vm627, %v442, %v444
  %v636 = vsel %vm627, %v444, %v446
  %v637 = vsel %vm627, %v446, %v448
  %v638 = vsel %vm627, %v448, %v450
  %v639 = vsel %vm627, %v450, %v452
  %v640 = vsel %vm627, %v452, %v454
  %v641 = vsel %vm627, %v454, %v456
  %v642 = vsel %vm627, %v456, %v458
  %v643 = vsel %vm627, %v458, %v460
  %v644 = vsel %vm627, %v460, %v462
  %v645 = vsel %vm627, %v462, %v464
  %v646 = vsel %vm627, %v464, %v466
  %v647 = vsel %vm627, %v466, %v468
  %v648 = vsel %vm627, %v468, %v470
  %v649 = vsel %vm627, %v470, %v472
  %v650 = vsel %vm627, %v472, %v474
  %v651 = vsel %vm627, %v474, %v476
  %v652 = vsel %vm627, %v478, %v480
  %v653 = vsel %vm627, %v480, %v482
  %v654 = vsel %vm627, %v482, %v484
  %v655 = vsel %vm627, %v484, %v486
  %v656 = vsel %vm627, %v486, %v488
  %v657 = vsel %vm627, %v488, %v490
  %v658 = vsel %vm627, %v490, %v492
  %v659 = vsel %vm627, %v492, %v494
  %v660 = vsel %vm627, %v494, %v496
  %v661 = vsel %vm627, %v496, %v498
  %v662 = vsel %vm627, %v498, %v500
  %v663 = vsel %vm627, %v500, %v502
  %v664 = vsel %vm627, %v502, %v504
  %v665 = vsel %vm627, %v504, %v506
  %v666 = vsel %vm627, %v506, %v508
  %v667 = vsel %vm627, %v508, %v510
  %v668 = vsel %vm627, %v510, %v512
  %v669 = vsel %vm627, %v512, %v514
  %v670 = vsel %vm627, %v514, %v516
  %v671 = vsel %vm627, %v516, %v518
  %v672 = vsel %vm627, %v518, %v520
  %v673 = vsel %vm627, %v520, %v522
  %v674 = vsel %vm627, %v522, %v524
  %v675 = vsel %vm627, %v524, %v526
  %v676 = vsel %vm627, %v528, %v530
  %v677 = vsel %vm627, %v530, %v532
  %v678 = vsel %vm627, %v532, %v534
  %v679 = vsel %vm627, %v534, %v536
  %v680 = vsel %vm627, %v536, %v538
  %v681 = vsel %vm627, %v538, %v540
  %v682 = vsel %vm627, %v540, %v542
  %v683 = vsel %vm627, %v542, %v544
  %v684 = vsel %vm627, %v544, %v546
  %v685 = vsel %vm627, %v546, %v548
  %v686 = vsel %vm627, %v548, %v550
  %v687 = vsel %vm627, %v550, %v552
  %v688 = vsel %vm627, %v552, %v554
  %v689 = vsel %vm627, %v554, %v556
  %v690 = vsel %vm627, %v556, %v558
  %v691 = vsel %vm627, %v558, %v560
  %v692 = vsel %vm627, %v560, %v562
  %v693 = vsel %vm627, %v562, %v564
  %v694 = vsel %vm627, %v564, %v566
  %v695 = vsel %vm627, %v566, %v568
  %v696 = vsel %vm627, %v568, %v570
  %v697 = vsel %vm627, %v570, %v572
  %v698 = vsel %vm627, %v572, %v574
  %v699 = vsel %vm627, %v574, %v576
  %v700 = vsel %vm627, %v578, %v580
  %v701 = vsel %vm627, %v580, %v582
  %v702 = vsel %vm627, %v582, %v584
  %v703 = vsel %vm627, %v584, %v586
  %v704 = vsel %vm627, %v586, %v588
  %v705 = vsel %vm627, %v588, %v590
  %v706 = vsel %vm627, %v590, %v592
  %v707 = vsel %vm627, %v592, %v594
  %v708 = vsel %vm627, %v594, %v596
  %v709 = vsel %vm627, %v596, %v598
  %v710 = vsel %vm627, %v598, %v600
  %v711 = vsel %vm627, %v600, %v602
  %v712 = vsel %vm627, %v602, %v604
  %v713 = vsel %vm627, %v604, %v606
  %v714 = vsel %vm627, %v606, %v608
  %v715 = vsel %vm627, %v608, %v610
  %v716 = vsel %vm627, %v610, %v612
  %v717 = vsel %vm627, %v612, %v614
  %v718 = vsel %vm627, %v614, %v616
  %v719 = vsel %vm627, %v616, %v618
  %v720 = vsel %vm627, %v618, %v620
  %v721 = vsel %vm627, %v620, %v622
  %v722 = vsel %vm627, %v622, %v624
  %v723 = vsel %vm627, %v624, %v626
  %vm820 = vcmask 7168
  %v823 = vsel %vm820, %v324, %v428
  %v827 = vsel %vm820, %v326, %v478
  %v831 = vsel %vm820, %v328, %v528
  %v835 = vsel %vm820, %v330, %v578
  %v841 = vcombine.high %v315, %v315
  %v843 = vunpack.c.l.s4 1966171168
  %v844 = vunpack.c.0.s8 %v843
  %v845 = vlaneseq
  %v846 = vshrl.u32 %v845, 7
  %v847 = vsub.s32 %v844, %v846
  %v848 = vrot.slane %v315, %v847
  %v850 = vunpack.c.l.s4 1966171168
  %v851 = vunpack.c.0.s8 %v850
  %v852 = vlaneseq
  %v853 = vshrl.u32 %v852, 7
  %v854 = vsub.s32 %v851, %v853
  %v855 = vrot.slane %v841, %v854
  %v856 = vcombine.high %v848, %v848
  %v857 = vcombine.high %v855, %v855
  %v859 = vunpack.c.l.s4 1966171168
  %v860 = vunpack.c.0.s8 %v859
  %v861 = vlaneseq
  %v862 = vshrl.u32 %v861, 7
  %v863 = vsub.s32 %v860, %v862
  %v864 = vrot.slane %v848, %v863
  %v866 = vunpack.c.l.s4 1966171168
  %v867 = vunpack.c.0.s8 %v866
  %v868 = vlaneseq
  %v869 = vshrl.u32 %v868, 7
  %v870 = vsub.s32 %v867, %v869
  %v871 = vrot.slane %v855, %v870
  %v873 = vunpack.c.l.s4 1966171168
  %v874 = vunpack.c.0.s8 %v873
  %v875 = vlaneseq
  %v876 = vshrl.u32 %v875, 7
  %v877 = vsub.s32 %v874, %v876
  %v878 = vrot.slane %v856, %v877
  %v880 = vunpack.c.l.s4 1966171168
  %v881 = vunpack.c.0.s8 %v880
  %v882 = vlaneseq
  %v883 = vshrl.u32 %v882, 7
  %v884 = vsub.s32 %v881, %v883
  %v885 = vrot.slane %v857, %v884
  %v886 = vcombine.high %v864, %v864
  %v887 = vcombine.high %v871, %v871
  %v888 = vcombine.high %v878, %v878
  %v889 = vcombine.high %v885, %v885
  %v890 = vcombine.high %v316, %v316
  %v892 = vunpack.c.l.s4 1966171168
  %v893 = vunpack.c.0.s8 %v892
  %v894 = vlaneseq
  %v895 = vshrl.u32 %v894, 7
  %v896 = vsub.s32 %v893, %v895
  %v897 = vrot.slane %v316, %v896
  %v899 = vunpack.c.l.s4 1966171168
  %v900 = vunpack.c.0.s8 %v899
  %v901 = vlaneseq
  %v902 = vshrl.u32 %v901, 7
  %v903 = vsub.s32 %v900, %v902
  %v904 = vrot.slane %v890, %v903
  %v905 = vcombine.high %v897, %v897
  %v906 = vcombine.high %v904, %v904
  %v908 = vunpack.c.l.s4 1966171168
  %v909 = vunpack.c.0.s8 %v908
  %v910 = vlaneseq
  %v911 = vshrl.u32 %v910, 7
  %v912 = vsub.s32 %v909, %v911
  %v913 = vrot.slane %v897, %v912
  %v915 = vunpack.c.l.s4 1966171168
  %v916 = vunpack.c.0.s8 %v915
  %v917 = vlaneseq
  %v918 = vshrl.u32 %v917, 7
  %v919 = vsub.s32 %v916, %v918
  %v920 = vrot.slane %v904, %v919
  %v922 = vunpack.c.l.s4 1966171168
  %v923 = vunpack.c.0.s8 %v922
  %v924 = vlaneseq
  %v925 = vshrl.u32 %v924, 7
  %v926 = vsub.s32 %v923, %v925
  %v927 = vrot.slane %v905, %v926
  %v929 = vunpack.c.l.s4 1966171168
  %v930 = vunpack.c.0.s8 %v929
  %v931 = vlaneseq
  %v932 = vshrl.u32 %v931, 7
  %v933 = vsub.s32 %v930, %v932
  %v934 = vrot.slane %v906, %v933
  %v935 = vcombine.high %v913, %v913
  %v936 = vcombine.high %v920, %v920
  %v937 = vcombine.high %v927, %v927
  %v938 = vcombine.high %v934, %v934
  %v939 = vcombine.high %v317, %v317
  %v941 = vunpack.c.l.s4 1966171168
  %v942 = vunpack.c.0.s8 %v941
  %v943 = vlaneseq
  %v944 = vshrl.u32 %v943, 7
  %v945 = vsub.s32 %v942, %v944
  %v946 = vrot.slane %v317, %v945
  %v948 = vunpack.c.l.s4 1966171168
  %v949 = vunpack.c.0.s8 %v948
  %v950 = vlaneseq
  %v951 = vshrl.u32 %v950, 7
  %v952 = vsub.s32 %v949, %v951
  %v953 = vrot.slane %v939, %v952
  %v954 = vcombine.high %v946, %v946
  %v955 = vcombine.high %v953, %v953
  %v957 = vunpack.c.l.s4 1966171168
  %v958 = vunpack.c.0.s8 %v957
  %v959 = vlaneseq
  %v960 = vshrl.u32 %v959, 7
  %v961 = vsub.s32 %v958, %v960
  %v962 = vrot.slane %v946, %v961
  %v964 = vunpack.c.l.s4 1966171168
  %v965 = vunpack.c.0.s8 %v964
  %v966 = vlaneseq
  %v967 = vshrl.u32 %v966, 7
  %v968 = vsub.s32 %v965, %v967
  %v969 = vrot.slane %v953, %v968
  %v971 = vunpack.c.l.s4 1966171168
  %v972 = vunpack.c.0.s8 %v971
  %v973 = vlaneseq
  %v974 = vshrl.u32 %v973, 7
  %v975 = vsub.s32 %v972, %v974
  %v976 = vrot.slane %v954, %v975
  %v978 = vunpack.c.l.s4 1966171168
  %v979 = vunpack.c.0.s8 %v978
  %v980 = vlaneseq
  %v981 = vshrl.u32 %v980, 7
  %v982 = vsub.s32 %v979, %v981
  %v983 = vrot.slane %v955, %v982
  %v984 = vcombine.high %v962, %v962
  %v985 = vcombine.high %v969, %v969
  %v986 = vcombine.high %v976, %v976
  %v987 = vcombine.high %v983, %v983
  %v989 = vunpack.c.l.s4 1966171168
  %v990 = vunpack.c.0.s8 %v989
  %v991 = vlaneseq
  %v992 = vshrl.u32 %v991, 7
  %v993 = vsub.s32 %v990, %v992
  %v994 = vrot.slane %v318, %v993
  %v996 = vunpack.c.l.s4 1966171168
  %v997 = vunpack.c.0.s8 %v996
  %v998 = vlaneseq
  %v999 = vshrl.u32 %v998, 7
  %v1000 = vsub.s32 %v997, %v999
  %v1001 = vrot.slane %v994, %v1000
  %v1003 = vpack.i.b16 %v864, %v864
  %v1005 = vlaneseq
  %v1006 = vshrl.u32 %v1005, 7
  %v1007 = vsub.s32 0, %v1006
  %v1008 = vrot.slane %v1003, %v1007
  %v1010 = vpack.i.b16 %v878, %v878
  %v1012 = vlaneseq
  %v1013 = vshrl.u32 %v1012, 7
  %v1014 = vsub.s32 0, %v1013
  %v1015 = vrot.slane %v1010, %v1014
  %v1017 = vpack.i.b16 %v886, %v886
  %v1019 = vlaneseq
  %v1020 = vshrl.u32 %v1019, 7
  %v1021 = vsub.s32 0, %v1020
  %v1022 = vrot.slane %v1017, %v1021
  %v1024 = vpack.i.b16 %v888, %v888
  %v1026 = vlaneseq
  %v1027 = vshrl.u32 %v1026, 7
  %v1028 = vsub.s32 0, %v1027
  %v1029 = vrot.slane %v1024, %v1028
  %v1031 = vpack.i.b16 %v871, %v871
  %v1033 = vlaneseq
  %v1034 = vshrl.u32 %v1033, 7
  %v1035 = vsub.s32 0, %v1034
  %v1036 = vrot.slane %v1031, %v1035
  %v1038 = vpack.i.b16 %v885, %v885
  %v1040 = vlaneseq
  %v1041 = vshrl.u32 %v1040, 7
  %v1042 = vsub.s32 0, %v1041
  %v1043 = vrot.slane %v1038, %v1042
  %v1045 = vpack.i.b16 %v887, %v887
  %v1047 = vlaneseq
  %v1048 = vshrl.u32 %v1047, 7
  %v1049 = vsub.s32 0, %v1048
  %v1050 = vrot.slane %v1045, %v1049
  %v1052 = vpack.i.b16 %v889, %v889
  %v1054 = vlaneseq
  %v1055 = vshrl.u32 %v1054, 7
  %v1056 = vsub.s32 0, %v1055
  %v1057 = vrot.slane %v1052, %v1056
  %v1059 = vpack.i.b16 %v913, %v913
  %v1061 = vlaneseq
  %v1062 = vshrl.u32 %v1061, 7
  %v1063 = vsub.s32 0, %v1062
  %v1064 = vrot.slane %v1059, %v1063
  %v1066 = vpack.i.b16 %v927, %v927
  %v1068 = vlaneseq
  %v1069 = vshrl.u32 %v1068, 7
  %v1070 = vsub.s32 0, %v1069
  %v1071 = vrot.slane %v1066, %v1070
  %v1073 = vpack.i.b16 %v935, %v935
  %v1075 = vlaneseq
  %v1076 = vshrl.u32 %v1075, 7
  %v1077 = vsub.s32 0, %v1076
  %v1078 = vrot.slane %v1073, %v1077
  %v1080 = vpack.i.b16 %v937, %v937
  %v1082 = vlaneseq
  %v1083 = vshrl.u32 %v1082, 7
  %v1084 = vsub.s32 0, %v1083
  %v1085 = vrot.slane %v1080, %v1084
  %v1087 = vpack.i.b16 %v920, %v920
  %v1089 = vlaneseq
  %v1090 = vshrl.u32 %v1089, 7
  %v1091 = vsub.s32 0, %v1090
  %v1092 = vrot.slane %v1087, %v1091
  %v1094 = vpack.i.b16 %v934, %v934
  %v1096 = vlaneseq
  %v1097 = vshrl.u32 %v1096, 7
  %v1098 = vsub.s32 0, %v1097
  %v1099 = vrot.slane %v1094, %v1098
  %v1101 = vpack.i.b16 %v936, %v936
  %v1103 = vlaneseq
  %v1104 = vshrl.u32 %v1103, 7
  %v1105 = vsub.s32 0, %v1104
  %v1106 = vrot.slane %v1101, %v1105
  %v1108 = vpack.i.b16 %v938, %v938
  %v1110 = vlaneseq
  %v1111 = vshrl.u32 %v1110, 7
  %v1112 = vsub.s32 0, %v1111
  %v1113 = vrot.slane %v1108, %v1112
  %v1115 = vpack.i.b16 %v962, %v962
  %v1117 = vlaneseq
  %v1118 = vshrl.u32 %v1117, 7
  %v1119 = vsub.s32 0, %v1118
  %v1120 = vrot.slane %v1115, %v1119
  %v1122 = vpack.i.b16 %v976, %v976
  %v1124 = vlaneseq
  %v1125 = vshrl.u32 %v1124, 7
  %v1126 = vsub.s32 0, %v1125
  %v1127 = vrot.slane %v1122, %v1126
  %v1129 = vpack.i.b16 %v984, %v984
  %v1131 = vlaneseq
  %v1132 = vshrl.u32 %v1131, 7
  %v1133 = vsub.s32 0, %v1132
  %v1134 = vrot.slane %v1129, %v1133
  %v1136 = vpack.i.b16 %v986, %v986
  %v1138 = vlaneseq
  %v1139 = vshrl.u32 %v1138, 7
  %v1140 = vsub.s32 0, %v1139
  %v1141 = vrot.slane %v1136, %v1140
  %v1143 = vpack.i.b16 %v969, %v969
  %v1145 = vlaneseq
  %v1146 = vshrl.u32 %v1145, 7
  %v1147 = vsub.s32 0, %v1146
  %v1148 = vrot.slane %v1143, %v1147
  %v1150 = vpack.i.b16 %v983, %v983
  %v1152 = vlaneseq
  %v1153 = vshrl.u32 %v1152, 7
  %v1154 = vsub.s32 0, %v1153
  %v1155 = vrot.slane %v1150, %v1154
  %v1157 = vpack.i.b16 %v985, %v985
  %v1159 = vlaneseq
  %v1160 = vshrl.u32 %v1159, 7
  %v1161 = vsub.s32 0, %v1160
  %v1162 = vrot.slane %v1157, %v1161
  %v1164 = vpack.i.b16 %v987, %v987
  %v1166 = vlaneseq
  %v1167 = vshrl.u32 %v1166, 7
  %v1168 = vsub.s32 0, %v1167
  %v1169 = vrot.slane %v1164, %v1168
  %v1171 = vpack.i.b16 %v1001, %v1001
  %v1173 = vlaneseq
  %v1174 = vshrl.u32 %v1173, 7
  %v1175 = vsub.s32 0, %v1174
  %v1176 = vrot.slane %v1171, %v1175
  %v1177 = vmul.bf16 %v823, %v1008
  %v1178 = vmul.bf16 %v628, %v1015
  %v1179 = vmul.bf16 %v629, %v1022
  %v1180 = vmul.bf16 %v630, %v1029
  %v1181 = vmul.bf16 %v631, %v1036
  %v1182 = vmul.bf16 %v632, %v1043
  %v1183 = vmul.bf16 %v633, %v1050
  %v1184 = vmul.bf16 %v634, %v1057
  %v1185 = vmul.bf16 %v635, %v1064
  %v1186 = vmul.bf16 %v636, %v1071
  %v1187 = vmul.bf16 %v637, %v1078
  %v1188 = vmul.bf16 %v638, %v1085
  %v1189 = vmul.bf16 %v639, %v1092
  %v1190 = vmul.bf16 %v640, %v1099
  %v1191 = vmul.bf16 %v641, %v1106
  %v1192 = vmul.bf16 %v642, %v1113
  %v1193 = vmul.bf16 %v643, %v1120
  %v1194 = vmul.bf16 %v644, %v1127
  %v1195 = vmul.bf16 %v645, %v1134
  %v1196 = vmul.bf16 %v646, %v1141
  %v1197 = vmul.bf16 %v647, %v1148
  %v1198 = vmul.bf16 %v648, %v1155
  %v1199 = vmul.bf16 %v649, %v1162
  %v1200 = vmul.bf16 %v650, %v1169
  %v1201 = vmul.bf16 %v651, %v1176
  %v1202 = vmul.bf16 %v827, %v1008
  %v1203 = vmul.bf16 %v652, %v1015
  %v1204 = vmul.bf16 %v653, %v1022
  %v1205 = vmul.bf16 %v654, %v1029
  %v1206 = vmul.bf16 %v655, %v1036
  %v1207 = vmul.bf16 %v656, %v1043
  %v1208 = vmul.bf16 %v657, %v1050
  %v1209 = vmul.bf16 %v658, %v1057
  %v1210 = vmul.bf16 %v659, %v1064
  %v1211 = vmul.bf16 %v660, %v1071
  %v1212 = vmul.bf16 %v661, %v1078
  %v1213 = vmul.bf16 %v662, %v1085
  %v1214 = vmul.bf16 %v663, %v1092
  %v1215 = vmul.bf16 %v664, %v1099
  %v1216 = vmul.bf16 %v665, %v1106
  %v1217 = vmul.bf16 %v666, %v1113
  %v1218 = vmul.bf16 %v667, %v1120
  %v1219 = vmul.bf16 %v668, %v1127
  %v1220 = vmul.bf16 %v669, %v1134
  %v1221 = vmul.bf16 %v670, %v1141
  %v1222 = vmul.bf16 %v671, %v1148
  %v1223 = vmul.bf16 %v672, %v1155
  %v1224 = vmul.bf16 %v673, %v1162
  %v1225 = vmul.bf16 %v674, %v1169
  %v1226 = vmul.bf16 %v675, %v1176
  %v1227 = vmul.bf16 %v831, %v1008
  %v1228 = vmul.bf16 %v676, %v1015
  %v1229 = vmul.bf16 %v677, %v1022
  %v1230 = vmul.bf16 %v678, %v1029
  %v1231 = vmul.bf16 %v679, %v1036
  %v1232 = vmul.bf16 %v680, %v1043
  %v1233 = vmul.bf16 %v681, %v1050
  %v1234 = vmul.bf16 %v682, %v1057
  %v1235 = vmul.bf16 %v683, %v1064
  %v1236 = vmul.bf16 %v684, %v1071
  %v1237 = vmul.bf16 %v685, %v1078
  %v1238 = vmul.bf16 %v686, %v1085
  %v1239 = vmul.bf16 %v687, %v1092
  %v1240 = vmul.bf16 %v688, %v1099
  %v1241 = vmul.bf16 %v689, %v1106
  %v1242 = vmul.bf16 %v690, %v1113
  %v1243 = vmul.bf16 %v691, %v1120
  %v1244 = vmul.bf16 %v692, %v1127
  %v1245 = vmul.bf16 %v693, %v1134
  %v1246 = vmul.bf16 %v694, %v1141
  %v1247 = vmul.bf16 %v695, %v1148
  %v1248 = vmul.bf16 %v696, %v1155
  %v1249 = vmul.bf16 %v697, %v1162
  %v1250 = vmul.bf16 %v698, %v1169
  %v1251 = vmul.bf16 %v699, %v1176
  %v1252 = vmul.bf16 %v835, %v1008
  %v1253 = vmul.bf16 %v700, %v1015
  %v1254 = vmul.bf16 %v701, %v1022
  %v1255 = vmul.bf16 %v702, %v1029
  %v1256 = vmul.bf16 %v703, %v1036
  %v1257 = vmul.bf16 %v704, %v1043
  %v1258 = vmul.bf16 %v705, %v1050
  %v1259 = vmul.bf16 %v706, %v1057
  %v1260 = vmul.bf16 %v707, %v1064
  %v1261 = vmul.bf16 %v708, %v1071
  %v1262 = vmul.bf16 %v709, %v1078
  %v1263 = vmul.bf16 %v710, %v1085
  %v1264 = vmul.bf16 %v711, %v1092
  %v1265 = vmul.bf16 %v712, %v1099
  %v1266 = vmul.bf16 %v713, %v1106
  %v1267 = vmul.bf16 %v714, %v1113
  %v1268 = vmul.bf16 %v715, %v1120
  %v1269 = vmul.bf16 %v716, %v1127
  %v1270 = vmul.bf16 %v717, %v1134
  %v1271 = vmul.bf16 %v718, %v1141
  %v1272 = vmul.bf16 %v719, %v1148
  %v1273 = vmul.bf16 %v720, %v1155
  %v1274 = vmul.bf16 %v721, %v1162
  %v1275 = vmul.bf16 %v722, %v1169
  %v1276 = vmul.bf16 %v723, %v1176
  %1277 = vrot.lane.b32.xlu0 %v215, 127
  %v1278 = vpop.permute.xlu0 %1277
  %1279 = vrot.lane.b32.xlu0 %v216, 127
  %v1280 = vpop.permute.xlu0 %1279
  %1281 = vrot.lane.b32.xlu0 %v217, 127
  %v1282 = vpop.permute.xlu0 %1281
  %1283 = vrot.lane.b32.xlu0 %v218, 127
  %v1284 = vpop.permute.xlu0 %1283
  %1285 = vrot.lane.b32.xlu0 %v219, 127
  %v1286 = vpop.permute.xlu0 %1285
  %1287 = vrot.lane.b32.xlu0 %v220, 127
  %v1288 = vpop.permute.xlu0 %1287
  %1289 = vrot.lane.b32.xlu0 %v221, 127
  %v1290 = vpop.permute.xlu0 %1289
  %1291 = vrot.lane.b32.xlu0 %v222, 127
  %v1292 = vpop.permute.xlu0 %1291
  %1293 = vrot.lane.b32.xlu0 %v223, 127
  %v1294 = vpop.permute.xlu0 %1293
  %1295 = vrot.lane.b32.xlu0 %v224, 127
  %v1296 = vpop.permute.xlu0 %1295
  %1297 = vrot.lane.b32.xlu0 %v225, 127
  %v1298 = vpop.permute.xlu0 %1297
  %1299 = vrot.lane.b32.xlu0 %v226, 127
  %v1300 = vpop.permute.xlu0 %1299
  %1301 = vrot.lane.b32.xlu0 %v227, 127
  %v1302 = vpop.permute.xlu0 %1301
  %1303 = vrot.lane.b32.xlu0 %v228, 127
  %v1304 = vpop.permute.xlu0 %1303
  %1305 = vrot.lane.b32.xlu0 %v229, 127
  %v1306 = vpop.permute.xlu0 %1305
  %1307 = vrot.lane.b32.xlu0 %v230, 127
  %v1308 = vpop.permute.xlu0 %1307
  %1309 = vrot.lane.b32.xlu0 %v231, 127
  %v1310 = vpop.permute.xlu0 %1309
  %1311 = vrot.lane.b32.xlu0 %v232, 127
  %v1312 = vpop.permute.xlu0 %1311
  %1313 = vrot.lane.b32.xlu0 %v233, 127
  %v1314 = vpop.permute.xlu0 %1313
  %1315 = vrot.lane.b32.xlu0 %v234, 127
  %v1316 = vpop.permute.xlu0 %1315
  %1317 = vrot.lane.b32.xlu0 %v235, 127
  %v1318 = vpop.permute.xlu0 %1317
  %1319 = vrot.lane.b32.xlu0 %v236, 127
  %v1320 = vpop.permute.xlu0 %1319
  %1321 = vrot.lane.b32.xlu0 %v237, 127
  %v1322 = vpop.permute.xlu0 %1321
  %1323 = vrot.lane.b32.xlu0 %v238, 127
  %v1324 = vpop.permute.xlu0 %1323
  %1325 = vrot.lane.b32.xlu0 %v239, 127
  %v1326 = vpop.permute.xlu0 %1325
  %1327 = vrot.lane.b32.xlu0 %v240, 127
  %v1328 = vpop.permute.xlu0 %1327
  %1329 = vrot.lane.b32.xlu0 %v241, 127
  %v1330 = vpop.permute.xlu0 %1329
  %1331 = vrot.lane.b32.xlu0 %v242, 127
  %v1332 = vpop.permute.xlu0 %1331
  %1333 = vrot.lane.b32.xlu0 %v243, 127
  %v1334 = vpop.permute.xlu0 %1333
  %1335 = vrot.lane.b32.xlu0 %v244, 127
  %v1336 = vpop.permute.xlu0 %1335
  %1337 = vrot.lane.b32.xlu0 %v245, 127
  %v1338 = vpop.permute.xlu0 %1337
  %1339 = vrot.lane.b32.xlu0 %v246, 127
  %v1340 = vpop.permute.xlu0 %1339
  %1341 = vrot.lane.b32.xlu0 %v247, 127
  %v1342 = vpop.permute.xlu0 %1341
  %1343 = vrot.lane.b32.xlu0 %v248, 127
  %v1344 = vpop.permute.xlu0 %1343
  %1345 = vrot.lane.b32.xlu0 %v249, 127
  %v1346 = vpop.permute.xlu0 %1345
  %1347 = vrot.lane.b32.xlu0 %v250, 127
  %v1348 = vpop.permute.xlu0 %1347
  %1349 = vrot.lane.b32.xlu0 %v251, 127
  %v1350 = vpop.permute.xlu0 %1349
  %1351 = vrot.lane.b32.xlu0 %v252, 127
  %v1352 = vpop.permute.xlu0 %1351
  %1353 = vrot.lane.b32.xlu0 %v253, 127
  %v1354 = vpop.permute.xlu0 %1353
  %1355 = vrot.lane.b32.xlu0 %v254, 127
  %v1356 = vpop.permute.xlu0 %1355
  %1357 = vrot.lane.b32.xlu0 %v255, 127
  %v1358 = vpop.permute.xlu0 %1357
  %1359 = vrot.lane.b32.xlu0 %v256, 127
  %v1360 = vpop.permute.xlu0 %1359
  %1361 = vrot.lane.b32.xlu0 %v257, 127
  %v1362 = vpop.permute.xlu0 %1361
  %1363 = vrot.lane.b32.xlu0 %v258, 127
  %v1364 = vpop.permute.xlu0 %1363
  %1365 = vrot.lane.b32.xlu0 %v259, 127
  %v1366 = vpop.permute.xlu0 %1365
  %1367 = vrot.lane.b32.xlu0 %v260, 127
  %v1368 = vpop.permute.xlu0 %1367
  %1369 = vrot.lane.b32.xlu0 %v261, 127
  %v1370 = vpop.permute.xlu0 %1369
  %1371 = vrot.lane.b32.xlu0 %v262, 127
  %v1372 = vpop.permute.xlu0 %1371
  %1373 = vrot.lane.b32.xlu0 %v263, 127
  %v1374 = vpop.permute.xlu0 %1373
  %1375 = vrot.lane.b32.xlu0 %v264, 127
  %v1376 = vpop.permute.xlu0 %1375
  %1377 = vrot.lane.b32.xlu0 %v265, 127
  %v1378 = vpop.permute.xlu0 %1377
  %1379 = vrot.lane.b32.xlu0 %v266, 127
  %v1380 = vpop.permute.xlu0 %1379
  %1381 = vrot.lane.b32.xlu0 %v267, 127
  %v1382 = vpop.permute.xlu0 %1381
  %1383 = vrot.lane.b32.xlu0 %v268, 127
  %v1384 = vpop.permute.xlu0 %1383
  %1385 = vrot.lane.b32.xlu0 %v269, 127
  %v1386 = vpop.permute.xlu0 %1385
  %1387 = vrot.lane.b32.xlu0 %v270, 127
  %v1388 = vpop.permute.xlu0 %1387
  %1389 = vrot.lane.b32.xlu0 %v271, 127
  %v1390 = vpop.permute.xlu0 %1389
  %1391 = vrot.lane.b32.xlu0 %v272, 127
  %v1392 = vpop.permute.xlu0 %1391
  %1393 = vrot.lane.b32.xlu0 %v273, 127
  %v1394 = vpop.permute.xlu0 %1393
  %1395 = vrot.lane.b32.xlu0 %v274, 127
  %v1396 = vpop.permute.xlu0 %1395
  %1397 = vrot.lane.b32.xlu0 %v275, 127
  %v1398 = vpop.permute.xlu0 %1397
  %1399 = vrot.lane.b32.xlu0 %v276, 127
  %v1400 = vpop.permute.xlu0 %1399
  %1401 = vrot.lane.b32.xlu0 %v277, 127
  %v1402 = vpop.permute.xlu0 %1401
  %1403 = vrot.lane.b32.xlu0 %v278, 127
  %v1404 = vpop.permute.xlu0 %1403
  %1405 = vrot.lane.b32.xlu0 %v279, 127
  %v1406 = vpop.permute.xlu0 %1405
  %1407 = vrot.lane.b32.xlu0 %v280, 127
  %v1408 = vpop.permute.xlu0 %1407
  %1409 = vrot.lane.b32.xlu0 %v281, 127
  %v1410 = vpop.permute.xlu0 %1409
  %1411 = vrot.lane.b32.xlu0 %v282, 127
  %v1412 = vpop.permute.xlu0 %1411
  %1413 = vrot.lane.b32.xlu0 %v283, 127
  %v1414 = vpop.permute.xlu0 %1413
  %1415 = vrot.lane.b32.xlu0 %v284, 127
  %v1416 = vpop.permute.xlu0 %1415
  %1417 = vrot.lane.b32.xlu0 %v285, 127
  %v1418 = vpop.permute.xlu0 %1417
  %1419 = vrot.lane.b32.xlu0 %v286, 127
  %v1420 = vpop.permute.xlu0 %1419
  %1421 = vrot.lane.b32.xlu0 %v287, 127
  %v1422 = vpop.permute.xlu0 %1421
  %1423 = vrot.lane.b32.xlu0 %v288, 127
  %v1424 = vpop.permute.xlu0 %1423
  %1425 = vrot.lane.b32.xlu0 %v289, 127
  %v1426 = vpop.permute.xlu0 %1425
  %1427 = vrot.lane.b32.xlu0 %v290, 127
  %v1428 = vpop.permute.xlu0 %1427
  %1429 = vrot.lane.b32.xlu0 %v291, 127
  %v1430 = vpop.permute.xlu0 %1429
  %1431 = vrot.lane.b32.xlu0 %v292, 127
  %v1432 = vpop.permute.xlu0 %1431
  %1433 = vrot.lane.b32.xlu0 %v293, 127
  %v1434 = vpop.permute.xlu0 %1433
  %1435 = vrot.lane.b32.xlu0 %v294, 127
  %v1436 = vpop.permute.xlu0 %1435
  %1437 = vrot.lane.b32.xlu0 %v295, 127
  %v1438 = vpop.permute.xlu0 %1437
  %1439 = vrot.lane.b32.xlu0 %v296, 127
  %v1440 = vpop.permute.xlu0 %1439
  %1441 = vrot.lane.b32.xlu0 %v297, 127
  %v1442 = vpop.permute.xlu0 %1441
  %1443 = vrot.lane.b32.xlu0 %v298, 127
  %v1444 = vpop.permute.xlu0 %1443
  %1445 = vrot.lane.b32.xlu0 %v299, 127
  %v1446 = vpop.permute.xlu0 %1445
  %1447 = vrot.lane.b32.xlu0 %v300, 127
  %v1448 = vpop.permute.xlu0 %1447
  %1449 = vrot.lane.b32.xlu0 %v301, 127
  %v1450 = vpop.permute.xlu0 %1449
  %1451 = vrot.lane.b32.xlu0 %v302, 127
  %v1452 = vpop.permute.xlu0 %1451
  %1453 = vrot.lane.b32.xlu0 %v303, 127
  %v1454 = vpop.permute.xlu0 %1453
  %1455 = vrot.lane.b32.xlu0 %v304, 127
  %v1456 = vpop.permute.xlu0 %1455
  %1457 = vrot.lane.b32.xlu0 %v305, 127
  %v1458 = vpop.permute.xlu0 %1457
  %1459 = vrot.lane.b32.xlu0 %v306, 127
  %v1460 = vpop.permute.xlu0 %1459
  %1461 = vrot.lane.b32.xlu0 %v307, 127
  %v1462 = vpop.permute.xlu0 %1461
  %1463 = vrot.lane.b32.xlu0 %v308, 127
  %v1464 = vpop.permute.xlu0 %1463
  %1465 = vrot.lane.b32.xlu0 %v309, 127
  %v1466 = vpop.permute.xlu0 %1465
  %1467 = vrot.lane.b32.xlu0 %v310, 127
  %v1468 = vpop.permute.xlu0 %1467
  %1469 = vrot.lane.b32.xlu0 %v311, 127
  %v1470 = vpop.permute.xlu0 %1469
  %1471 = vrot.lane.b32.xlu0 %v312, 127
  %v1472 = vpop.permute.xlu0 %1471
  %1473 = vrot.lane.b32.xlu0 %v313, 127
  %v1474 = vpop.permute.xlu0 %1473
  %1475 = vrot.lane.b32.xlu0 %v314, 127
  %v1476 = vpop.permute.xlu0 %1475
  %vm1477 = vcmask 1039360
  %v1478 = vsel %vm1477, %v1278, %v1280
  %v1479 = vsel %vm1477, %v1280, %v1282
  %v1480 = vsel %vm1477, %v1282, %v1284
  %v1481 = vsel %vm1477, %v1284, %v1286
  %v1482 = vsel %vm1477, %v1286, %v1288
  %v1483 = vsel %vm1477, %v1288, %v1290
  %v1484 = vsel %vm1477, %v1290, %v1292
  %v1485 = vsel %vm1477, %v1292, %v1294
  %v1486 = vsel %vm1477, %v1294, %v1296
  %v1487 = vsel %vm1477, %v1296, %v1298
  %v1488 = vsel %vm1477, %v1298, %v1300
  %v1489 = vsel %vm1477, %v1300, %v1302
  %v1490 = vsel %vm1477, %v1302, %v1304
  %v1491 = vsel %vm1477, %v1304, %v1306
  %v1492 = vsel %vm1477, %v1306, %v1308
  %v1493 = vsel %vm1477, %v1308, %v1310
  %v1494 = vsel %vm1477, %v1310, %v1312
  %v1495 = vsel %vm1477, %v1312, %v1314
  %v1496 = vsel %vm1477, %v1314, %v1316
  %v1497 = vsel %vm1477, %v1316, %v1318
  %v1498 = vsel %vm1477, %v1318, %v1320
  %v1499 = vsel %vm1477, %v1320, %v1322
  %v1500 = vsel %vm1477, %v1322, %v1324
  %v1501 = vsel %vm1477, %v1324, %v1326
  %v1502 = vsel %vm1477, %v1328, %v1330
  %v1503 = vsel %vm1477, %v1330, %v1332
  %v1504 = vsel %vm1477, %v1332, %v1334
  %v1505 = vsel %vm1477, %v1334, %v1336
  %v1506 = vsel %vm1477, %v1336, %v1338
  %v1507 = vsel %vm1477, %v1338, %v1340
  %v1508 = vsel %vm1477, %v1340, %v1342
  %v1509 = vsel %vm1477, %v1342, %v1344
  %v1510 = vsel %vm1477, %v1344, %v1346
  %v1511 = vsel %vm1477, %v1346, %v1348
  %v1512 = vsel %vm1477, %v1348, %v1350
  %v1513 = vsel %vm1477, %v1350, %v1352
  %v1514 = vsel %vm1477, %v1352, %v1354
  %v1515 = vsel %vm1477, %v1354, %v1356
  %v1516 = vsel %vm1477, %v1356, %v1358
  %v1517 = vsel %vm1477, %v1358, %v1360
  %v1518 = vsel %vm1477, %v1360, %v1362
  %v1519 = vsel %vm1477, %v1362, %v1364
  %v1520 = vsel %vm1477, %v1364, %v1366
  %v1521 = vsel %vm1477, %v1366, %v1368
  %v1522 = vsel %vm1477, %v1368, %v1370
  %v1523 = vsel %vm1477, %v1370, %v1372
  %v1524 = vsel %vm1477, %v1372, %v1374
  %v1525 = vsel %vm1477, %v1374, %v1376
  %v1526 = vsel %vm1477, %v1378, %v1380
  %v1527 = vsel %vm1477, %v1380, %v1382
  %v1528 = vsel %vm1477, %v1382, %v1384
  %v1529 = vsel %vm1477, %v1384, %v1386
  %v1530 = vsel %vm1477, %v1386, %v1388
  %v1531 = vsel %vm1477, %v1388, %v1390
  %v1532 = vsel %vm1477, %v1390, %v1392
  %v1533 = vsel %vm1477, %v1392, %v1394
  %v1534 = vsel %vm1477, %v1394, %v1396
  %v1535 = vsel %vm1477, %v1396, %v1398
  %v1536 = vsel %vm1477, %v1398, %v1400
  %v1537 = vsel %vm1477, %v1400, %v1402
  %v1538 = vsel %vm1477, %v1402, %v1404
  %v1539 = vsel %vm1477, %v1404, %v1406
  %v1540 = vsel %vm1477, %v1406, %v1408
  %v1541 = vsel %vm1477, %v1408, %v1410
  %v1542 = vsel %vm1477, %v1410, %v1412
  %v1543 = vsel %vm1477, %v1412, %v1414
  %v1544 = vsel %vm1477, %v1414, %v1416
  %v1545 = vsel %vm1477, %v1416, %v1418
  %v1546 = vsel %vm1477, %v1418, %v1420
  %v1547 = vsel %vm1477, %v1420, %v1422
  %v1548 = vsel %vm1477, %v1422, %v1424
  %v1549 = vsel %vm1477, %v1424, %v1426
  %v1550 = vsel %vm1477, %v1428, %v1430
  %v1551 = vsel %vm1477, %v1430, %v1432
  %v1552 = vsel %vm1477, %v1432, %v1434
  %v1553 = vsel %vm1477, %v1434, %v1436
  %v1554 = vsel %vm1477, %v1436, %v1438
  %v1555 = vsel %vm1477, %v1438, %v1440
  %v1556 = vsel %vm1477, %v1440, %v1442
  %v1557 = vsel %vm1477, %v1442, %v1444
  %v1558 = vsel %vm1477, %v1444, %v1446
  %v1559 = vsel %vm1477, %v1446, %v1448
  %v1560 = vsel %vm1477, %v1448, %v1450
  %v1561 = vsel %vm1477, %v1450, %v1452
  %v1562 = vsel %vm1477, %v1452, %v1454
  %v1563 = vsel %vm1477, %v1454, %v1456
  %v1564 = vsel %vm1477, %v1456, %v1458
  %v1565 = vsel %vm1477, %v1458, %v1460
  %v1566 = vsel %vm1477, %v1460, %v1462
  %v1567 = vsel %vm1477, %v1462, %v1464
  %v1568 = vsel %vm1477, %v1464, %v1466
  %v1569 = vsel %vm1477, %v1466, %v1468
  %v1570 = vsel %vm1477, %v1468, %v1470
  %v1571 = vsel %vm1477, %v1470, %v1472
  %v1572 = vsel %vm1477, %v1472, %v1474
  %v1573 = vsel %vm1477, %v1474, %v1476
  %1670 = vrot.lane.b32.xlu0 %v215, 63
  %v1671 = vpop.permute.xlu0 %1670
  %1672 = vrot.lane.b32.xlu0 %v240, 63
  %v1673 = vpop.permute.xlu0 %1672
  %1674 = vrot.lane.b32.xlu0 %v265, 63
  %v1675 = vpop.permute.xlu0 %1674
  %1676 = vrot.lane.b32.xlu0 %v290, 63
  %v1677 = vpop.permute.xlu0 %1676
  %vm1678 = vcmask 515072
  %v1681 = vsel %vm1678, %v1326, %v1671
  %v1685 = vsel %vm1678, %v1376, %v1673
  %v1689 = vsel %vm1678, %v1426, %v1675
  %v1693 = vsel %vm1678, %v1476, %v1677
  %v1695 = vshrl.u32 %v864, 16
  %v1696 = vpack.i.b16 %v1695, %v1695
  %v1698 = vlaneseq
  %v1699 = vshrl.u32 %v1698, 7
  %v1700 = vsub.s32 0, %v1699
  %v1701 = vrot.slane %v1696, %v1700
  %v1702 = vshrl.u32 %v878, 16
  %v1703 = vpack.i.b16 %v1702, %v1702
  %v1705 = vlaneseq
  %v1706 = vshrl.u32 %v1705, 7
  %v1707 = vsub.s32 0, %v1706
  %v1708 = vrot.slane %v1703, %v1707
  %v1709 = vshrl.u32 %v886, 16
  %v1710 = vpack.i.b16 %v1709, %v1709
  %v1712 = vlaneseq
  %v1713 = vshrl.u32 %v1712, 7
  %v1714 = vsub.s32 0, %v1713
  %v1715 = vrot.slane %v1710, %v1714
  %v1716 = vshrl.u32 %v888, 16
  %v1717 = vpack.i.b16 %v1716, %v1716
  %v1719 = vlaneseq
  %v1720 = vshrl.u32 %v1719, 7
  %v1721 = vsub.s32 0, %v1720
  %v1722 = vrot.slane %v1717, %v1721
  %v1723 = vshrl.u32 %v871, 16
  %v1724 = vpack.i.b16 %v1723, %v1723
  %v1726 = vlaneseq
  %v1727 = vshrl.u32 %v1726, 7
  %v1728 = vsub.s32 0, %v1727
  %v1729 = vrot.slane %v1724, %v1728
  %v1730 = vshrl.u32 %v885, 16
  %v1731 = vpack.i.b16 %v1730, %v1730
  %v1733 = vlaneseq
  %v1734 = vshrl.u32 %v1733, 7
  %v1735 = vsub.s32 0, %v1734
  %v1736 = vrot.slane %v1731, %v1735
  %v1737 = vshrl.u32 %v887, 16
  %v1738 = vpack.i.b16 %v1737, %v1737
  %v1740 = vlaneseq
  %v1741 = vshrl.u32 %v1740, 7
  %v1742 = vsub.s32 0, %v1741
  %v1743 = vrot.slane %v1738, %v1742
  %v1744 = vshrl.u32 %v889, 16
  %v1745 = vpack.i.b16 %v1744, %v1744
  %v1747 = vlaneseq
  %v1748 = vshrl.u32 %v1747, 7
  %v1749 = vsub.s32 0, %v1748
  %v1750 = vrot.slane %v1745, %v1749
  %v1751 = vshrl.u32 %v913, 16
  %v1752 = vpack.i.b16 %v1751, %v1751
  %v1754 = vlaneseq
  %v1755 = vshrl.u32 %v1754, 7
  %v1756 = vsub.s32 0, %v1755
  %v1757 = vrot.slane %v1752, %v1756
  %v1758 = vshrl.u32 %v927, 16
  %v1759 = vpack.i.b16 %v1758, %v1758
  %v1761 = vlaneseq
  %v1762 = vshrl.u32 %v1761, 7
  %v1763 = vsub.s32 0, %v1762
  %v1764 = vrot.slane %v1759, %v1763
  %v1765 = vshrl.u32 %v935, 16
  %v1766 = vpack.i.b16 %v1765, %v1765
  %v1768 = vlaneseq
  %v1769 = vshrl.u32 %v1768, 7
  %v1770 = vsub.s32 0, %v1769
  %v1771 = vrot.slane %v1766, %v1770
  %v1772 = vshrl.u32 %v937, 16
  %v1773 = vpack.i.b16 %v1772, %v1772
  %v1775 = vlaneseq
  %v1776 = vshrl.u32 %v1775, 7
  %v1777 = vsub.s32 0, %v1776
  %v1778 = vrot.slane %v1773, %v1777
  %v1779 = vshrl.u32 %v920, 16
  %v1780 = vpack.i.b16 %v1779, %v1779
  %v1782 = vlaneseq
  %v1783 = vshrl.u32 %v1782, 7
  %v1784 = vsub.s32 0, %v1783
  %v1785 = vrot.slane %v1780, %v1784
  %v1786 = vshrl.u32 %v934, 16
  %v1787 = vpack.i.b16 %v1786, %v1786
  %v1789 = vlaneseq
  %v1790 = vshrl.u32 %v1789, 7
  %v1791 = vsub.s32 0, %v1790
  %v1792 = vrot.slane %v1787, %v1791
  %v1793 = vshrl.u32 %v936, 16
  %v1794 = vpack.i.b16 %v1793, %v1793
  %v1796 = vlaneseq
  %v1797 = vshrl.u32 %v1796, 7
  %v1798 = vsub.s32 0, %v1797
  %v1799 = vrot.slane %v1794, %v1798
  %v1800 = vshrl.u32 %v938, 16
  %v1801 = vpack.i.b16 %v1800, %v1800
  %v1803 = vlaneseq
  %v1804 = vshrl.u32 %v1803, 7
  %v1805 = vsub.s32 0, %v1804
  %v1806 = vrot.slane %v1801, %v1805
  %v1807 = vshrl.u32 %v962, 16
  %v1808 = vpack.i.b16 %v1807, %v1807
  %v1810 = vlaneseq
  %v1811 = vshrl.u32 %v1810, 7
  %v1812 = vsub.s32 0, %v1811
  %v1813 = vrot.slane %v1808, %v1812
  %v1814 = vshrl.u32 %v976, 16
  %v1815 = vpack.i.b16 %v1814, %v1814
  %v1817 = vlaneseq
  %v1818 = vshrl.u32 %v1817, 7
  %v1819 = vsub.s32 0, %v1818
  %v1820 = vrot.slane %v1815, %v1819
  %v1821 = vshrl.u32 %v984, 16
  %v1822 = vpack.i.b16 %v1821, %v1821
  %v1824 = vlaneseq
  %v1825 = vshrl.u32 %v1824, 7
  %v1826 = vsub.s32 0, %v1825
  %v1827 = vrot.slane %v1822, %v1826
  %v1828 = vshrl.u32 %v986, 16
  %v1829 = vpack.i.b16 %v1828, %v1828
  %v1831 = vlaneseq
  %v1832 = vshrl.u32 %v1831, 7
  %v1833 = vsub.s32 0, %v1832
  %v1834 = vrot.slane %v1829, %v1833
  %v1835 = vshrl.u32 %v969, 16
  %v1836 = vpack.i.b16 %v1835, %v1835
  %v1838 = vlaneseq
  %v1839 = vshrl.u32 %v1838, 7
  %v1840 = vsub.s32 0, %v1839
  %v1841 = vrot.slane %v1836, %v1840
  %v1842 = vshrl.u32 %v983, 16
  %v1843 = vpack.i.b16 %v1842, %v1842
  %v1845 = vlaneseq
  %v1846 = vshrl.u32 %v1845, 7
  %v1847 = vsub.s32 0, %v1846
  %v1848 = vrot.slane %v1843, %v1847
  %v1849 = vshrl.u32 %v985, 16
  %v1850 = vpack.i.b16 %v1849, %v1849
  %v1852 = vlaneseq
  %v1853 = vshrl.u32 %v1852, 7
  %v1854 = vsub.s32 0, %v1853
  %v1855 = vrot.slane %v1850, %v1854
  %v1856 = vshrl.u32 %v987, 16
  %v1857 = vpack.i.b16 %v1856, %v1856
  %v1859 = vlaneseq
  %v1860 = vshrl.u32 %v1859, 7
  %v1861 = vsub.s32 0, %v1860
  %v1862 = vrot.slane %v1857, %v1861
  %v1863 = vshrl.u32 %v1001, 16
  %v1864 = vpack.i.b16 %v1863, %v1863
  %v1866 = vlaneseq
  %v1867 = vshrl.u32 %v1866, 7
  %v1868 = vsub.s32 0, %v1867
  %v1869 = vrot.slane %v1864, %v1868
  %v1870 = vmul.bf16 %v1478, %v1701
  %v1871 = vmul.bf16 %v1479, %v1708
  %v1872 = vmul.bf16 %v1480, %v1715
  %v1873 = vmul.bf16 %v1481, %v1722
  %v1874 = vmul.bf16 %v1482, %v1729
  %v1875 = vmul.bf16 %v1483, %v1736
  %v1876 = vmul.bf16 %v1484, %v1743
  %v1877 = vmul.bf16 %v1485, %v1750
  %v1878 = vmul.bf16 %v1486, %v1757
  %v1879 = vmul.bf16 %v1487, %v1764
  %v1880 = vmul.bf16 %v1488, %v1771
  %v1881 = vmul.bf16 %v1489, %v1778
  %v1882 = vmul.bf16 %v1490, %v1785
  %v1883 = vmul.bf16 %v1491, %v1792
  %v1884 = vmul.bf16 %v1492, %v1799
  %v1885 = vmul.bf16 %v1493, %v1806
  %v1886 = vmul.bf16 %v1494, %v1813
  %v1887 = vmul.bf16 %v1495, %v1820
  %v1888 = vmul.bf16 %v1496, %v1827
  %v1889 = vmul.bf16 %v1497, %v1834
  %v1890 = vmul.bf16 %v1498, %v1841
  %v1891 = vmul.bf16 %v1499, %v1848
  %v1892 = vmul.bf16 %v1500, %v1855
  %v1893 = vmul.bf16 %v1501, %v1862
  %v1894 = vmul.bf16 %v1681, %v1869
  %v1895 = vmul.bf16 %v1502, %v1701
  %v1896 = vmul.bf16 %v1503, %v1708
  %v1897 = vmul.bf16 %v1504, %v1715
  %v1898 = vmul.bf16 %v1505, %v1722
  %v1899 = vmul.bf16 %v1506, %v1729
  %v1900 = vmul.bf16 %v1507, %v1736
  %v1901 = vmul.bf16 %v1508, %v1743
  %v1902 = vmul.bf16 %v1509, %v1750
  %v1903 = vmul.bf16 %v1510, %v1757
  %v1904 = vmul.bf16 %v1511, %v1764
  %v1905 = vmul.bf16 %v1512, %v1771
  %v1906 = vmul.bf16 %v1513, %v1778
  %v1907 = vmul.bf16 %v1514, %v1785
  %v1908 = vmul.bf16 %v1515, %v1792
  %v1909 = vmul.bf16 %v1516, %v1799
  %v1910 = vmul.bf16 %v1517, %v1806
  %v1911 = vmul.bf16 %v1518, %v1813
  %v1912 = vmul.bf16 %v1519, %v1820
  %v1913 = vmul.bf16 %v1520, %v1827
  %v1914 = vmul.bf16 %v1521, %v1834
  %v1915 = vmul.bf16 %v1522, %v1841
  %v1916 = vmul.bf16 %v1523, %v1848
  %v1917 = vmul.bf16 %v1524, %v1855
  %v1918 = vmul.bf16 %v1525, %v1862
  %v1919 = vmul.bf16 %v1685, %v1869
  %v1920 = vmul.bf16 %v1526, %v1701
  %v1921 = vmul.bf16 %v1527, %v1708
  %v1922 = vmul.bf16 %v1528, %v1715
  %v1923 = vmul.bf16 %v1529, %v1722
  %v1924 = vmul.bf16 %v1530, %v1729
  %v1925 = vmul.bf16 %v1531, %v1736
  %v1926 = vmul.bf16 %v1532, %v1743
  %v1927 = vmul.bf16 %v1533, %v1750
  %v1928 = vmul.bf16 %v1534, %v1757
  %v1929 = vmul.bf16 %v1535, %v1764
  %v1930 = vmul.bf16 %v1536, %v1771
  %v1931 = vmul.bf16 %v1537, %v1778
  %v1932 = vmul.bf16 %v1538, %v1785
  %v1933 = vmul.bf16 %v1539, %v1792
  %v1934 = vmul.bf16 %v1540, %v1799
  %v1935 = vmul.bf16 %v1541, %v1806
  %v1936 = vmul.bf16 %v1542, %v1813
  %v1937 = vmul.bf16 %v1543, %v1820
  %v1938 = vmul.bf16 %v1544, %v1827
  %v1939 = vmul.bf16 %v1545, %v1834
  %v1940 = vmul.bf16 %v1546, %v1841
  %v1941 = vmul.bf16 %v1547, %v1848
  %v1942 = vmul.bf16 %v1548, %v1855
  %v1943 = vmul.bf16 %v1549, %v1862
  %v1944 = vmul.bf16 %v1689, %v1869
  %v1945 = vmul.bf16 %v1550, %v1701
  %v1946 = vmul.bf16 %v1551, %v1708
  %v1947 = vmul.bf16 %v1552, %v1715
  %v1948 = vmul.bf16 %v1553, %v1722
  %v1949 = vmul.bf16 %v1554, %v1729
  %v1950 = vmul.bf16 %v1555, %v1736
  %v1951 = vmul.bf16 %v1556, %v1743
  %v1952 = vmul.bf16 %v1557, %v1750
  %v1953 = vmul.bf16 %v1558, %v1757
  %v1954 = vmul.bf16 %v1559, %v1764
  %v1955 = vmul.bf16 %v1560, %v1771
  %v1956 = vmul.bf16 %v1561, %v1778
  %v1957 = vmul.bf16 %v1562, %v1785
  %v1958 = vmul.bf16 %v1563, %v1792
  %v1959 = vmul.bf16 %v1564, %v1799
  %v1960 = vmul.bf16 %v1565, %v1806
  %v1961 = vmul.bf16 %v1566, %v1813
  %v1962 = vmul.bf16 %v1567, %v1820
  %v1963 = vmul.bf16 %v1568, %v1827
  %v1964 = vmul.bf16 %v1569, %v1834
  %v1965 = vmul.bf16 %v1570, %v1841
  %v1966 = vmul.bf16 %v1571, %v1848
  %v1967 = vmul.bf16 %v1572, %v1855
  %v1968 = vmul.bf16 %v1573, %v1862
  %v1969 = vmul.bf16 %v1693, %v1869
  %v1970 = vld [vmem:[%s1] sm:$0xff]
  %v1971 = vld [vmem:[%s1 + $0x8] sm:$0xff]
  %v1972 = vld [vmem:[%s1 + $0x10] sm:$0xff]
  %v1973 = vld [vmem:[%s1 + $0x18] sm:$0xff]
  %v1974 = vld [vmem:[%s1 + $0x20] sm:$0xff]
  %v1975 = vld [vmem:[%s1 + $0x28] sm:$0xff]
  %v1976 = vld [vmem:[%s1 + $0x30] sm:$0xff]
  %v1977 = vld [vmem:[%s1 + $0x38] sm:$0xff]
  %v1978 = vld [vmem:[%s1 + $0x40] sm:$0xff]
  %v1979 = vld [vmem:[%s1 + $0x48] sm:$0xff]
  %v1980 = vld [vmem:[%s1 + $0x50] sm:$0xff]
  %v1981 = vld [vmem:[%s1 + $0x58] sm:$0xff]
  %v1982 = vld [vmem:[%s1 + $0x60] sm:$0xff]
  %v1983 = vld [vmem:[%s1 + $0x68] sm:$0xff]
  %v1984 = vld [vmem:[%s1 + $0x70] sm:$0xff]
  %v1985 = vld [vmem:[%s1 + $0x78] sm:$0xff]
  %v2002 = vunpack.c.l.b16 %v1970
  %v2003 = vunpack.c.h.b16 %v1970
  %v2004 = vunpack.c.l.b16 %v1971
  %v2005 = vunpack.c.h.b16 %v1971
  %v2006 = vunpack.c.l.b16 %v1972
  %v2007 = vunpack.c.h.b16 %v1972
  %v2008 = vunpack.c.l.b16 %v1973
  %v2009 = vunpack.c.h.b16 %v1973
  %v2010 = vunpack.c.l.b16 %v1974
  %v2011 = vunpack.c.h.b16 %v1974
  %v2012 = vunpack.c.l.b16 %v1975
  %v2013 = vunpack.c.h.b16 %v1975
  %v2014 = vunpack.c.l.b16 %v1976
  %v2015 = vunpack.c.h.b16 %v1976
  %v2016 = vunpack.c.l.b16 %v1977
  %v2017 = vunpack.c.h.b16 %v1977
  %v2018 = vunpack.c.l.b16 %v1978
  %v2019 = vunpack.c.h.b16 %v1978
  %v2020 = vunpack.c.l.b16 %v1979
  %v2021 = vunpack.c.h.b16 %v1979
  %v2022 = vunpack.c.l.b16 %v1980
  %v2023 = vunpack.c.h.b16 %v1980
  %v2024 = vunpack.c.l.b16 %v1981
  %v2025 = vunpack.c.h.b16 %v1981
  %v2026 = vunpack.c.l.b16 %v1982
  %v2027 = vunpack.c.h.b16 %v1982
  %v2028 = vunpack.c.l.b16 %v1983
  %v2029 = vunpack.c.h.b16 %v1983
  %v2030 = vunpack.c.l.b16 %v1984
  %v2031 = vunpack.c.h.b16 %v1984
  %v2032 = vunpack.c.l.b16 %v1985
  %v2033 = vunpack.c.h.b16 %v1985
  %v2034 = vpack.c.b16 %v2004, %v2002
  %v2035 = vpack.c.b16 %v2005, %v2003
  %v2036 = vpack.c.b16 %v2008, %v2006
  %v2037 = vpack.c.b16 %v2009, %v2007
  %v2038 = vpack.c.b16 %v2012, %v2010
  %v2039 = vpack.c.b16 %v2013, %v2011
  %v2040 = vpack.c.b16 %v2016, %v2014
  %v2041 = vpack.c.b16 %v2017, %v2015
  %v2042 = vpack.c.b16 %v2020, %v2018
  %v2043 = vpack.c.b16 %v2021, %v2019
  %v2044 = vpack.c.b16 %v2024, %v2022
  %v2045 = vpack.c.b16 %v2025, %v2023
  %v2046 = vpack.c.b16 %v2028, %v2026
  %v2047 = vpack.c.b16 %v2029, %v2027
  %v2048 = vpack.c.b16 %v2032, %v2030
  %v2049 = vpack.c.b16 %v2033, %v2031
  %vm2058 = vcmask 523264
  %v2060 = vsel %vm2058, %v2035, 0
  %v2063 = vsel %vm2058, %v2037, 0
  %v2066 = vsel %vm2058, %v2039, 0
  %v2069 = vsel %vm2058, %v2041, 0
  %v2072 = vsel %vm2058, %v2043, 0
  %v2075 = vsel %vm2058, %v2045, 0
  %v2078 = vsel %vm2058, %v2047, 0
  %v2081 = vsel %vm2058, %v2049, 0
  %2083 = vmatprep.subr.bf16.mxu0 %v1178
  %2084 = vmatpush1.bf16.msra.mxu0 %v1177
  %2085 = vmatprep.subr.bf16.mxu0 %v1203
  %2086 = vmatpush1.bf16.msra.mxu0 %v1202
  %2087 = vmatprep.subr.bf16.mxu0 %v1228
  %2088 = vmatpush1.bf16.msra.mxu0 %v1227
  %2089 = vmatprep.subr.bf16.mxu0 %v1253
  %2090 = vmatpush1.bf16.msra.mxu0 %v1252
  %2091 = vmatprep.subr.bf16.mxu0 %v216
  %2092 = vmatpush1.bf16.msra.mxu0 %v215
  %2093 = vmatprep.subr.bf16.mxu0 %v241
  %2094 = vmatpush1.bf16.msra.mxu0 %v240
  %2095 = vmatprep.subr.bf16.mxu0 %v266
  %2096 = vmatpush1.bf16.msra.mxu0 %v265
  %2097 = vmatprep.subr.bf16.mxu0 %v291
  %2098 = vmatpush1.bf16.msra.mxu0 %v290
  %2099 = vmatprep.subr.bf16.mxu0 %v1871
  %2100 = vmatpush1.bf16.msra.mxu0 %v1870
  %2101 = vmatprep.subr.bf16.mxu0 %v1896
  %2102 = vmatpush1.bf16.msra.mxu0 %v1895
  %2103 = vmatprep.subr.bf16.mxu0 %v1921
  %2104 = vmatpush1.bf16.msra.mxu0 %v1920
  %2105 = vmatprep.subr.bf16.mxu0 %v1946
  %2106 = vmatpush1.bf16.msra.mxu0 %v1945
  %2107 = vmatprep.subr.bf16.mxu0 0
  %2108 = vmatpush1.bf16.msra.mxu0 0
  %2109 = vmatprep.subr.bf16.mxu0 0
  %2110 = vmatpush1.bf16.msra.mxu0 0
  %2111 = vmatprep.subr.bf16.mxu0 0
  %2112 = vmatpush1.bf16.msra.mxu0 0
  %2113 = vmatprep.subr.bf16.mxu0 0
  %2114 = vmatpush1.bf16.msra.mxu0 0
  %2115 = vmatprep.mubr.bf16.mxu0 %v2060
  %2116 = vmatmul.mubr.bf16.gmra.mrb[0].mxu0 %v2034
  %v2117 = vpop.f32.mrb[0].mxu0
  %v2118 = vadd.f32 0.0, %v2117
  %v2119 = vpop.f32.mrb[0].mxu0
  %v2120 = vadd.f32 0.0, %v2119
  %v2121 = vpop.f32.mrb[0].mxu0
  %v2122 = vadd.f32 0.0, %v2121
  %v2123 = vpop.f32.mrb[0].mxu0
  %v2124 = vadd.f32 0.0, %v2123
  %2125 = vmatprep.mubr.bf16.mxu0 %v2063
  %2126 = vmatmul.mubr.bf16.gmra.mrb[0].mxu0 %v2036
  %v2127 = vpop.f32.mrb[0].mxu0
  %v2128 = vadd.f32 0.0, %v2127
  %v2129 = vpop.f32.mrb[0].mxu0
  %v2130 = vadd.f32 0.0, %v2129
  %v2131 = vpop.f32.mrb[0].mxu0
  %v2132 = vadd.f32 0.0, %v2131
  %v2133 = vpop.f32.mrb[0].mxu0
  %v2134 = vadd.f32 0.0, %v2133
  %2135 = vmatprep.mubr.bf16.mxu0 %v2066
  %2136 = vmatmul.mubr.bf16.gmra.mrb[0].mxu0 %v2038
  %v2137 = vpop.f32.mrb[0].mxu0
  %v2138 = vadd.f32 0.0, %v2137
  %v2139 = vpop.f32.mrb[0].mxu0
  %v2140 = vadd.f32 0.0, %v2139
  %v2141 = vpop.f32.mrb[0].mxu0
  %v2142 = vadd.f32 0.0, %v2141
  %v2143 = vpop.f32.mrb[0].mxu0
  %v2144 = vadd.f32 0.0, %v2143
  %2145 = vmatprep.mubr.bf16.mxu0 %v2069
  %2146 = vmatmul.mubr.bf16.gmra.mrb[0].mxu0 %v2040
  %v2147 = vpop.f32.mrb[0].mxu0
  %v2148 = vadd.f32 0.0, %v2147
  %v2149 = vpop.f32.mrb[0].mxu0
  %v2150 = vadd.f32 0.0, %v2149
  %v2151 = vpop.f32.mrb[0].mxu0
  %v2152 = vadd.f32 0.0, %v2151
  %v2153 = vpop.f32.mrb[0].mxu0
  %v2154 = vadd.f32 0.0, %v2153
  %2155 = vmatprep.mubr.bf16.mxu0 %v2072
  %2156 = vmatmul.mubr.bf16.gmra.mrb[0].mxu0 %v2042
  %v2157 = vpop.f32.mrb[0].mxu0
  %v2158 = vadd.f32 0.0, %v2157
  %v2159 = vpop.f32.mrb[0].mxu0
  %v2160 = vadd.f32 0.0, %v2159
  %v2161 = vpop.f32.mrb[0].mxu0
  %v2162 = vadd.f32 0.0, %v2161
  %v2163 = vpop.f32.mrb[0].mxu0
  %v2164 = vadd.f32 0.0, %v2163
  %2165 = vmatprep.mubr.bf16.mxu0 %v2075
  %2166 = vmatmul.mubr.bf16.gmra.mrb[0].mxu0 %v2044
  %v2167 = vpop.f32.mrb[0].mxu0
  %v2168 = vadd.f32 0.0, %v2167
  %v2169 = vpop.f32.mrb[0].mxu0
  %v2170 = vadd.f32 0.0, %v2169
  %v2171 = vpop.f32.mrb[0].mxu0
  %v2172 = vadd.f32 0.0, %v2171
  %v2173 = vpop.f32.mrb[0].mxu0
  %v2174 = vadd.f32 0.0, %v2173
  %2175 = vmatprep.mubr.bf16.mxu0 %v2078
  %2176 = vmatmul.mubr.bf16.gmra.mrb[0].mxu0 %v2046
  %v2177 = vpop.f32.mrb[0].mxu0
  %v2178 = vadd.f32 0.0, %v2177
  %v2179 = vpop.f32.mrb[0].mxu0
  %v2180 = vadd.f32 0.0, %v2179
  %v2181 = vpop.f32.mrb[0].mxu0
  %v2182 = vadd.f32 0.0, %v2181
  %v2183 = vpop.f32.mrb[0].mxu0
  %v2184 = vadd.f32 0.0, %v2183
  %2185 = vmatprep.mubr.bf16.mxu0 %v2081
  %2186 = vmatmul.mubr.bf16.gmra.mrb[0].mxu0 %v2048
  %v2187 = vpop.f32.mrb[0].mxu0
  %v2188 = vadd.f32 0.0, %v2187
  %v2189 = vpop.f32.mrb[0].mxu0
  %v2190 = vadd.f32 0.0, %v2189
  %v2191 = vpop.f32.mrb[0].mxu0
  %v2192 = vadd.f32 0.0, %v2191
  %v2193 = vpop.f32.mrb[0].mxu0
  %v2194 = vadd.f32 0.0, %v2193
  %2195 = vdwg.mxu0
  %2196 = vmatprep.subr.bf16.mxu0 %v1180
  %2197 = vmatpush1.bf16.msra.mxu0 %v1179
  %2198 = vmatprep.subr.bf16.mxu0 %v1205
  %2199 = vmatpush1.bf16.msra.mxu0 %v1204
  %2200 = vmatprep.subr.bf16.mxu0 %v1230
  %2201 = vmatpush1.bf16.msra.mxu0 %v1229
  %2202 = vmatprep.subr.bf16.mxu0 %v1255
  %2203 = vmatpush1.bf16.msra.mxu0 %v1254
  %2204 = vmatprep.subr.bf16.mxu0 %v218
  %2205 = vmatpush1.bf16.msra.mxu0 %v217
  %2206 = vmatprep.subr.bf16.mxu0 %v243
  %2207 = vmatpush1.bf16.msra.mxu0 %v242
  %2208 = vmatprep.subr.bf16.mxu0 %v268
  %2209 = vmatpush1.bf16.msra.mxu0 %v267
  %2210 = vmatprep.subr.bf16.mxu0 %v293
  %2211 = vmatpush1.bf16.msra.mxu0 %v292
  %2212 = vmatprep.subr.bf16.mxu0 %v1873
  %2213 = vmatpush1.bf16.msra.mxu0 %v1872
  %2214 = vmatprep.subr.bf16.mxu0 %v1898
  %2215 = vmatpush1.bf16.msra.mxu0 %v1897
  %2216 = vmatprep.subr.bf16.mxu0 %v1923
  %2217 = vmatpush1.bf16.msra.mxu0 %v1922
  %2218 = vmatprep.subr.bf16.mxu0 %v1948
  %2219 = vmatpush1.bf16.msra.mxu0 %v1947
  %2220 = vmatprep.subr.bf16.mxu0 0
  %2221 = vmatpush1.bf16.msra.mxu0 0
  %2222 = vmatprep.subr.bf16.mxu0 0
  %2223 = vmatpush1.bf16.msra.mxu0 0
  %2224 = vmatprep.subr.bf16.mxu0 0
  %2225 = vmatpush1.bf16.msra.mxu0 0
  %2226 = vmatprep.subr.bf16.mxu0 0
  %2227 = vmatpush1.bf16.msra.mxu0 0
  %2228 = vmatprep.mubr.bf16.mxu0 %v2060
  %2229 = vmatmul.mubr.bf16.gmra.mrb[0].mxu0 %v2034
  %v2230 = vpop.f32.mrb[0].mxu0
  %v2231 = vadd.f32 0.0, %v2230
  %v2232 = vpop.f32.mrb[0].mxu0
  %v2233 = vadd.f32 0.0, %v2232
  %v2234 = vpop.f32.mrb[0].mxu0
  %v2235 = vadd.f32 0.0, %v2234
  %v2236 = vpop.f32.mrb[0].mxu0
  %v2237 = vadd.f32 0.0, %v2236
  %2238 = vmatprep.mubr.bf16.mxu0 %v2063
  %2239 = vmatmul.mubr.bf16.gmra.mrb[0].mxu0 %v2036
  %v2240 = vpop.f32.mrb[0].mxu0
  %v2241 = vadd.f32 0.0, %v2240
  %v2242 = vpop.f32.mrb[0].mxu0
  %v2243 = vadd.f32 0.0, %v2242
  %v2244 = vpop.f32.mrb[0].mxu0
  %v2245 = vadd.f32 0.0, %v2244
  %v2246 = vpop.f32.mrb[0].mxu0
  %v2247 = vadd.f32 0.0, %v2246
  %2248 = vmatprep.mubr.bf16.mxu0 %v2066
  %2249 = vmatmul.mubr.bf16.gmra.mrb[0].mxu0 %v2038
  %v2250 = vpop.f32.mrb[0].mxu0
  %v2251 = vadd.f32 0.0, %v2250
  %v2252 = vpop.f32.mrb[0].mxu0
  %v2253 = vadd.f32 0.0, %v2252
  %v2254 = vpop.f32.mrb[0].mxu0
  %v2255 = vadd.f32 0.0, %v2254
  %v2256 = vpop.f32.mrb[0].mxu0
  %v2257 = vadd.f32 0.0, %v2256
  %2258 = vmatprep.mubr.bf16.mxu0 %v2069
  %2259 = vmatmul.mubr.bf16.gmra.mrb[0].mxu0 %v2040
  %v2260 = vpop.f32.mrb[0].mxu0
  %v2261 = vadd.f32 0.0, %v2260
  %v2262 = vpop.f32.mrb[0].mxu0
  %v2263 = vadd.f32 0.0, %v2262
  %v2264 = vpop.f32.mrb[0].mxu0
  %v2265 = vadd.f32 0.0, %v2264
  %v2266 = vpop.f32.mrb[0].mxu0
  %v2267 = vadd.f32 0.0, %v2266
  %2268 = vmatprep.mubr.bf16.mxu0 %v2072
  %2269 = vmatmul.mubr.bf16.gmra.mrb[0].mxu0 %v2042
  %v2270 = vpop.f32.mrb[0].mxu0
  %v2271 = vadd.f32 0.0, %v2270
  %v2272 = vpop.f32.mrb[0].mxu0
  %v2273 = vadd.f32 0.0, %v2272
  %v2274 = vpop.f32.mrb[0].mxu0
  %v2275 = vadd.f32 0.0, %v2274
  %v2276 = vpop.f32.mrb[0].mxu0
  %v2277 = vadd.f32 0.0, %v2276
  %2278 = vmatprep.mubr.bf16.mxu0 %v2075
  %2279 = vmatmul.mubr.bf16.gmra.mrb[0].mxu0 %v2044
  %v2280 = vpop.f32.mrb[0].mxu0
  %v2281 = vadd.f32 0.0, %v2280
  %v2282 = vpop.f32.mrb[0].mxu0
  %v2283 = vadd.f32 0.0, %v2282
  %v2284 = vpop.f32.mrb[0].mxu0
  %v2285 = vadd.f32 0.0, %v2284
  %v2286 = vpop.f32.mrb[0].mxu0
  %v2287 = vadd.f32 0.0, %v2286
  %2288 = vmatprep.mubr.bf16.mxu0 %v2078
  %2289 = vmatmul.mubr.bf16.gmra.mrb[0].mxu0 %v2046
  %v2290 = vpop.f32.mrb[0].mxu0
  %v2291 = vadd.f32 0.0, %v2290
  %v2292 = vpop.f32.mrb[0].mxu0
  %v2293 = vadd.f32 0.0, %v2292
  %v2294 = vpop.f32.mrb[0].mxu0
  %v2295 = vadd.f32 0.0, %v2294
  %v2296 = vpop.f32.mrb[0].mxu0
  %v2297 = vadd.f32 0.0, %v2296
  %2298 = vmatprep.mubr.bf16.mxu0 %v2081
  %2299 = vmatmul.mubr.bf16.gmra.mrb[0].mxu0 %v2048
  %v2300 = vpop.f32.mrb[0].mxu0
  %v2301 = vadd.f32 0.0, %v2300
  %v2302 = vpop.f32.mrb[0].mxu0
  %v2303 = vadd.f32 0.0, %v2302
  %v2304 = vpop.f32.mrb[0].mxu0
  %v2305 = vadd.f32 0.0, %v2304
  %v2306 = vpop.f32.mrb[0].mxu0
  %v2307 = vadd.f32 0.0, %v2306
  %2308 = vdwg.mxu0
  %2309 = vmatprep.subr.bf16.mxu0 %v1182
  %2310 = vmatpush1.bf16.msra.mxu0 %v1181
  %2311 = vmatprep.subr.bf16.mxu0 %v1207
  %2312 = vmatpush1.bf16.msra.mxu0 %v1206
  %2313 = vmatprep.subr.bf16.mxu0 %v1232
  %2314 = vmatpush1.bf16.msra.mxu0 %v1231
  %2315 = vmatprep.subr.bf16.mxu0 %v1257
  %2316 = vmatpush1.bf16.msra.mxu0 %v1256
  %2317 = vmatprep.subr.bf16.mxu0 %v220
  %2318 = vmatpush1.bf16.msra.mxu0 %v219
  %2319 = vmatprep.subr.bf16.mxu0 %v245
  %2320 = vmatpush1.bf16.msra.mxu0 %v244
  %2321 = vmatprep.subr.bf16.mxu0 %v270
  %2322 = vmatpush1.bf16.msra.mxu0 %v269
  %2323 = vmatprep.subr.bf16.mxu0 %v295
  %2324 = vmatpush1.bf16.msra.mxu0 %v294
  %2325 = vmatprep.subr.bf16.mxu0 %v1875
  %2326 = vmatpush1.bf16.msra.mxu0 %v1874
  %2327 = vmatprep.subr.bf16.mxu0 %v1900
  %2328 = vmatpush1.bf16.msra.mxu0 %v1899
  %2329 = vmatprep.subr.bf16.mxu0 %v1925
  %2330 = vmatpush1.bf16.msra.mxu0 %v1924
  %2331 = vmatprep.subr.bf16.mxu0 %v1950
  %2332 = vmatpush1.bf16.msra.mxu0 %v1949
  %2333 = vmatprep.subr.bf16.mxu0 0
  %2334 = vmatpush1.bf16.msra.mxu0 0
  %2335 = vmatprep.subr.bf16.mxu0 0
  %2336 = vmatpush1.bf16.msra.mxu0 0
  %2337 = vmatprep.subr.bf16.mxu0 0
  %2338 = vmatpush1.bf16.msra.mxu0 0
  %2339 = vmatprep.subr.bf16.mxu0 0
  %2340 = vmatpush1.bf16.msra.mxu0 0
  %2341 = vmatprep.mubr.bf16.mxu0 %v2060
  %2342 = vmatmul.mubr.bf16.gmra.mrb[0].mxu0 %v2034
  %v2343 = vpop.f32.mrb[0].mxu0
  %v2344 = vadd.f32 0.0, %v2343
  %v2345 = vpop.f32.mrb[0].mxu0
  %v2346 = vadd.f32 0.0, %v2345
  %v2347 = vpop.f32.mrb[0].mxu0
  %v2348 = vadd.f32 0.0, %v2347
  %v2349 = vpop.f32.mrb[0].mxu0
  %v2350 = vadd.f32 0.0, %v2349
  %2351 = vmatprep.mubr.bf16.mxu0 %v2063
  %2352 = vmatmul.mubr.bf16.gmra.mrb[0].mxu0 %v2036
  %v2353 = vpop.f32.mrb[0].mxu0
  %v2354 = vadd.f32 0.0, %v2353
  %v2355 = vpop.f32.mrb[0].mxu0
  %v2356 = vadd.f32 0.0, %v2355
  %v2357 = vpop.f32.mrb[0].mxu0
  %v2358 = vadd.f32 0.0, %v2357
  %v2359 = vpop.f32.mrb[0].mxu0
  %v2360 = vadd.f32 0.0, %v2359
  %2361 = vmatprep.mubr.bf16.mxu0 %v2066
  %2362 = vmatmul.mubr.bf16.gmra.mrb[0].mxu0 %v2038
  %v2363 = vpop.f32.mrb[0].mxu0
  %v2364 = vadd.f32 0.0, %v2363
  %v2365 = vpop.f32.mrb[0].mxu0
  %v2366 = vadd.f32 0.0, %v2365
  %v2367 = vpop.f32.mrb[0].mxu0
  %v2368 = vadd.f32 0.0, %v2367
  %v2369 = vpop.f32.mrb[0].mxu0
  %v2370 = vadd.f32 0.0, %v2369
  %2371 = vmatprep.mubr.bf16.mxu0 %v2069
  %2372 = vmatmul.mubr.bf16.gmra.mrb[0].mxu0 %v2040
  %v2373 = vpop.f32.mrb[0].mxu0
  %v2374 = vadd.f32 0.0, %v2373
  %v2375 = vpop.f32.mrb[0].mxu0
  %v2376 = vadd.f32 0.0, %v2375
  %v2377 = vpop.f32.mrb[0].mxu0
  %v2378 = vadd.f32 0.0, %v2377
  %v2379 = vpop.f32.mrb[0].mxu0
  %v2380 = vadd.f32 0.0, %v2379
  %2381 = vmatprep.mubr.bf16.mxu0 %v2072
  %2382 = vmatmul.mubr.bf16.gmra.mrb[0].mxu0 %v2042
  %v2383 = vpop.f32.mrb[0].mxu0
  %v2384 = vadd.f32 0.0, %v2383
  %v2385 = vpop.f32.mrb[0].mxu0
  %v2386 = vadd.f32 0.0, %v2385
  %v2387 = vpop.f32.mrb[0].mxu0
  %v2388 = vadd.f32 0.0, %v2387
  %v2389 = vpop.f32.mrb[0].mxu0
  %v2390 = vadd.f32 0.0, %v2389
  %2391 = vmatprep.mubr.bf16.mxu0 %v2075
  %2392 = vmatmul.mubr.bf16.gmra.mrb[0].mxu0 %v2044
  %v2393 = vpop.f32.mrb[0].mxu0
  %v2394 = vadd.f32 0.0, %v2393
  %v2395 = vpop.f32.mrb[0].mxu0
  %v2396 = vadd.f32 0.0, %v2395
  %v2397 = vpop.f32.mrb[0].mxu0
  %v2398 = vadd.f32 0.0, %v2397
  %v2399 = vpop.f32.mrb[0].mxu0
  %v2400 = vadd.f32 0.0, %v2399
  %2401 = vmatprep.mubr.bf16.mxu0 %v2078
  %2402 = vmatmul.mubr.bf16.gmra.mrb[0].mxu0 %v2046
  %v2403 = vpop.f32.mrb[0].mxu0
  %v2404 = vadd.f32 0.0, %v2403
  %v2405 = vpop.f32.mrb[0].mxu0
  %v2406 = vadd.f32 0.0, %v2405
  %v2407 = vpop.f32.mrb[0].mxu0
  %v2408 = vadd.f32 0.0, %v2407
  %v2409 = vpop.f32.mrb[0].mxu0
  %v2410 = vadd.f32 0.0, %v2409
  %2411 = vmatprep.mubr.bf16.mxu0 %v2081
  %2412 = vmatmul.mubr.bf16.gmra.mrb[0].mxu0 %v2048
  %v2413 = vpop.f32.mrb[0].mxu0
  %v2414 = vadd.f32 0.0, %v2413
  %v2415 = vpop.f32.mrb[0].mxu0
  %v2416 = vadd.f32 0.0, %v2415
  %v2417 = vpop.f32.mrb[0].mxu0
  %v2418 = vadd.f32 0.0, %v2417
  %v2419 = vpop.f32.mrb[0].mxu0
  %v2420 = vadd.f32 0.0, %v2419
  %2421 = vdwg.mxu0
  %2422 = vmatprep.subr.bf16.mxu0 %v1184
  %2423 = vmatpush1.bf16.msra.mxu0 %v1183
  %2424 = vmatprep.subr.bf16.mxu0 %v1209
  %2425 = vmatpush1.bf16.msra.mxu0 %v1208
  %2426 = vmatprep.subr.bf16.mxu0 %v1234
  %2427 = vmatpush1.bf16.msra.mxu0 %v1233
  %2428 = vmatprep.subr.bf16.mxu0 %v1259
  %2429 = vmatpush1.bf16.msra.mxu0 %v1258
  %2430 = vmatprep.subr.bf16.mxu0 %v222
  %2431 = vmatpush1.bf16.msra.mxu0 %v221
  %2432 = vmatprep.subr.bf16.mxu0 %v247
  %2433 = vmatpush1.bf16.msra.mxu0 %v246
  %2434 = vmatprep.subr.bf16.mxu0 %v272
  %2435 = vmatpush1.bf16.msra.mxu0 %v271
  %2436 = vmatprep.subr.bf16.mxu0 %v297
  %2437 = vmatpush1.bf16.msra.mxu0 %v296
  %2438 = vmatprep.subr.bf16.mxu0 %v1877
  %2439 = vmatpush1.bf16.msra.mxu0 %v1876
  %2440 = vmatprep.subr.bf16.mxu0 %v1902
  %2441 = vmatpush1.bf16.msra.mxu0 %v1901
  %2442 = vmatprep.subr.bf16.mxu0 %v1927
  %2443 = vmatpush1.bf16.msra.mxu0 %v1926
  %2444 = vmatprep.subr.bf16.mxu0 %v1952
  %2445 = vmatpush1.bf16.msra.mxu0 %v1951
  %2446 = vmatprep.subr.bf16.mxu0 0
  %2447 = vmatpush1.bf16.msra.mxu0 0
  %2448 = vmatprep.subr.bf16.mxu0 0
  %2449 = vmatpush1.bf16.msra.mxu0 0
  %2450 = vmatprep.subr.bf16.mxu0 0
  %2451 = vmatpush1.bf16.msra.mxu0 0
  %2452 = vmatprep.subr.bf16.mxu0 0
  %2453 = vmatpush1.bf16.msra.mxu0 0
  %2454 = vmatprep.mubr.bf16.mxu0 %v2060
  %2455 = vmatmul.mubr.bf16.gmra.mrb[0].mxu0 %v2034
  %v2456 = vpop.f32.mrb[0].mxu0
  %v2457 = vadd.f32 0.0, %v2456
  %v2458 = vpop.f32.mrb[0].mxu0
  %v2459 = vadd.f32 0.0, %v2458
  %v2460 = vpop.f32.mrb[0].mxu0
  %v2461 = vadd.f32 0.0, %v2460
  %v2462 = vpop.f32.mrb[0].mxu0
  %v2463 = vadd.f32 0.0, %v2462
  %2464 = vmatprep.mubr.bf16.mxu0 %v2063
  %2465 = vmatmul.mubr.bf16.gmra.mrb[0].mxu0 %v2036
  %v2466 = vpop.f32.mrb[0].mxu0
  %v2467 = vadd.f32 0.0, %v2466
  %v2468 = vpop.f32.mrb[0].mxu0
  %v2469 = vadd.f32 0.0, %v2468
  %v2470 = vpop.f32.mrb[0].mxu0
  %v2471 = vadd.f32 0.0, %v2470
  %v2472 = vpop.f32.mrb[0].mxu0
  %v2473 = vadd.f32 0.0, %v2472
  %2474 = vmatprep.mubr.bf16.mxu0 %v2066
  %2475 = vmatmul.mubr.bf16.gmra.mrb[0].mxu0 %v2038
  %v2476 = vpop.f32.mrb[0].mxu0
  %v2477 = vadd.f32 0.0, %v2476
  %v2478 = vpop.f32.mrb[0].mxu0
  %v2479 = vadd.f32 0.0, %v2478
  %v2480 = vpop.f32.mrb[0].mxu0
  %v2481 = vadd.f32 0.0, %v2480
  %v2482 = vpop.f32.mrb[0].mxu0
  %v2483 = vadd.f32 0.0, %v2482
  %2484 = vmatprep.mubr.bf16.mxu0 %v2069
  %2485 = vmatmul.mubr.bf16.gmra.mrb[0].mxu0 %v2040
  %v2486 = vpop.f32.mrb[0].mxu0
  %v2487 = vadd.f32 0.0, %v2486
  %v2488 = vpop.f32.mrb[0].mxu0
  %v2489 = vadd.f32 0.0, %v2488
  %v2490 = vpop.f32.mrb[0].mxu0
  %v2491 = vadd.f32 0.0, %v2490
  %v2492 = vpop.f32.mrb[0].mxu0
  %v2493 = vadd.f32 0.0, %v2492
  %2494 = vmatprep.mubr.bf16.mxu0 %v2072
  %2495 = vmatmul.mubr.bf16.gmra.mrb[0].mxu0 %v2042
  %v2496 = vpop.f32.mrb[0].mxu0
  %v2497 = vadd.f32 0.0, %v2496
  %v2498 = vpop.f32.mrb[0].mxu0
  %v2499 = vadd.f32 0.0, %v2498
  %v2500 = vpop.f32.mrb[0].mxu0
  %v2501 = vadd.f32 0.0, %v2500
  %v2502 = vpop.f32.mrb[0].mxu0
  %v2503 = vadd.f32 0.0, %v2502
  %2504 = vmatprep.mubr.bf16.mxu0 %v2075
  %2505 = vmatmul.mubr.bf16.gmra.mrb[0].mxu0 %v2044
  %v2506 = vpop.f32.mrb[0].mxu0
  %v2507 = vadd.f32 0.0, %v2506
  %v2508 = vpop.f32.mrb[0].mxu0
  %v2509 = vadd.f32 0.0, %v2508
  %v2510 = vpop.f32.mrb[0].mxu0
  %v2511 = vadd.f32 0.0, %v2510
  %v2512 = vpop.f32.mrb[0].mxu0
  %v2513 = vadd.f32 0.0, %v2512
  %2514 = vmatprep.mubr.bf16.mxu0 %v2078
  %2515 = vmatmul.mubr.bf16.gmra.mrb[0].mxu0 %v2046
  %v2516 = vpop.f32.mrb[0].mxu0
  %v2517 = vadd.f32 0.0, %v2516
  %v2518 = vpop.f32.mrb[0].mxu0
  %v2519 = vadd.f32 0.0, %v2518
  %v2520 = vpop.f32.mrb[0].mxu0
  %v2521 = vadd.f32 0.0, %v2520
  %v2522 = vpop.f32.mrb[0].mxu0
  %v2523 = vadd.f32 0.0, %v2522
  %2524 = vmatprep.mubr.bf16.mxu0 %v2081
  %2525 = vmatmul.mubr.bf16.gmra.mrb[0].mxu0 %v2048
  %v2526 = vpop.f32.mrb[0].mxu0
  %v2527 = vadd.f32 0.0, %v2526
  %v2528 = vpop.f32.mrb[0].mxu0
  %v2529 = vadd.f32 0.0, %v2528
  %v2530 = vpop.f32.mrb[0].mxu0
  %v2531 = vadd.f32 0.0, %v2530
  %v2532 = vpop.f32.mrb[0].mxu0
  %v2533 = vadd.f32 0.0, %v2532
  %2534 = vdwg.mxu0
  %2535 = vmatprep.subr.bf16.mxu0 %v1186
  %2536 = vmatpush1.bf16.msra.mxu0 %v1185
  %2537 = vmatprep.subr.bf16.mxu0 %v1211
  %2538 = vmatpush1.bf16.msra.mxu0 %v1210
  %2539 = vmatprep.subr.bf16.mxu0 %v1236
  %2540 = vmatpush1.bf16.msra.mxu0 %v1235
  %2541 = vmatprep.subr.bf16.mxu0 %v1261
  %2542 = vmatpush1.bf16.msra.mxu0 %v1260
  %2543 = vmatprep.subr.bf16.mxu0 %v224
  %2544 = vmatpush1.bf16.msra.mxu0 %v223
  %2545 = vmatprep.subr.bf16.mxu0 %v249
  %2546 = vmatpush1.bf16.msra.mxu0 %v248
  %2547 = vmatprep.subr.bf16.mxu0 %v274
  %2548 = vmatpush1.bf16.msra.mxu0 %v273
  %2549 = vmatprep.subr.bf16.mxu0 %v299
  %2550 = vmatpush1.bf16.msra.mxu0 %v298
  %2551 = vmatprep.subr.bf16.mxu0 %v1879
  %2552 = vmatpush1.bf16.msra.mxu0 %v1878
  %2553 = vmatprep.subr.bf16.mxu0 %v1904
  %2554 = vmatpush1.bf16.msra.mxu0 %v1903
  %2555 = vmatprep.subr.bf16.mxu0 %v1929
  %2556 = vmatpush1.bf16.msra.mxu0 %v1928
  %2557 = vmatprep.subr.bf16.mxu0 %v1954
  %2558 = vmatpush1.bf16.msra.mxu0 %v1953
  %2559 = vmatprep.subr.bf16.mxu0 0
  %2560 = vmatpush1.bf16.msra.mxu0 0
  %2561 = vmatprep.subr.bf16.mxu0 0
  %2562 = vmatpush1.bf16.msra.mxu0 0
  %2563 = vmatprep.subr.bf16.mxu0 0
  %2564 = vmatpush1.bf16.msra.mxu0 0
  %2565 = vmatprep.subr.bf16.mxu0 0
  %2566 = vmatpush1.bf16.msra.mxu0 0
  %2567 = vmatprep.mubr.bf16.mxu0 %v2060
  %2568 = vmatmul.mubr.bf16.gmra.mrb[0].mxu0 %v2034
  %v2569 = vpop.f32.mrb[0].mxu0
  %v2570 = vadd.f32 0.0, %v2569
  %v2571 = vpop.f32.mrb[0].mxu0
  %v2572 = vadd.f32 0.0, %v2571
  %v2573 = vpop.f32.mrb[0].mxu0
  %v2574 = vadd.f32 0.0, %v2573
  %v2575 = vpop.f32.mrb[0].mxu0
  %v2576 = vadd.f32 0.0, %v2575
  %2577 = vmatprep.mubr.bf16.mxu0 %v2063
  %2578 = vmatmul.mubr.bf16.gmra.mrb[0].mxu0 %v2036
  %v2579 = vpop.f32.mrb[0].mxu0
  %v2580 = vadd.f32 0.0, %v2579
  %v2581 = vpop.f32.mrb[0].mxu0
  %v2582 = vadd.f32 0.0, %v2581
  %v2583 = vpop.f32.mrb[0].mxu0
  %v2584 = vadd.f32 0.0, %v2583
  %v2585 = vpop.f32.mrb[0].mxu0
  %v2586 = vadd.f32 0.0, %v2585
  %2587 = vmatprep.mubr.bf16.mxu0 %v2066
  %2588 = vmatmul.mubr.bf16.gmra.mrb[0].mxu0 %v2038
  %v2589 = vpop.f32.mrb[0].mxu0
  %v2590 = vadd.f32 0.0, %v2589
  %v2591 = vpop.f32.mrb[0].mxu0
  %v2592 = vadd.f32 0.0, %v2591
  %v2593 = vpop.f32.mrb[0].mxu0
  %v2594 = vadd.f32 0.0, %v2593
  %v2595 = vpop.f32.mrb[0].mxu0
  %v2596 = vadd.f32 0.0, %v2595
  %2597 = vmatprep.mubr.bf16.mxu0 %v2069
  %2598 = vmatmul.mubr.bf16.gmra.mrb[0].mxu0 %v2040
  %v2599 = vpop.f32.mrb[0].mxu0
  %v2600 = vadd.f32 0.0, %v2599
  %v2601 = vpop.f32.mrb[0].mxu0
  %v2602 = vadd.f32 0.0, %v2601
  %v2603 = vpop.f32.mrb[0].mxu0
  %v2604 = vadd.f32 0.0, %v2603
  %v2605 = vpop.f32.mrb[0].mxu0
  %v2606 = vadd.f32 0.0, %v2605
  %2607 = vmatprep.mubr.bf16.mxu0 %v2072
  %2608 = vmatmul.mubr.bf16.gmra.mrb[0].mxu0 %v2042
  %v2609 = vpop.f32.mrb[0].mxu0
  %v2610 = vadd.f32 0.0, %v2609
  %v2611 = vpop.f32.mrb[0].mxu0
  %v2612 = vadd.f32 0.0, %v2611
  %v2613 = vpop.f32.mrb[0].mxu0
  %v2614 = vadd.f32 0.0, %v2613
  %v2615 = vpop.f32.mrb[0].mxu0
  %v2616 = vadd.f32 0.0, %v2615
  %2617 = vmatprep.mubr.bf16.mxu0 %v2075
  %2618 = vmatmul.mubr.bf16.gmra.mrb[0].mxu0 %v2044
  %v2619 = vpop.f32.mrb[0].mxu0
  %v2620 = vadd.f32 0.0, %v2619
  %v2621 = vpop.f32.mrb[0].mxu0
  %v2622 = vadd.f32 0.0, %v2621
  %v2623 = vpop.f32.mrb[0].mxu0
  %v2624 = vadd.f32 0.0, %v2623
  %v2625 = vpop.f32.mrb[0].mxu0
  %v2626 = vadd.f32 0.0, %v2625
  %2627 = vmatprep.mubr.bf16.mxu0 %v2078
  %2628 = vmatmul.mubr.bf16.gmra.mrb[0].mxu0 %v2046
  %v2629 = vpop.f32.mrb[0].mxu0
  %v2630 = vadd.f32 0.0, %v2629
  %v2631 = vpop.f32.mrb[0].mxu0
  %v2632 = vadd.f32 0.0, %v2631
  %v2633 = vpop.f32.mrb[0].mxu0
  %v2634 = vadd.f32 0.0, %v2633
  %v2635 = vpop.f32.mrb[0].mxu0
  %v2636 = vadd.f32 0.0, %v2635
  %2637 = vmatprep.mubr.bf16.mxu0 %v2081
  %2638 = vmatmul.mubr.bf16.gmra.mrb[0].mxu0 %v2048
  %v2639 = vpop.f32.mrb[0].mxu0
  %v2640 = vadd.f32 0.0, %v2639
  %v2641 = vpop.f32.mrb[0].mxu0
  %v2642 = vadd.f32 0.0, %v2641
  %v2643 = vpop.f32.mrb[0].mxu0
  %v2644 = vadd.f32 0.0, %v2643
  %v2645 = vpop.f32.mrb[0].mxu0
  %v2646 = vadd.f32 0.0, %v2645
  %2647 = vdwg.mxu0
  %2648 = vmatprep.subr.bf16.mxu0 %v1188
  %2649 = vmatpush1.bf16.msra.mxu0 %v1187
  %2650 = vmatprep.subr.bf16.mxu0 %v1213
  %2651 = vmatpush1.bf16.msra.mxu0 %v1212
  %2652 = vmatprep.subr.bf16.mxu0 %v1238
  %2653 = vmatpush1.bf16.msra.mxu0 %v1237
  %2654 = vmatprep.subr.bf16.mxu0 %v1263
  %2655 = vmatpush1.bf16.msra.mxu0 %v1262
  %2656 = vmatprep.subr.bf16.mxu0 %v226
  %2657 = vmatpush1.bf16.msra.mxu0 %v225
  %2658 = vmatprep.subr.bf16.mxu0 %v251
  %2659 = vmatpush1.bf16.msra.mxu0 %v250
  %2660 = vmatprep.subr.bf16.mxu0 %v276
  %2661 = vmatpush1.bf16.msra.mxu0 %v275
  %2662 = vmatprep.subr.bf16.mxu0 %v301
  %2663 = vmatpush1.bf16.msra.mxu0 %v300
  %2664 = vmatprep.subr.bf16.mxu0 %v1881
  %2665 = vmatpush1.bf16.msra.mxu0 %v1880
  %2666 = vmatprep.subr.bf16.mxu0 %v1906
  %2667 = vmatpush1.bf16.msra.mxu0 %v1905
  %2668 = vmatprep.subr.bf16.mxu0 %v1931
  %2669 = vmatpush1.bf16.msra.mxu0 %v1930
  %2670 = vmatprep.subr.bf16.mxu0 %v1956
  %2671 = vmatpush1.bf16.msra.mxu0 %v1955
  %2672 = vmatprep.subr.bf16.mxu0 0
  %2673 = vmatpush1.bf16.msra.mxu0 0
  %2674 = vmatprep.subr.bf16.mxu0 0
  %2675 = vmatpush1.bf16.msra.mxu0 0
  %2676 = vmatprep.subr.bf16.mxu0 0
  %2677 = vmatpush1.bf16.msra.mxu0 0
  %2678 = vmatprep.subr.bf16.mxu0 0
  %2679 = vmatpush1.bf16.msra.mxu0 0
  %2680 = vmatprep.mubr.bf16.mxu0 %v2060
  %2681 = vmatmul.mubr.bf16.gmra.mrb[0].mxu0 %v2034
  %v2682 = vpop.f32.mrb[0].mxu0
  %v2683 = vadd.f32 0.0, %v2682
  %v2684 = vpop.f32.mrb[0].mxu0
  %v2685 = vadd.f32 0.0, %v2684
  %v2686 = vpop.f32.mrb[0].mxu0
  %v2687 = vadd.f32 0.0, %v2686
  %v2688 = vpop.f32.mrb[0].mxu0
  %v2689 = vadd.f32 0.0, %v2688
  %2690 = vmatprep.mubr.bf16.mxu0 %v2063
  %2691 = vmatmul.mubr.bf16.gmra.mrb[0].mxu0 %v2036
  %v2692 = vpop.f32.mrb[0].mxu0
  %v2693 = vadd.f32 0.0, %v2692
  %v2694 = vpop.f32.mrb[0].mxu0
  %v2695 = vadd.f32 0.0, %v2694
  %v2696 = vpop.f32.mrb[0].mxu0
  %v2697 = vadd.f32 0.0, %v2696
  %v2698 = vpop.f32.mrb[0].mxu0
  %v2699 = vadd.f32 0.0, %v2698
  %2700 = vmatprep.mubr.bf16.mxu0 %v2066
  %2701 = vmatmul.mubr.bf16.gmra.mrb[0].mxu0 %v2038
  %v2702 = vpop.f32.mrb[0].mxu0
  %v2703 = vadd.f32 0.0, %v2702
  %v2704 = vpop.f32.mrb[0].mxu0
  %v2705 = vadd.f32 0.0, %v2704
  %v2706 = vpop.f32.mrb[0].mxu0
  %v2707 = vadd.f32 0.0, %v2706
  %v2708 = vpop.f32.mrb[0].mxu0
  %v2709 = vadd.f32 0.0, %v2708
  %2710 = vmatprep.mubr.bf16.mxu0 %v2069
  %2711 = vmatmul.mubr.bf16.gmra.mrb[0].mxu0 %v2040
  %v2712 = vpop.f32.mrb[0].mxu0
  %v2713 = vadd.f32 0.0, %v2712
  %v2714 = vpop.f32.mrb[0].mxu0
  %v2715 = vadd.f32 0.0, %v2714
  %v2716 = vpop.f32.mrb[0].mxu0
  %v2717 = vadd.f32 0.0, %v2716
  %v2718 = vpop.f32.mrb[0].mxu0
  %v2719 = vadd.f32 0.0, %v2718
  %2720 = vmatprep.mubr.bf16.mxu0 %v2072
  %2721 = vmatmul.mubr.bf16.gmra.mrb[0].mxu0 %v2042
  %v2722 = vpop.f32.mrb[0].mxu0
  %v2723 = vadd.f32 0.0, %v2722
  %v2724 = vpop.f32.mrb[0].mxu0
  %v2725 = vadd.f32 0.0, %v2724
  %v2726 = vpop.f32.mrb[0].mxu0
  %v2727 = vadd.f32 0.0, %v2726
  %v2728 = vpop.f32.mrb[0].mxu0
  %v2729 = vadd.f32 0.0, %v2728
  %2730 = vmatprep.mubr.bf16.mxu0 %v2075
  %2731 = vmatmul.mubr.bf16.gmra.mrb[0].mxu0 %v2044
  %v2732 = vpop.f32.mrb[0].mxu0
  %v2733 = vadd.f32 0.0, %v2732
  %v2734 = vpop.f32.mrb[0].mxu0
  %v2735 = vadd.f32 0.0, %v2734
  %v2736 = vpop.f32.mrb[0].mxu0
  %v2737 = vadd.f32 0.0, %v2736
  %v2738 = vpop.f32.mrb[0].mxu0
  %v2739 = vadd.f32 0.0, %v2738
  %2740 = vmatprep.mubr.bf16.mxu0 %v2078
  %2741 = vmatmul.mubr.bf16.gmra.mrb[0].mxu0 %v2046
  %v2742 = vpop.f32.mrb[0].mxu0
  %v2743 = vadd.f32 0.0, %v2742
  %v2744 = vpop.f32.mrb[0].mxu0
  %v2745 = vadd.f32 0.0, %v2744
  %v2746 = vpop.f32.mrb[0].mxu0
  %v2747 = vadd.f32 0.0, %v2746
  %v2748 = vpop.f32.mrb[0].mxu0
  %v2749 = vadd.f32 0.0, %v2748
  %2750 = vmatprep.mubr.bf16.mxu0 %v2081
  %2751 = vmatmul.mubr.bf16.gmra.mrb[0].mxu0 %v2048
  %v2752 = vpop.f32.mrb[0].mxu0
  %v2753 = vadd.f32 0.0, %v2752
  %v2754 = vpop.f32.mrb[0].mxu0
  %v2755 = vadd.f32 0.0, %v2754
  %v2756 = vpop.f32.mrb[0].mxu0
  %v2757 = vadd.f32 0.0, %v2756
  %v2758 = vpop.f32.mrb[0].mxu0
  %v2759 = vadd.f32 0.0, %v2758
  %2760 = vdwg.mxu0
  %2761 = vmatprep.subr.bf16.mxu0 %v1190
  %2762 = vmatpush1.bf16.msra.mxu0 %v1189
  %2763 = vmatprep.subr.bf16.mxu0 %v1215
  %2764 = vmatpush1.bf16.msra.mxu0 %v1214
  %2765 = vmatprep.subr.bf16.mxu0 %v1240
  %2766 = vmatpush1.bf16.msra.mxu0 %v1239
  %2767 = vmatprep.subr.bf16.mxu0 %v1265
  %2768 = vmatpush1.bf16.msra.mxu0 %v1264
  %2769 = vmatprep.subr.bf16.mxu0 %v228
  %2770 = vmatpush1.bf16.msra.mxu0 %v227
  %2771 = vmatprep.subr.bf16.mxu0 %v253
  %2772 = vmatpush1.bf16.msra.mxu0 %v252
  %2773 = vmatprep.subr.bf16.mxu0 %v278
  %2774 = vmatpush1.bf16.msra.mxu0 %v277
  %2775 = vmatprep.subr.bf16.mxu0 %v303
  %2776 = vmatpush1.bf16.msra.mxu0 %v302
  %2777 = vmatprep.subr.bf16.mxu0 %v1883
  %2778 = vmatpush1.bf16.msra.mxu0 %v1882
  %2779 = vmatprep.subr.bf16.mxu0 %v1908
  %2780 = vmatpush1.bf16.msra.mxu0 %v1907
  %2781 = vmatprep.subr.bf16.mxu0 %v1933
  %2782 = vmatpush1.bf16.msra.mxu0 %v1932
  %2783 = vmatprep.subr.bf16.mxu0 %v1958
  %2784 = vmatpush1.bf16.msra.mxu0 %v1957
  %2785 = vmatprep.subr.bf16.mxu0 0
  %2786 = vmatpush1.bf16.msra.mxu0 0
  %2787 = vmatprep.subr.bf16.mxu0 0
  %2788 = vmatpush1.bf16.msra.mxu0 0
  %2789 = vmatprep.subr.bf16.mxu0 0
  %2790 = vmatpush1.bf16.msra.mxu0 0
  %2791 = vmatprep.subr.bf16.mxu0 0
  %2792 = vmatpush1.bf16.msra.mxu0 0
  %2793 = vmatprep.mubr.bf16.mxu0 %v2060
  %2794 = vmatmul.mubr.bf16.gmra.mrb[0].mxu0 %v2034
  %v2795 = vpop.f32.mrb[0].mxu0
  %v2796 = vadd.f32 0.0, %v2795
  %v2797 = vpop.f32.mrb[0].mxu0
  %v2798 = vadd.f32 0.0, %v2797
  %v2799 = vpop.f32.mrb[0].mxu0
  %v2800 = vadd.f32 0.0, %v2799
  %v2801 = vpop.f32.mrb[0].mxu0
  %v2802 = vadd.f32 0.0, %v2801
  %2803 = vmatprep.mubr.bf16.mxu0 %v2063
  %2804 = vmatmul.mubr.bf16.gmra.mrb[0].mxu0 %v2036
  %v2805 = vpop.f32.mrb[0].mxu0
  %v2806 = vadd.f32 0.0, %v2805
  %v2807 = vpop.f32.mrb[0].mxu0
  %v2808 = vadd.f32 0.0, %v2807
  %v2809 = vpop.f32.mrb[0].mxu0
  %v2810 = vadd.f32 0.0, %v2809
  %v2811 = vpop.f32.mrb[0].mxu0
  %v2812 = vadd.f32 0.0, %v2811
  %2813 = vmatprep.mubr.bf16.mxu0 %v2066
  %2814 = vmatmul.mubr.bf16.gmra.mrb[0].mxu0 %v2038
  %v2815 = vpop.f32.mrb[0].mxu0
  %v2816 = vadd.f32 0.0, %v2815
  %v2817 = vpop.f32.mrb[0].mxu0
  %v2818 = vadd.f32 0.0, %v2817
  %v2819 = vpop.f32.mrb[0].mxu0
  %v2820 = vadd.f32 0.0, %v2819
  %v2821 = vpop.f32.mrb[0].mxu0
  %v2822 = vadd.f32 0.0, %v2821
  %2823 = vmatprep.mubr.bf16.mxu0 %v2069
  %2824 = vmatmul.mubr.bf16.gmra.mrb[0].mxu0 %v2040
  %v2825 = vpop.f32.mrb[0].mxu0
  %v2826 = vadd.f32 0.0, %v2825
  %v2827 = vpop.f32.mrb[0].mxu0
  %v2828 = vadd.f32 0.0, %v2827
  %v2829 = vpop.f32.mrb[0].mxu0
  %v2830 = vadd.f32 0.0, %v2829
  %v2831 = vpop.f32.mrb[0].mxu0
  %v2832 = vadd.f32 0.0, %v2831
  %2833 = vmatprep.mubr.bf16.mxu0 %v2072
  %2834 = vmatmul.mubr.bf16.gmra.mrb[0].mxu0 %v2042
  %v2835 = vpop.f32.mrb[0].mxu0
  %v2836 = vadd.f32 0.0, %v2835
  %v2837 = vpop.f32.mrb[0].mxu0
  %v2838 = vadd.f32 0.0, %v2837
  %v2839 = vpop.f32.mrb[0].mxu0
  %v2840 = vadd.f32 0.0, %v2839
  %v2841 = vpop.f32.mrb[0].mxu0
  %v2842 = vadd.f32 0.0, %v2841
  %2843 = vmatprep.mubr.bf16.mxu0 %v2075
  %2844 = vmatmul.mubr.bf16.gmra.mrb[0].mxu0 %v2044
  %v2845 = vpop.f32.mrb[0].mxu0
  %v2846 = vadd.f32 0.0, %v2845
  %v2847 = vpop.f32.mrb[0].mxu0
  %v2848 = vadd.f32 0.0, %v2847
  %v2849 = vpop.f32.mrb[0].mxu0
  %v2850 = vadd.f32 0.0, %v2849
  %v2851 = vpop.f32.mrb[0].mxu0
  %v2852 = vadd.f32 0.0, %v2851
  %2853 = vmatprep.mubr.bf16.mxu0 %v2078
  %2854 = vmatmul.mubr.bf16.gmra.mrb[0].mxu0 %v2046
  %v2855 = vpop.f32.mrb[0].mxu0
  %v2856 = vadd.f32 0.0, %v2855
  %v2857 = vpop.f32.mrb[0].mxu0
  %v2858 = vadd.f32 0.0, %v2857
  %v2859 = vpop.f32.mrb[0].mxu0
  %v2860 = vadd.f32 0.0, %v2859
  %v2861 = vpop.f32.mrb[0].mxu0
  %v2862 = vadd.f32 0.0, %v2861
  %2863 = vmatprep.mubr.bf16.mxu0 %v2081
  %2864 = vmatmul.mubr.bf16.gmra.mrb[0].mxu0 %v2048
  %v2865 = vpop.f32.mrb[0].mxu0
  %v2866 = vadd.f32 0.0, %v2865
  %v2867 = vpop.f32.mrb[0].mxu0
  %v2868 = vadd.f32 0.0, %v2867
  %v2869 = vpop.f32.mrb[0].mxu0
  %v2870 = vadd.f32 0.0, %v2869
  %v2871 = vpop.f32.mrb[0].mxu0
  %v2872 = vadd.f32 0.0, %v2871
  %2873 = vdwg.mxu0
  %2874 = vmatprep.subr.bf16.mxu0 %v1192
  %2875 = vmatpush1.bf16.msra.mxu0 %v1191
  %2876 = vmatprep.subr.bf16.mxu0 %v1217
  %2877 = vmatpush1.bf16.msra.mxu0 %v1216
  %2878 = vmatprep.subr.bf16.mxu0 %v1242
  %2879 = vmatpush1.bf16.msra.mxu0 %v1241
  %2880 = vmatprep.subr.bf16.mxu0 %v1267
  %2881 = vmatpush1.bf16.msra.mxu0 %v1266
  %2882 = vmatprep.subr.bf16.mxu0 %v230
  %2883 = vmatpush1.bf16.msra.mxu0 %v229
  %2884 = vmatprep.subr.bf16.mxu0 %v255
  %2885 = vmatpush1.bf16.msra.mxu0 %v254
  %2886 = vmatprep.subr.bf16.mxu0 %v280
  %2887 = vmatpush1.bf16.msra.mxu0 %v279
  %2888 = vmatprep.subr.bf16.mxu0 %v305
  %2889 = vmatpush1.bf16.msra.mxu0 %v304
  %2890 = vmatprep.subr.bf16.mxu0 %v1885
  %2891 = vmatpush1.bf16.msra.mxu0 %v1884
  %2892 = vmatprep.subr.bf16.mxu0 %v1910
  %2893 = vmatpush1.bf16.msra.mxu0 %v1909
  %2894 = vmatprep.subr.bf16.mxu0 %v1935
  %2895 = vmatpush1.bf16.msra.mxu0 %v1934
  %2896 = vmatprep.subr.bf16.mxu0 %v1960
  %2897 = vmatpush1.bf16.msra.mxu0 %v1959
  %2898 = vmatprep.subr.bf16.mxu0 0
  %2899 = vmatpush1.bf16.msra.mxu0 0
  %2900 = vmatprep.subr.bf16.mxu0 0
  %2901 = vmatpush1.bf16.msra.mxu0 0
  %2902 = vmatprep.subr.bf16.mxu0 0
  %2903 = vmatpush1.bf16.msra.mxu0 0
  %2904 = vmatprep.subr.bf16.mxu0 0
  %2905 = vmatpush1.bf16.msra.mxu0 0
  %2906 = vmatprep.mubr.bf16.mxu0 %v2060
  %2907 = vmatmul.mubr.bf16.gmra.mrb[0].mxu0 %v2034
  %v2908 = vpop.f32.mrb[0].mxu0
  %v2909 = vadd.f32 0.0, %v2908
  %v2910 = vpop.f32.mrb[0].mxu0
  %v2911 = vadd.f32 0.0, %v2910
  %v2912 = vpop.f32.mrb[0].mxu0
  %v2913 = vadd.f32 0.0, %v2912
  %v2914 = vpop.f32.mrb[0].mxu0
  %v2915 = vadd.f32 0.0, %v2914
  %2916 = vmatprep.mubr.bf16.mxu0 %v2063
  %2917 = vmatmul.mubr.bf16.gmra.mrb[0].mxu0 %v2036
  %v2918 = vpop.f32.mrb[0].mxu0
  %v2919 = vadd.f32 0.0, %v2918
  %v2920 = vpop.f32.mrb[0].mxu0
  %v2921 = vadd.f32 0.0, %v2920
  %v2922 = vpop.f32.mrb[0].mxu0
  %v2923 = vadd.f32 0.0, %v2922
  %v2924 = vpop.f32.mrb[0].mxu0
  %v2925 = vadd.f32 0.0, %v2924
  %2926 = vmatprep.mubr.bf16.mxu0 %v2066
  %2927 = vmatmul.mubr.bf16.gmra.mrb[0].mxu0 %v2038
  %v2928 = vpop.f32.mrb[0].mxu0
  %v2929 = vadd.f32 0.0, %v2928
  %v2930 = vpop.f32.mrb[0].mxu0
  %v2931 = vadd.f32 0.0, %v2930
  %v2932 = vpop.f32.mrb[0].mxu0
  %v2933 = vadd.f32 0.0, %v2932
  %v2934 = vpop.f32.mrb[0].mxu0
  %v2935 = vadd.f32 0.0, %v2934
  %2936 = vmatprep.mubr.bf16.mxu0 %v2069
  %2937 = vmatmul.mubr.bf16.gmra.mrb[0].mxu0 %v2040
  %v2938 = vpop.f32.mrb[0].mxu0
  %v2939 = vadd.f32 0.0, %v2938
  %v2940 = vpop.f32.mrb[0].mxu0
  %v2941 = vadd.f32 0.0, %v2940
  %v2942 = vpop.f32.mrb[0].mxu0
  %v2943 = vadd.f32 0.0, %v2942
  %v2944 = vpop.f32.mrb[0].mxu0
  %v2945 = vadd.f32 0.0, %v2944
  %2946 = vmatprep.mubr.bf16.mxu0 %v2072
  %2947 = vmatmul.mubr.bf16.gmra.mrb[0].mxu0 %v2042
  %v2948 = vpop.f32.mrb[0].mxu0
  %v2949 = vadd.f32 0.0, %v2948
  %v2950 = vpop.f32.mrb[0].mxu0
  %v2951 = vadd.f32 0.0, %v2950
  %v2952 = vpop.f32.mrb[0].mxu0
  %v2953 = vadd.f32 0.0, %v2952
  %v2954 = vpop.f32.mrb[0].mxu0
  %v2955 = vadd.f32 0.0, %v2954
  %2956 = vmatprep.mubr.bf16.mxu0 %v2075
  %2957 = vmatmul.mubr.bf16.gmra.mrb[0].mxu0 %v2044
  %v2958 = vpop.f32.mrb[0].mxu0
  %v2959 = vadd.f32 0.0, %v2958
  %v2960 = vpop.f32.mrb[0].mxu0
  %v2961 = vadd.f32 0.0, %v2960
  %v2962 = vpop.f32.mrb[0].mxu0
  %v2963 = vadd.f32 0.0, %v2962
  %v2964 = vpop.f32.mrb[0].mxu0
  %v2965 = vadd.f32 0.0, %v2964
  %2966 = vmatprep.mubr.bf16.mxu0 %v2078
  %2967 = vmatmul.mubr.bf16.gmra.mrb[0].mxu0 %v2046
  %v2968 = vpop.f32.mrb[0].mxu0
  %v2969 = vadd.f32 0.0, %v2968
  %v2970 = vpop.f32.mrb[0].mxu0
  %v2971 = vadd.f32 0.0, %v2970
  %v2972 = vpop.f32.mrb[0].mxu0
  %v2973 = vadd.f32 0.0, %v2972
  %v2974 = vpop.f32.mrb[0].mxu0
  %v2975 = vadd.f32 0.0, %v2974
  %2976 = vmatprep.mubr.bf16.mxu0 %v2081
  %2977 = vmatmul.mubr.bf16.gmra.mrb[0].mxu0 %v2048
  %v2978 = vpop.f32.mrb[0].mxu0
  %v2979 = vadd.f32 0.0, %v2978
  %v2980 = vpop.f32.mrb[0].mxu0
  %v2981 = vadd.f32 0.0, %v2980
  %v2982 = vpop.f32.mrb[0].mxu0
  %v2983 = vadd.f32 0.0, %v2982
  %v2984 = vpop.f32.mrb[0].mxu0
  %v2985 = vadd.f32 0.0, %v2984
  %2986 = vdwg.mxu0
  %2987 = vmatprep.subr.bf16.mxu0 %v1194
  %2988 = vmatpush1.bf16.msra.mxu0 %v1193
  %2989 = vmatprep.subr.bf16.mxu0 %v1219
  %2990 = vmatpush1.bf16.msra.mxu0 %v1218
  %2991 = vmatprep.subr.bf16.mxu0 %v1244
  %2992 = vmatpush1.bf16.msra.mxu0 %v1243
  %2993 = vmatprep.subr.bf16.mxu0 %v1269
  %2994 = vmatpush1.bf16.msra.mxu0 %v1268
  %2995 = vmatprep.subr.bf16.mxu0 %v232
  %2996 = vmatpush1.bf16.msra.mxu0 %v231
  %2997 = vmatprep.subr.bf16.mxu0 %v257
  %2998 = vmatpush1.bf16.msra.mxu0 %v256
  %2999 = vmatprep.subr.bf16.mxu0 %v282
  %3000 = vmatpush1.bf16.msra.mxu0 %v281
  %3001 = vmatprep.subr.bf16.mxu0 %v307
  %3002 = vmatpush1.bf16.msra.mxu0 %v306
  %3003 = vmatprep.subr.bf16.mxu0 %v1887
  %3004 = vmatpush1.bf16.msra.mxu0 %v1886
  %3005 = vmatprep.subr.bf16.mxu0 %v1912
  %3006 = vmatpush1.bf16.msra.mxu0 %v1911
  %3007 = vmatprep.subr.bf16.mxu0 %v1937
  %3008 = vmatpush1.bf16.msra.mxu0 %v1936
  %3009 = vmatprep.subr.bf16.mxu0 %v1962
  %3010 = vmatpush1.bf16.msra.mxu0 %v1961
  %3011 = vmatprep.subr.bf16.mxu0 0
  %3012 = vmatpush1.bf16.msra.mxu0 0
  %3013 = vmatprep.subr.bf16.mxu0 0
  %3014 = vmatpush1.bf16.msra.mxu0 0
  %3015 = vmatprep.subr.bf16.mxu0 0
  %3016 = vmatpush1.bf16.msra.mxu0 0
  %3017 = vmatprep.subr.bf16.mxu0 0
  %3018 = vmatpush1.bf16.msra.mxu0 0
  %3019 = vmatprep.mubr.bf16.mxu0 %v2060
  %3020 = vmatmul.mubr.bf16.gmra.mrb[0].mxu0 %v2034
  %v3021 = vpop.f32.mrb[0].mxu0
  %v3022 = vadd.f32 0.0, %v3021
  %v3023 = vpop.f32.mrb[0].mxu0
  %v3024 = vadd.f32 0.0, %v3023
  %v3025 = vpop.f32.mrb[0].mxu0
  %v3026 = vadd.f32 0.0, %v3025
  %v3027 = vpop.f32.mrb[0].mxu0
  %v3028 = vadd.f32 0.0, %v3027
  %3029 = vmatprep.mubr.bf16.mxu0 %v2063
  %3030 = vmatmul.mubr.bf16.gmra.mrb[0].mxu0 %v2036
  %v3031 = vpop.f32.mrb[0].mxu0
  %v3032 = vadd.f32 0.0, %v3031
  %v3033 = vpop.f32.mrb[0].mxu0
  %v3034 = vadd.f32 0.0, %v3033
  %v3035 = vpop.f32.mrb[0].mxu0
  %v3036 = vadd.f32 0.0, %v3035
  %v3037 = vpop.f32.mrb[0].mxu0
  %v3038 = vadd.f32 0.0, %v3037
  %3039 = vmatprep.mubr.bf16.mxu0 %v2066
  %3040 = vmatmul.mubr.bf16.gmra.mrb[0].mxu0 %v2038
  %v3041 = vpop.f32.mrb[0].mxu0
  %v3042 = vadd.f32 0.0, %v3041
  %v3043 = vpop.f32.mrb[0].mxu0
  %v3044 = vadd.f32 0.0, %v3043
  %v3045 = vpop.f32.mrb[0].mxu0
  %v3046 = vadd.f32 0.0, %v3045
  %v3047 = vpop.f32.mrb[0].mxu0
  %v3048 = vadd.f32 0.0, %v3047
  %3049 = vmatprep.mubr.bf16.mxu0 %v2069
  %3050 = vmatmul.mubr.bf16.gmra.mrb[0].mxu0 %v2040
  %v3051 = vpop.f32.mrb[0].mxu0
  %v3052 = vadd.f32 0.0, %v3051
  %v3053 = vpop.f32.mrb[0].mxu0
  %v3054 = vadd.f32 0.0, %v3053
  %v3055 = vpop.f32.mrb[0].mxu0
  %v3056 = vadd.f32 0.0, %v3055
  %v3057 = vpop.f32.mrb[0].mxu0
  %v3058 = vadd.f32 0.0, %v3057
  %3059 = vmatprep.mubr.bf16.mxu0 %v2072
  %3060 = vmatmul.mubr.bf16.gmra.mrb[0].mxu0 %v2042
  %v3061 = vpop.f32.mrb[0].mxu0
  %v3062 = vadd.f32 0.0, %v3061
  %v3063 = vpop.f32.mrb[0].mxu0
  %v3064 = vadd.f32 0.0, %v3063
  %v3065 = vpop.f32.mrb[0].mxu0
  %v3066 = vadd.f32 0.0, %v3065
  %v3067 = vpop.f32.mrb[0].mxu0
  %v3068 = vadd.f32 0.0, %v3067
  %3069 = vmatprep.mubr.bf16.mxu0 %v2075
  %3070 = vmatmul.mubr.bf16.gmra.mrb[0].mxu0 %v2044
  %v3071 = vpop.f32.mrb[0].mxu0
  %v3072 = vadd.f32 0.0, %v3071
  %v3073 = vpop.f32.mrb[0].mxu0
  %v3074 = vadd.f32 0.0, %v3073
  %v3075 = vpop.f32.mrb[0].mxu0
  %v3076 = vadd.f32 0.0, %v3075
  %v3077 = vpop.f32.mrb[0].mxu0
  %v3078 = vadd.f32 0.0, %v3077
  %3079 = vmatprep.mubr.bf16.mxu0 %v2078
  %3080 = vmatmul.mubr.bf16.gmra.mrb[0].mxu0 %v2046
  %v3081 = vpop.f32.mrb[0].mxu0
  %v3082 = vadd.f32 0.0, %v3081
  %v3083 = vpop.f32.mrb[0].mxu0
  %v3084 = vadd.f32 0.0, %v3083
  %v3085 = vpop.f32.mrb[0].mxu0
  %v3086 = vadd.f32 0.0, %v3085
  %v3087 = vpop.f32.mrb[0].mxu0
  %v3088 = vadd.f32 0.0, %v3087
  %3089 = vmatprep.mubr.bf16.mxu0 %v2081
  %3090 = vmatmul.mubr.bf16.gmra.mrb[0].mxu0 %v2048
  %v3091 = vpop.f32.mrb[0].mxu0
  %v3092 = vadd.f32 0.0, %v3091
  %v3093 = vpop.f32.mrb[0].mxu0
  %v3094 = vadd.f32 0.0, %v3093
  %v3095 = vpop.f32.mrb[0].mxu0
  %v3096 = vadd.f32 0.0, %v3095
  %v3097 = vpop.f32.mrb[0].mxu0
  %v3098 = vadd.f32 0.0, %v3097
  %3099 = vdwg.mxu0
  %3100 = vmatprep.subr.bf16.mxu0 %v1196
  %3101 = vmatpush1.bf16.msra.mxu0 %v1195
  %3102 = vmatprep.subr.bf16.mxu0 %v1221
  %3103 = vmatpush1.bf16.msra.mxu0 %v1220
  %3104 = vmatprep.subr.bf16.mxu0 %v1246
  %3105 = vmatpush1.bf16.msra.mxu0 %v1245
  %3106 = vmatprep.subr.bf16.mxu0 %v1271
  %3107 = vmatpush1.bf16.msra.mxu0 %v1270
  %3108 = vmatprep.subr.bf16.mxu0 %v234
  %3109 = vmatpush1.bf16.msra.mxu0 %v233
  %3110 = vmatprep.subr.bf16.mxu0 %v259
  %3111 = vmatpush1.bf16.msra.mxu0 %v258
  %3112 = vmatprep.subr.bf16.mxu0 %v284
  %3113 = vmatpush1.bf16.msra.mxu0 %v283
  %3114 = vmatprep.subr.bf16.mxu0 %v309
  %3115 = vmatpush1.bf16.msra.mxu0 %v308
  %3116 = vmatprep.subr.bf16.mxu0 %v1889
  %3117 = vmatpush1.bf16.msra.mxu0 %v1888
  %3118 = vmatprep.subr.bf16.mxu0 %v1914
  %3119 = vmatpush1.bf16.msra.mxu0 %v1913
  %3120 = vmatprep.subr.bf16.mxu0 %v1939
  %3121 = vmatpush1.bf16.msra.mxu0 %v1938
  %3122 = vmatprep.subr.bf16.mxu0 %v1964
  %3123 = vmatpush1.bf16.msra.mxu0 %v1963
  %3124 = vmatprep.subr.bf16.mxu0 0
  %3125 = vmatpush1.bf16.msra.mxu0 0
  %3126 = vmatprep.subr.bf16.mxu0 0
  %3127 = vmatpush1.bf16.msra.mxu0 0
  %3128 = vmatprep.subr.bf16.mxu0 0
  %3129 = vmatpush1.bf16.msra.mxu0 0
  %3130 = vmatprep.subr.bf16.mxu0 0
  %3131 = vmatpush1.bf16.msra.mxu0 0
  %3132 = vmatprep.mubr.bf16.mxu0 %v2060
  %3133 = vmatmul.mubr.bf16.gmra.mrb[0].mxu0 %v2034
  %v3134 = vpop.f32.mrb[0].mxu0
  %v3135 = vadd.f32 0.0, %v3134
  %v3136 = vpop.f32.mrb[0].mxu0
  %v3137 = vadd.f32 0.0, %v3136
  %v3138 = vpop.f32.mrb[0].mxu0
  %v3139 = vadd.f32 0.0, %v3138
  %v3140 = vpop.f32.mrb[0].mxu0
  %v3141 = vadd.f32 0.0, %v3140
  %3142 = vmatprep.mubr.bf16.mxu0 %v2063
  %3143 = vmatmul.mubr.bf16.gmra.mrb[0].mxu0 %v2036
  %v3144 = vpop.f32.mrb[0].mxu0
  %v3145 = vadd.f32 0.0, %v3144
  %v3146 = vpop.f32.mrb[0].mxu0
  %v3147 = vadd.f32 0.0, %v3146
  %v3148 = vpop.f32.mrb[0].mxu0
  %v3149 = vadd.f32 0.0, %v3148
  %v3150 = vpop.f32.mrb[0].mxu0
  %v3151 = vadd.f32 0.0, %v3150
  %3152 = vmatprep.mubr.bf16.mxu0 %v2066
  %3153 = vmatmul.mubr.bf16.gmra.mrb[0].mxu0 %v2038
  %v3154 = vpop.f32.mrb[0].mxu0
  %v3155 = vadd.f32 0.0, %v3154
  %v3156 = vpop.f32.mrb[0].mxu0
  %v3157 = vadd.f32 0.0, %v3156
  %v3158 = vpop.f32.mrb[0].mxu0
  %v3159 = vadd.f32 0.0, %v3158
  %v3160 = vpop.f32.mrb[0].mxu0
  %v3161 = vadd.f32 0.0, %v3160
  %3162 = vmatprep.mubr.bf16.mxu0 %v2069
  %3163 = vmatmul.mubr.bf16.gmra.mrb[0].mxu0 %v2040
  %v3164 = vpop.f32.mrb[0].mxu0
  %v3165 = vadd.f32 0.0, %v3164
  %v3166 = vpop.f32.mrb[0].mxu0
  %v3167 = vadd.f32 0.0, %v3166
  %v3168 = vpop.f32.mrb[0].mxu0
  %v3169 = vadd.f32 0.0, %v3168
  %v3170 = vpop.f32.mrb[0].mxu0
  %v3171 = vadd.f32 0.0, %v3170
  %3172 = vmatprep.mubr.bf16.mxu0 %v2072
  %3173 = vmatmul.mubr.bf16.gmra.mrb[0].mxu0 %v2042
  %v3174 = vpop.f32.mrb[0].mxu0
  %v3175 = vadd.f32 0.0, %v3174
  %v3176 = vpop.f32.mrb[0].mxu0
  %v3177 = vadd.f32 0.0, %v3176
  %v3178 = vpop.f32.mrb[0].mxu0
  %v3179 = vadd.f32 0.0, %v3178
  %v3180 = vpop.f32.mrb[0].mxu0
  %v3181 = vadd.f32 0.0, %v3180
  %3182 = vmatprep.mubr.bf16.mxu0 %v2075
  %3183 = vmatmul.mubr.bf16.gmra.mrb[0].mxu0 %v2044
  %v3184 = vpop.f32.mrb[0].mxu0
  %v3185 = vadd.f32 0.0, %v3184
  %v3186 = vpop.f32.mrb[0].mxu0
  %v3187 = vadd.f32 0.0, %v3186
  %v3188 = vpop.f32.mrb[0].mxu0
  %v3189 = vadd.f32 0.0, %v3188
  %v3190 = vpop.f32.mrb[0].mxu0
  %v3191 = vadd.f32 0.0, %v3190
  %3192 = vmatprep.mubr.bf16.mxu0 %v2078
  %3193 = vmatmul.mubr.bf16.gmra.mrb[0].mxu0 %v2046
  %v3194 = vpop.f32.mrb[0].mxu0
  %v3195 = vadd.f32 0.0, %v3194
  %v3196 = vpop.f32.mrb[0].mxu0
  %v3197 = vadd.f32 0.0, %v3196
  %v3198 = vpop.f32.mrb[0].mxu0
  %v3199 = vadd.f32 0.0, %v3198
  %v3200 = vpop.f32.mrb[0].mxu0
  %v3201 = vadd.f32 0.0, %v3200
  %3202 = vmatprep.mubr.bf16.mxu0 %v2081
  %3203 = vmatmul.mubr.bf16.gmra.mrb[0].mxu0 %v2048
  %v3204 = vpop.f32.mrb[0].mxu0
  %v3205 = vadd.f32 0.0, %v3204
  %v3206 = vpop.f32.mrb[0].mxu0
  %v3207 = vadd.f32 0.0, %v3206
  %v3208 = vpop.f32.mrb[0].mxu0
  %v3209 = vadd.f32 0.0, %v3208
  %v3210 = vpop.f32.mrb[0].mxu0
  %v3211 = vadd.f32 0.0, %v3210
  %3212 = vdwg.mxu0
  %3213 = vmatprep.subr.bf16.mxu0 %v1198
  %3214 = vmatpush1.bf16.msra.mxu0 %v1197
  %3215 = vmatprep.subr.bf16.mxu0 %v1223
  %3216 = vmatpush1.bf16.msra.mxu0 %v1222
  %3217 = vmatprep.subr.bf16.mxu0 %v1248
  %3218 = vmatpush1.bf16.msra.mxu0 %v1247
  %3219 = vmatprep.subr.bf16.mxu0 %v1273
  %3220 = vmatpush1.bf16.msra.mxu0 %v1272
  %3221 = vmatprep.subr.bf16.mxu0 %v236
  %3222 = vmatpush1.bf16.msra.mxu0 %v235
  %3223 = vmatprep.subr.bf16.mxu0 %v261
  %3224 = vmatpush1.bf16.msra.mxu0 %v260
  %3225 = vmatprep.subr.bf16.mxu0 %v286
  %3226 = vmatpush1.bf16.msra.mxu0 %v285
  %3227 = vmatprep.subr.bf16.mxu0 %v311
  %3228 = vmatpush1.bf16.msra.mxu0 %v310
  %3229 = vmatprep.subr.bf16.mxu0 %v1891
  %3230 = vmatpush1.bf16.msra.mxu0 %v1890
  %3231 = vmatprep.subr.bf16.mxu0 %v1916
  %3232 = vmatpush1.bf16.msra.mxu0 %v1915
  %3233 = vmatprep.subr.bf16.mxu0 %v1941
  %3234 = vmatpush1.bf16.msra.mxu0 %v1940
  %3235 = vmatprep.subr.bf16.mxu0 %v1966
  %3236 = vmatpush1.bf16.msra.mxu0 %v1965
  %3237 = vmatprep.subr.bf16.mxu0 0
  %3238 = vmatpush1.bf16.msra.mxu0 0
  %3239 = vmatprep.subr.bf16.mxu0 0
  %3240 = vmatpush1.bf16.msra.mxu0 0
  %3241 = vmatprep.subr.bf16.mxu0 0
  %3242 = vmatpush1.bf16.msra.mxu0 0
  %3243 = vmatprep.subr.bf16.mxu0 0
  %3244 = vmatpush1.bf16.msra.mxu0 0
  %3245 = vmatprep.mubr.bf16.mxu0 %v2060
  %3246 = vmatmul.mubr.bf16.gmra.mrb[0].mxu0 %v2034
  %v3247 = vpop.f32.mrb[0].mxu0
  %v3248 = vadd.f32 0.0, %v3247
  %v3249 = vpop.f32.mrb[0].mxu0
  %v3250 = vadd.f32 0.0, %v3249
  %v3251 = vpop.f32.mrb[0].mxu0
  %v3252 = vadd.f32 0.0, %v3251
  %v3253 = vpop.f32.mrb[0].mxu0
  %v3254 = vadd.f32 0.0, %v3253
  %3255 = vmatprep.mubr.bf16.mxu0 %v2063
  %3256 = vmatmul.mubr.bf16.gmra.mrb[0].mxu0 %v2036
  %v3257 = vpop.f32.mrb[0].mxu0
  %v3258 = vadd.f32 0.0, %v3257
  %v3259 = vpop.f32.mrb[0].mxu0
  %v3260 = vadd.f32 0.0, %v3259
  %v3261 = vpop.f32.mrb[0].mxu0
  %v3262 = vadd.f32 0.0, %v3261
  %v3263 = vpop.f32.mrb[0].mxu0
  %v3264 = vadd.f32 0.0, %v3263
  %3265 = vmatprep.mubr.bf16.mxu0 %v2066
  %3266 = vmatmul.mubr.bf16.gmra.mrb[0].mxu0 %v2038
  %v3267 = vpop.f32.mrb[0].mxu0
  %v3268 = vadd.f32 0.0, %v3267
  %v3269 = vpop.f32.mrb[0].mxu0
  %v3270 = vadd.f32 0.0, %v3269
  %v3271 = vpop.f32.mrb[0].mxu0
  %v3272 = vadd.f32 0.0, %v3271
  %v3273 = vpop.f32.mrb[0].mxu0
  %v3274 = vadd.f32 0.0, %v3273
  %3275 = vmatprep.mubr.bf16.mxu0 %v2069
  %3276 = vmatmul.mubr.bf16.gmra.mrb[0].mxu0 %v2040
  %v3277 = vpop.f32.mrb[0].mxu0
  %v3278 = vadd.f32 0.0, %v3277
  %v3279 = vpop.f32.mrb[0].mxu0
  %v3280 = vadd.f32 0.0, %v3279
  %v3281 = vpop.f32.mrb[0].mxu0
  %v3282 = vadd.f32 0.0, %v3281
  %v3283 = vpop.f32.mrb[0].mxu0
  %v3284 = vadd.f32 0.0, %v3283
  %3285 = vmatprep.mubr.bf16.mxu0 %v2072
  %3286 = vmatmul.mubr.bf16.gmra.mrb[0].mxu0 %v2042
  %v3287 = vpop.f32.mrb[0].mxu0
  %v3288 = vadd.f32 0.0, %v3287
  %v3289 = vpop.f32.mrb[0].mxu0
  %v3290 = vadd.f32 0.0, %v3289
  %v3291 = vpop.f32.mrb[0].mxu0
  %v3292 = vadd.f32 0.0, %v3291
  %v3293 = vpop.f32.mrb[0].mxu0
  %v3294 = vadd.f32 0.0, %v3293
  %3295 = vmatprep.mubr.bf16.mxu0 %v2075
  %3296 = vmatmul.mubr.bf16.gmra.mrb[0].mxu0 %v2044
  %v3297 = vpop.f32.mrb[0].mxu0
  %v3298 = vadd.f32 0.0, %v3297
  %v3299 = vpop.f32.mrb[0].mxu0
  %v3300 = vadd.f32 0.0, %v3299
  %v3301 = vpop.f32.mrb[0].mxu0
  %v3302 = vadd.f32 0.0, %v3301
  %v3303 = vpop.f32.mrb[0].mxu0
  %v3304 = vadd.f32 0.0, %v3303
  %3305 = vmatprep.mubr.bf16.mxu0 %v2078
  %3306 = vmatmul.mubr.bf16.gmra.mrb[0].mxu0 %v2046
  %v3307 = vpop.f32.mrb[0].mxu0
  %v3308 = vadd.f32 0.0, %v3307
  %v3309 = vpop.f32.mrb[0].mxu0
  %v3310 = vadd.f32 0.0, %v3309
  %v3311 = vpop.f32.mrb[0].mxu0
  %v3312 = vadd.f32 0.0, %v3311
  %v3313 = vpop.f32.mrb[0].mxu0
  %v3314 = vadd.f32 0.0, %v3313
  %3315 = vmatprep.mubr.bf16.mxu0 %v2081
  %3316 = vmatmul.mubr.bf16.gmra.mrb[0].mxu0 %v2048
  %v3317 = vpop.f32.mrb[0].mxu0
  %v3318 = vadd.f32 0.0, %v3317
  %v3319 = vpop.f32.mrb[0].mxu0
  %v3320 = vadd.f32 0.0, %v3319
  %v3321 = vpop.f32.mrb[0].mxu0
  %v3322 = vadd.f32 0.0, %v3321
  %v3323 = vpop.f32.mrb[0].mxu0
  %v3324 = vadd.f32 0.0, %v3323
  %3325 = vdwg.mxu0
  %3326 = vmatprep.subr.bf16.mxu0 %v1200
  %3327 = vmatpush1.bf16.msra.mxu0 %v1199
  %3328 = vmatprep.subr.bf16.mxu0 %v1225
  %3329 = vmatpush1.bf16.msra.mxu0 %v1224
  %3330 = vmatprep.subr.bf16.mxu0 %v1250
  %3331 = vmatpush1.bf16.msra.mxu0 %v1249
  %3332 = vmatprep.subr.bf16.mxu0 %v1275
  %3333 = vmatpush1.bf16.msra.mxu0 %v1274
  %3334 = vmatprep.subr.bf16.mxu0 %v238
  %3335 = vmatpush1.bf16.msra.mxu0 %v237
  %3336 = vmatprep.subr.bf16.mxu0 %v263
  %3337 = vmatpush1.bf16.msra.mxu0 %v262
  %3338 = vmatprep.subr.bf16.mxu0 %v288
  %3339 = vmatpush1.bf16.msra.mxu0 %v287
  %3340 = vmatprep.subr.bf16.mxu0 %v313
  %3341 = vmatpush1.bf16.msra.mxu0 %v312
  %3342 = vmatprep.subr.bf16.mxu0 %v1893
  %3343 = vmatpush1.bf16.msra.mxu0 %v1892
  %3344 = vmatprep.subr.bf16.mxu0 %v1918
  %3345 = vmatpush1.bf16.msra.mxu0 %v1917
  %3346 = vmatprep.subr.bf16.mxu0 %v1943
  %3347 = vmatpush1.bf16.msra.mxu0 %v1942
  %3348 = vmatprep.subr.bf16.mxu0 %v1968
  %3349 = vmatpush1.bf16.msra.mxu0 %v1967
  %3350 = vmatprep.subr.bf16.mxu0 0
  %3351 = vmatpush1.bf16.msra.mxu0 0
  %3352 = vmatprep.subr.bf16.mxu0 0
  %3353 = vmatpush1.bf16.msra.mxu0 0
  %3354 = vmatprep.subr.bf16.mxu0 0
  %3355 = vmatpush1.bf16.msra.mxu0 0
  %3356 = vmatprep.subr.bf16.mxu0 0
  %3357 = vmatpush1.bf16.msra.mxu0 0
  %3358 = vmatprep.mubr.bf16.mxu0 %v2060
  %3359 = vmatmul.mubr.bf16.gmra.mrb[0].mxu0 %v2034
  %v3360 = vpop.f32.mrb[0].mxu0
  %v3361 = vadd.f32 0.0, %v3360
  %v3362 = vpop.f32.mrb[0].mxu0
  %v3363 = vadd.f32 0.0, %v3362
  %v3364 = vpop.f32.mrb[0].mxu0
  %v3365 = vadd.f32 0.0, %v3364
  %v3366 = vpop.f32.mrb[0].mxu0
  %v3367 = vadd.f32 0.0, %v3366
  %3368 = vmatprep.mubr.bf16.mxu0 %v2063
  %3369 = vmatmul.mubr.bf16.gmra.mrb[0].mxu0 %v2036
  %v3370 = vpop.f32.mrb[0].mxu0
  %v3371 = vadd.f32 0.0, %v3370
  %v3372 = vpop.f32.mrb[0].mxu0
  %v3373 = vadd.f32 0.0, %v3372
  %v3374 = vpop.f32.mrb[0].mxu0
  %v3375 = vadd.f32 0.0, %v3374
  %v3376 = vpop.f32.mrb[0].mxu0
  %v3377 = vadd.f32 0.0, %v3376
  %3378 = vmatprep.mubr.bf16.mxu0 %v2066
  %3379 = vmatmul.mubr.bf16.gmra.mrb[0].mxu0 %v2038
  %v3380 = vpop.f32.mrb[0].mxu0
  %v3381 = vadd.f32 0.0, %v3380
  %v3382 = vpop.f32.mrb[0].mxu0
  %v3383 = vadd.f32 0.0, %v3382
  %v3384 = vpop.f32.mrb[0].mxu0
  %v3385 = vadd.f32 0.0, %v3384
  %v3386 = vpop.f32.mrb[0].mxu0
  %v3387 = vadd.f32 0.0, %v3386
  %3388 = vmatprep.mubr.bf16.mxu0 %v2069
  %3389 = vmatmul.mubr.bf16.gmra.mrb[0].mxu0 %v2040
  %v3390 = vpop.f32.mrb[0].mxu0
  %v3391 = vadd.f32 0.0, %v3390
  %v3392 = vpop.f32.mrb[0].mxu0
  %v3393 = vadd.f32 0.0, %v3392
  %v3394 = vpop.f32.mrb[0].mxu0
  %v3395 = vadd.f32 0.0, %v3394
  %v3396 = vpop.f32.mrb[0].mxu0
  %v3397 = vadd.f32 0.0, %v3396
  %3398 = vmatprep.mubr.bf16.mxu0 %v2072
  %3399 = vmatmul.mubr.bf16.gmra.mrb[0].mxu0 %v2042
  %v3400 = vpop.f32.mrb[0].mxu0
  %v3401 = vadd.f32 0.0, %v3400
  %v3402 = vpop.f32.mrb[0].mxu0
  %v3403 = vadd.f32 0.0, %v3402
  %v3404 = vpop.f32.mrb[0].mxu0
  %v3405 = vadd.f32 0.0, %v3404
  %v3406 = vpop.f32.mrb[0].mxu0
  %v3407 = vadd.f32 0.0, %v3406
  %3408 = vmatprep.mubr.bf16.mxu0 %v2075
  %3409 = vmatmul.mubr.bf16.gmra.mrb[0].mxu0 %v2044
  %v3410 = vpop.f32.mrb[0].mxu0
  %v3411 = vadd.f32 0.0, %v3410
  %v3412 = vpop.f32.mrb[0].mxu0
  %v3413 = vadd.f32 0.0, %v3412
  %v3414 = vpop.f32.mrb[0].mxu0
  %v3415 = vadd.f32 0.0, %v3414
  %v3416 = vpop.f32.mrb[0].mxu0
  %v3417 = vadd.f32 0.0, %v3416
  %3418 = vmatprep.mubr.bf16.mxu0 %v2078
  %3419 = vmatmul.mubr.bf16.gmra.mrb[0].mxu0 %v2046
  %v3420 = vpop.f32.mrb[0].mxu0
  %v3421 = vadd.f32 0.0, %v3420
  %v3422 = vpop.f32.mrb[0].mxu0
  %v3423 = vadd.f32 0.0, %v3422
  %v3424 = vpop.f32.mrb[0].mxu0
  %v3425 = vadd.f32 0.0, %v3424
  %v3426 = vpop.f32.mrb[0].mxu0
  %v3427 = vadd.f32 0.0, %v3426
  %3428 = vmatprep.mubr.bf16.mxu0 %v2081
  %3429 = vmatmul.mubr.bf16.gmra.mrb[0].mxu0 %v2048
  %v3430 = vpop.f32.mrb[0].mxu0
  %v3431 = vadd.f32 0.0, %v3430
  %v3432 = vpop.f32.mrb[0].mxu0
  %v3433 = vadd.f32 0.0, %v3432
  %v3434 = vpop.f32.mrb[0].mxu0
  %v3435 = vadd.f32 0.0, %v3434
  %v3436 = vpop.f32.mrb[0].mxu0
  %v3437 = vadd.f32 0.0, %v3436
  %3438 = vdwg.mxu0
  %3439 = vmatprep.subr.bf16.mxu0 0
  %3440 = vmatpush1.bf16.msra.mxu0 %v1201
  %3441 = vmatprep.subr.bf16.mxu0 0
  %3442 = vmatpush1.bf16.msra.mxu0 %v1226
  %3443 = vmatprep.subr.bf16.mxu0 0
  %3444 = vmatpush1.bf16.msra.mxu0 %v1251
  %3445 = vmatprep.subr.bf16.mxu0 0
  %3446 = vmatpush1.bf16.msra.mxu0 %v1276
  %3447 = vmatprep.subr.bf16.mxu0 0
  %3448 = vmatpush1.bf16.msra.mxu0 %v239
  %3449 = vmatprep.subr.bf16.mxu0 0
  %3450 = vmatpush1.bf16.msra.mxu0 %v264
  %3451 = vmatprep.subr.bf16.mxu0 0
  %3452 = vmatpush1.bf16.msra.mxu0 %v289
  %3453 = vmatprep.subr.bf16.mxu0 0
  %3454 = vmatpush1.bf16.msra.mxu0 %v314
  %3455 = vmatprep.subr.bf16.mxu0 0
  %3456 = vmatpush1.bf16.msra.mxu0 %v1894
  %3457 = vmatprep.subr.bf16.mxu0 0
  %3458 = vmatpush1.bf16.msra.mxu0 %v1919
  %3459 = vmatprep.subr.bf16.mxu0 0
  %3460 = vmatpush1.bf16.msra.mxu0 %v1944
  %3461 = vmatprep.subr.bf16.mxu0 0
  %3462 = vmatpush1.bf16.msra.mxu0 %v1969
  %3463 = vmatprep.subr.bf16.mxu0 0
  %3464 = vmatpush1.bf16.msra.mxu0 0
  %3465 = vmatprep.subr.bf16.mxu0 0
  %3466 = vmatpush1.bf16.msra.mxu0 0
  %3467 = vmatprep.subr.bf16.mxu0 0
  %3468 = vmatpush1.bf16.msra.mxu0 0
  %3469 = vmatprep.subr.bf16.mxu0 0
  %3470 = vmatpush1.bf16.msra.mxu0 0
  %3471 = vmatprep.mubr.bf16.mxu0 %v2060
  %3472 = vmatmul.mubr.bf16.gmra.mrb[0].mxu0 %v2034
  %v3473 = vpop.f32.mrb[0].mxu0
  %v3474 = vadd.f32 0.0, %v3473
  %v3475 = vpop.f32.mrb[0].mxu0
  %v3476 = vpop.f32.mrb[0].mxu0
  %v3477 = vadd.f32 0.0, %v3476
  %v3478 = vpop.f32.mrb[0].mxu0
  %3479 = vmatprep.mubr.bf16.mxu0 %v2063
  %3480 = vmatmul.mubr.bf16.gmra.mrb[0].mxu0 %v2036
  %v3481 = vpop.f32.mrb[0].mxu0
  %v3482 = vadd.f32 0.0, %v3481
  %v3483 = vpop.f32.mrb[0].mxu0
  %v3484 = vpop.f32.mrb[0].mxu0
  %v3485 = vadd.f32 0.0, %v3484
  %v3486 = vpop.f32.mrb[0].mxu0
  %3487 = vmatprep.mubr.bf16.mxu0 %v2066
  %3488 = vmatmul.mubr.bf16.gmra.mrb[0].mxu0 %v2038
  %v3489 = vpop.f32.mrb[0].mxu0
  %v3490 = vadd.f32 0.0, %v3489
  %v3491 = vpop.f32.mrb[0].mxu0
  %v3492 = vpop.f32.mrb[0].mxu0
  %v3493 = vadd.f32 0.0, %v3492
  %v3494 = vpop.f32.mrb[0].mxu0
  %3495 = vmatprep.mubr.bf16.mxu0 %v2069
  %3496 = vmatmul.mubr.bf16.gmra.mrb[0].mxu0 %v2040
  %v3497 = vpop.f32.mrb[0].mxu0
  %v3498 = vadd.f32 0.0, %v3497
  %v3499 = vpop.f32.mrb[0].mxu0
  %v3500 = vpop.f32.mrb[0].mxu0
  %v3501 = vadd.f32 0.0, %v3500
  %v3502 = vpop.f32.mrb[0].mxu0
  %3503 = vmatprep.mubr.bf16.mxu0 %v2072
  %3504 = vmatmul.mubr.bf16.gmra.mrb[0].mxu0 %v2042
  %v3505 = vpop.f32.mrb[0].mxu0
  %v3506 = vadd.f32 0.0, %v3505
  %v3507 = vpop.f32.mrb[0].mxu0
  %v3508 = vpop.f32.mrb[0].mxu0
  %v3509 = vadd.f32 0.0, %v3508
  %v3510 = vpop.f32.mrb[0].mxu0
  %3511 = vmatprep.mubr.bf16.mxu0 %v2075
  %3512 = vmatmul.mubr.bf16.gmra.mrb[0].mxu0 %v2044
  %v3513 = vpop.f32.mrb[0].mxu0
  %v3514 = vadd.f32 0.0, %v3513
  %v3515 = vpop.f32.mrb[0].mxu0
  %v3516 = vpop.f32.mrb[0].mxu0
  %v3517 = vadd.f32 0.0, %v3516
  %v3518 = vpop.f32.mrb[0].mxu0
  %3519 = vmatprep.mubr.bf16.mxu0 %v2078
  %3520 = vmatmul.mubr.bf16.gmra.mrb[0].mxu0 %v2046
  %v3521 = vpop.f32.mrb[0].mxu0
  %v3522 = vadd.f32 0.0, %v3521
  %v3523 = vpop.f32.mrb[0].mxu0
  %v3524 = vpop.f32.mrb[0].mxu0
  %v3525 = vadd.f32 0.0, %v3524
  %v3526 = vpop.f32.mrb[0].mxu0
  %3527 = vmatprep.mubr.bf16.mxu0 %v2081
  %3528 = vmatmul.mubr.bf16.gmra.mrb[0].mxu0 %v2048
  %v3529 = vpop.f32.mrb[0].mxu0
  %v3530 = vadd.f32 0.0, %v3529
  %v3531 = vpop.f32.mrb[0].mxu0
  %v3532 = vpop.f32.mrb[0].mxu0
  %v3533 = vadd.f32 0.0, %v3532
  %v3534 = vpop.f32.mrb[0].mxu0
  %3535 = vdwg.mxu0
  %3552 = vrot.lane.b32.xlu0 %v3403, 56
  %v3553 = vpop.permute.xlu0 %3552
  %3554 = vrot.lane.b32.xlu0 %v3506, 56
  %v3555 = vpop.permute.xlu0 %3554
  %3556 = vrot.lane.b32.xlu0 %v3407, 56
  %v3557 = vpop.permute.xlu0 %3556
  %3558 = vrot.lane.b32.xlu0 %v3509, 56
  %v3559 = vpop.permute.xlu0 %3558
  %3560 = vrot.lane.b32.xlu0 %v3413, 56
  %v3561 = vpop.permute.xlu0 %3560
  %3562 = vrot.lane.b32.xlu0 %v3514, 56
  %v3563 = vpop.permute.xlu0 %3562
  %3564 = vrot.lane.b32.xlu0 %v3417, 56
  %v3565 = vpop.permute.xlu0 %3564
  %3566 = vrot.lane.b32.xlu0 %v3517, 56
  %v3567 = vpop.permute.xlu0 %3566
  %3568 = vrot.lane.b32.xlu0 %v3423, 56
  %v3569 = vpop.permute.xlu0 %3568
  %3570 = vrot.lane.b32.xlu0 %v3522, 56
  %v3571 = vpop.permute.xlu0 %3570
  %3572 = vrot.lane.b32.xlu0 %v3427, 56
  %v3573 = vpop.permute.xlu0 %3572
  %3574 = vrot.lane.b32.xlu0 %v3525, 56
  %v3575 = vpop.permute.xlu0 %3574
  %3576 = vrot.lane.b32.xlu0 %v3433, 56
  %v3577 = vpop.permute.xlu0 %3576
  %3578 = vrot.lane.b32.xlu0 %v3530, 56
  %v3579 = vpop.permute.xlu0 %3578
  %3580 = vrot.lane.b32.xlu0 %v3437, 56
  %v3581 = vpop.permute.xlu0 %3580
  %3582 = vrot.lane.b32.xlu0 %v3533, 56
  %v3583 = vpop.permute.xlu0 %3582
  %vm3584 = vcmask 457728
  %v3585 = vsel %vm3584, %v3553, %v3555
  %v3586 = vsel %vm3584, %v3557, %v3559
  %v3587 = vsel %vm3584, %v3561, %v3563
  %v3588 = vsel %vm3584, %v3565, %v3567
  %v3589 = vsel %vm3584, %v3569, %v3571
  %v3590 = vsel %vm3584, %v3573, %v3575
  %v3591 = vsel %vm3584, %v3577, %v3579
  %v3592 = vsel %vm3584, %v3581, %v3583
  %v3601 = vadd.f32 %v3474, %v3585
  %v3602 = vadd.f32 %v3477, %v3586
  %v3603 = vadd.f32 %v3482, %v3587
  %v3604 = vadd.f32 %v3485, %v3588
  %v3605 = vadd.f32 %v3490, %v3589
  %v3606 = vadd.f32 %v3493, %v3590
  %v3607 = vadd.f32 %v3498, %v3591
  %v3608 = vadd.f32 %v3501, %v3592
  %3617 = vrot.lane.b32.xlu0 %v3601, 120
  %v3618 = vpop.permute.xlu0 %3617
  %3619 = vrot.lane.b32.xlu0 %v3602, 120
  %v3620 = vpop.permute.xlu0 %3619
  %3621 = vrot.lane.b32.xlu0 %v3603, 120
  %v3622 = vpop.permute.xlu0 %3621
  %3623 = vrot.lane.b32.xlu0 %v3604, 120
  %v3624 = vpop.permute.xlu0 %3623
  %3625 = vrot.lane.b32.xlu0 %v3605, 120
  %v3626 = vpop.permute.xlu0 %3625
  %3627 = vrot.lane.b32.xlu0 %v3606, 120
  %v3628 = vpop.permute.xlu0 %3627
  %3629 = vrot.lane.b32.xlu0 %v3607, 120
  %v3630 = vpop.permute.xlu0 %3629
  %3631 = vrot.lane.b32.xlu0 %v3608, 120
  %v3632 = vpop.permute.xlu0 %3631
  %3641 = vst.msk [vmem:[%s3] sm:$0xff] %vm3584, %v3618
  %3642 = vst.msk [vmem:[%s3 + $0xc8] sm:$0xff] %vm3584, %v3620
  %3643 = vst.msk [vmem:[%s3 + $0x190] sm:$0xff] %vm3584, %v3622
  %3644 = vst.msk [vmem:[%s3 + $0x258] sm:$0xff] %vm3584, %v3624
  %3645 = vst.msk [vmem:[%s3 + $0x320] sm:$0xff] %vm3584, %v3626
  %3646 = vst.msk [vmem:[%s3 + $0x3e8] sm:$0xff] %vm3584, %v3628
  %3647 = vst.msk [vmem:[%s3 + $0x4b0] sm:$0xff] %vm3584, %v3630
  %3648 = vst.msk [vmem:[%s3 + $0x578] sm:$0xff] %vm3584, %v3632
  %3649 = vrot.lane.b32.xlu0 %v3506, 120
  %v3650 = vpop.permute.xlu0 %3649
  %3651 = vrot.lane.b32.xlu0 %v3509, 120
  %v3652 = vpop.permute.xlu0 %3651
  %3653 = vrot.lane.b32.xlu0 %v3514, 120
  %v3654 = vpop.permute.xlu0 %3653
  %3655 = vrot.lane.b32.xlu0 %v3517, 120
  %v3656 = vpop.permute.xlu0 %3655
  %3657 = vrot.lane.b32.xlu0 %v3522, 120
  %v3658 = vpop.permute.xlu0 %3657
  %3659 = vrot.lane.b32.xlu0 %v3525, 120
  %v3660 = vpop.permute.xlu0 %3659
  %3661 = vrot.lane.b32.xlu0 %v3530, 120
  %v3662 = vpop.permute.xlu0 %3661
  %3663 = vrot.lane.b32.xlu0 %v3533, 120
  %v3664 = vpop.permute.xlu0 %3663
  %v3673 = vadd.f32 %v2118, %v3650
  %v3674 = vadd.f32 %v2122, %v3652
  %v3675 = vadd.f32 %v2128, %v3654
  %v3676 = vadd.f32 %v2132, %v3656
  %v3677 = vadd.f32 %v2138, %v3658
  %v3678 = vadd.f32 %v2142, %v3660
  %v3679 = vadd.f32 %v2148, %v3662
  %v3680 = vadd.f32 %v2152, %v3664
  %3689 = vrot.lane.b32.xlu0 %v3673, 56
  %v3690 = vpop.permute.xlu0 %3689
  %3691 = vrot.lane.b32.xlu0 %v3674, 56
  %v3692 = vpop.permute.xlu0 %3691
  %3693 = vrot.lane.b32.xlu0 %v3675, 56
  %v3694 = vpop.permute.xlu0 %3693
  %3695 = vrot.lane.b32.xlu0 %v3676, 56
  %v3696 = vpop.permute.xlu0 %3695
  %3697 = vrot.lane.b32.xlu0 %v3677, 56
  %v3698 = vpop.permute.xlu0 %3697
  %3699 = vrot.lane.b32.xlu0 %v3678, 56
  %v3700 = vpop.permute.xlu0 %3699
  %3701 = vrot.lane.b32.xlu0 %v3679, 56
  %v3702 = vpop.permute.xlu0 %3701
  %3703 = vrot.lane.b32.xlu0 %v3680, 56
  %v3704 = vpop.permute.xlu0 %3703
  %vm3713 = vcmask 916928
  %3714 = vst.msk [vmem:[%s3] sm:$0xff] %vm3713, %v3690
  %3715 = vst.msk [vmem:[%s3 + $0xc8] sm:$0xff] %vm3713, %v3692
  %3716 = vst.msk [vmem:[%s3 + $0x190] sm:$0xff] %vm3713, %v3694
  %3717 = vst.msk [vmem:[%s3 + $0x258] sm:$0xff] %vm3713, %v3696
  %3718 = vst.msk [vmem:[%s3 + $0x320] sm:$0xff] %vm3713, %v3698
  %3719 = vst.msk [vmem:[%s3 + $0x3e8] sm:$0xff] %vm3713, %v3700
  %3720 = vst.msk [vmem:[%s3 + $0x4b0] sm:$0xff] %vm3713, %v3702
  %3721 = vst.msk [vmem:[%s3 + $0x578] sm:$0xff] %vm3713, %v3704
  %3906 = vrot.lane.b32.xlu0 %v2158, 56
  %v3907 = vpop.permute.xlu0 %3906
  %3908 = vrot.lane.b32.xlu0 %v2160, 56
  %v3909 = vpop.permute.xlu0 %3908
  %3910 = vrot.lane.b32.xlu0 %v2271, 56
  %v3911 = vpop.permute.xlu0 %3910
  %3912 = vrot.lane.b32.xlu0 %v2273, 56
  %v3913 = vpop.permute.xlu0 %3912
  %3914 = vrot.lane.b32.xlu0 %v2384, 56
  %v3915 = vpop.permute.xlu0 %3914
  %3916 = vrot.lane.b32.xlu0 %v2386, 56
  %v3917 = vpop.permute.xlu0 %3916
  %3918 = vrot.lane.b32.xlu0 %v2497, 56
  %v3919 = vpop.permute.xlu0 %3918
  %3920 = vrot.lane.b32.xlu0 %v2499, 56
  %v3921 = vpop.permute.xlu0 %3920
  %3922 = vrot.lane.b32.xlu0 %v2610, 56
  %v3923 = vpop.permute.xlu0 %3922
  %3924 = vrot.lane.b32.xlu0 %v2612, 56
  %v3925 = vpop.permute.xlu0 %3924
  %3926 = vrot.lane.b32.xlu0 %v2723, 56
  %v3927 = vpop.permute.xlu0 %3926
  %3928 = vrot.lane.b32.xlu0 %v2725, 56
  %v3929 = vpop.permute.xlu0 %3928
  %3930 = vrot.lane.b32.xlu0 %v2836, 56
  %v3931 = vpop.permute.xlu0 %3930
  %3932 = vrot.lane.b32.xlu0 %v2838, 56
  %v3933 = vpop.permute.xlu0 %3932
  %3934 = vrot.lane.b32.xlu0 %v2949, 56
  %v3935 = vpop.permute.xlu0 %3934
  %3936 = vrot.lane.b32.xlu0 %v2951, 56
  %v3937 = vpop.permute.xlu0 %3936
  %3938 = vrot.lane.b32.xlu0 %v3062, 56
  %v3939 = vpop.permute.xlu0 %3938
  %3940 = vrot.lane.b32.xlu0 %v3064, 56
  %v3941 = vpop.permute.xlu0 %3940
  %3942 = vrot.lane.b32.xlu0 %v3175, 56
  %v3943 = vpop.permute.xlu0 %3942
  %3944 = vrot.lane.b32.xlu0 %v3177, 56
  %v3945 = vpop.permute.xlu0 %3944
  %3946 = vrot.lane.b32.xlu0 %v3288, 56
  %v3947 = vpop.permute.xlu0 %3946
  %3948 = vrot.lane.b32.xlu0 %v3290, 56
  %v3949 = vpop.permute.xlu0 %3948
  %3950 = vrot.lane.b32.xlu0 %v3401, 56
  %v3951 = vpop.permute.xlu0 %3950
  %3952 = vrot.lane.b32.xlu0 %v2162, 56
  %v3953 = vpop.permute.xlu0 %3952
  %3954 = vrot.lane.b32.xlu0 %v2164, 56
  %v3955 = vpop.permute.xlu0 %3954
  %3956 = vrot.lane.b32.xlu0 %v2275, 56
  %v3957 = vpop.permute.xlu0 %3956
  %3958 = vrot.lane.b32.xlu0 %v2277, 56
  %v3959 = vpop.permute.xlu0 %3958
  %3960 = vrot.lane.b32.xlu0 %v2388, 56
  %v3961 = vpop.permute.xlu0 %3960
  %3962 = vrot.lane.b32.xlu0 %v2390, 56
  %v3963 = vpop.permute.xlu0 %3962
  %3964 = vrot.lane.b32.xlu0 %v2501, 56
  %v3965 = vpop.permute.xlu0 %3964
  %3966 = vrot.lane.b32.xlu0 %v2503, 56
  %v3967 = vpop.permute.xlu0 %3966
  %3968 = vrot.lane.b32.xlu0 %v2614, 56
  %v3969 = vpop.permute.xlu0 %3968
  %3970 = vrot.lane.b32.xlu0 %v2616, 56
  %v3971 = vpop.permute.xlu0 %3970
  %3972 = vrot.lane.b32.xlu0 %v2727, 56
  %v3973 = vpop.permute.xlu0 %3972
  %3974 = vrot.lane.b32.xlu0 %v2729, 56
  %v3975 = vpop.permute.xlu0 %3974
  %3976 = vrot.lane.b32.xlu0 %v2840, 56
  %v3977 = vpop.permute.xlu0 %3976
  %3978 = vrot.lane.b32.xlu0 %v2842, 56
  %v3979 = vpop.permute.xlu0 %3978
  %3980 = vrot.lane.b32.xlu0 %v2953, 56
  %v3981 = vpop.permute.xlu0 %3980
  %3982 = vrot.lane.b32.xlu0 %v2955, 56
  %v3983 = vpop.permute.xlu0 %3982
  %3984 = vrot.lane.b32.xlu0 %v3066, 56
  %v3985 = vpop.permute.xlu0 %3984
  %3986 = vrot.lane.b32.xlu0 %v3068, 56
  %v3987 = vpop.permute.xlu0 %3986
  %3988 = vrot.lane.b32.xlu0 %v3179, 56
  %v3989 = vpop.permute.xlu0 %3988
  %3990 = vrot.lane.b32.xlu0 %v3181, 56
  %v3991 = vpop.permute.xlu0 %3990
  %3992 = vrot.lane.b32.xlu0 %v3292, 56
  %v3993 = vpop.permute.xlu0 %3992
  %3994 = vrot.lane.b32.xlu0 %v3294, 56
  %v3995 = vpop.permute.xlu0 %3994
  %3996 = vrot.lane.b32.xlu0 %v3405, 56
  %v3997 = vpop.permute.xlu0 %3996
  %3998 = vrot.lane.b32.xlu0 %v2168, 56
  %v3999 = vpop.permute.xlu0 %3998
  %4000 = vrot.lane.b32.xlu0 %v2170, 56
  %v4001 = vpop.permute.xlu0 %4000
  %4002 = vrot.lane.b32.xlu0 %v2281, 56
  %v4003 = vpop.permute.xlu0 %4002
  %4004 = vrot.lane.b32.xlu0 %v2283, 56
  %v4005 = vpop.permute.xlu0 %4004
  %4006 = vrot.lane.b32.xlu0 %v2394, 56
  %v4007 = vpop.permute.xlu0 %4006
  %4008 = vrot.lane.b32.xlu0 %v2396, 56
  %v4009 = vpop.permute.xlu0 %4008
  %4010 = vrot.lane.b32.xlu0 %v2507, 56
  %v4011 = vpop.permute.xlu0 %4010
  %4012 = vrot.lane.b32.xlu0 %v2509, 56
  %v4013 = vpop.permute.xlu0 %4012
  %4014 = vrot.lane.b32.xlu0 %v2620, 56
  %v4015 = vpop.permute.xlu0 %4014
  %4016 = vrot.lane.b32.xlu0 %v2622, 56
  %v4017 = vpop.permute.xlu0 %4016
  %4018 = vrot.lane.b32.xlu0 %v2733, 56
  %v4019 = vpop.permute.xlu0 %4018
  %4020 = vrot.lane.b32.xlu0 %v2735, 56
  %v4021 = vpop.permute.xlu0 %4020
  %4022 = vrot.lane.b32.xlu0 %v2846, 56
  %v4023 = vpop.permute.xlu0 %4022
  %4024 = vrot.lane.b32.xlu0 %v2848, 56
  %v4025 = vpop.permute.xlu0 %4024
  %4026 = vrot.lane.b32.xlu0 %v2959, 56
  %v4027 = vpop.permute.xlu0 %4026
  %4028 = vrot.lane.b32.xlu0 %v2961, 56
  %v4029 = vpop.permute.xlu0 %4028
  %4030 = vrot.lane.b32.xlu0 %v3072, 56
  %v4031 = vpop.permute.xlu0 %4030
  %4032 = vrot.lane.b32.xlu0 %v3074, 56
  %v4033 = vpop.permute.xlu0 %4032
  %4034 = vrot.lane.b32.xlu0 %v3185, 56
  %v4035 = vpop.permute.xlu0 %4034
  %4036 = vrot.lane.b32.xlu0 %v3187, 56
  %v4037 = vpop.permute.xlu0 %4036
  %4038 = vrot.lane.b32.xlu0 %v3298, 56
  %v4039 = vpop.permute.xlu0 %4038
  %4040 = vrot.lane.b32.xlu0 %v3300, 56
  %v4041 = vpop.permute.xlu0 %4040
  %4042 = vrot.lane.b32.xlu0 %v3411, 56
  %v4043 = vpop.permute.xlu0 %4042
  %4044 = vrot.lane.b32.xlu0 %v2172, 56
  %v4045 = vpop.permute.xlu0 %4044
  %4046 = vrot.lane.b32.xlu0 %v2174, 56
  %v4047 = vpop.permute.xlu0 %4046
  %4048 = vrot.lane.b32.xlu0 %v2285, 56
  %v4049 = vpop.permute.xlu0 %4048
  %4050 = vrot.lane.b32.xlu0 %v2287, 56
  %v4051 = vpop.permute.xlu0 %4050
  %4052 = vrot.lane.b32.xlu0 %v2398, 56
  %v4053 = vpop.permute.xlu0 %4052
  %4054 = vrot.lane.b32.xlu0 %v2400, 56
  %v4055 = vpop.permute.xlu0 %4054
  %4056 = vrot.lane.b32.xlu0 %v2511, 56
  %v4057 = vpop.permute.xlu0 %4056
  %4058 = vrot.lane.b32.xlu0 %v2513, 56
  %v4059 = vpop.permute.xlu0 %4058
  %4060 = vrot.lane.b32.xlu0 %v2624, 56
  %v4061 = vpop.permute.xlu0 %4060
  %4062 = vrot.lane.b32.xlu0 %v2626, 56
  %v4063 = vpop.permute.xlu0 %4062
  %4064 = vrot.lane.b32.xlu0 %v2737, 56
  %v4065 = vpop.permute.xlu0 %4064
  %4066 = vrot.lane.b32.xlu0 %v2739, 56
  %v4067 = vpop.permute.xlu0 %4066
  %4068 = vrot.lane.b32.xlu0 %v2850, 56
  %v4069 = vpop.permute.xlu0 %4068
  %4070 = vrot.lane.b32.xlu0 %v2852, 56
  %v4071 = vpop.permute.xlu0 %4070
  %4072 = vrot.lane.b32.xlu0 %v2963, 56
  %v4073 = vpop.permute.xlu0 %4072
  %4074 = vrot.lane.b32.xlu0 %v2965, 56
  %v4075 = vpop.permute.xlu0 %4074
  %4076 = vrot.lane.b32.xlu0 %v3076, 56
  %v4077 = vpop.permute.xlu0 %4076
  %4078 = vrot.lane.b32.xlu0 %v3078, 56
  %v4079 = vpop.permute.xlu0 %4078
  %4080 = vrot.lane.b32.xlu0 %v3189, 56
  %v4081 = vpop.permute.xlu0 %4080
  %4082 = vrot.lane.b32.xlu0 %v3191, 56
  %v4083 = vpop.permute.xlu0 %4082
  %4084 = vrot.lane.b32.xlu0 %v3302, 56
  %v4085 = vpop.permute.xlu0 %4084
  %4086 = vrot.lane.b32.xlu0 %v3304, 56
  %v4087 = vpop.permute.xlu0 %4086
  %4088 = vrot.lane.b32.xlu0 %v3415, 56
  %v4089 = vpop.permute.xlu0 %4088
  %4090 = vrot.lane.b32.xlu0 %v2178, 56
  %v4091 = vpop.permute.xlu0 %4090
  %4092 = vrot.lane.b32.xlu0 %v2180, 56
  %v4093 = vpop.permute.xlu0 %4092
  %4094 = vrot.lane.b32.xlu0 %v2291, 56
  %v4095 = vpop.permute.xlu0 %4094
  %4096 = vrot.lane.b32.xlu0 %v2293, 56
  %v4097 = vpop.permute.xlu0 %4096
  %4098 = vrot.lane.b32.xlu0 %v2404, 56
  %v4099 = vpop.permute.xlu0 %4098
  %4100 = vrot.lane.b32.xlu0 %v2406, 56
  %v4101 = vpop.permute.xlu0 %4100
  %4102 = vrot.lane.b32.xlu0 %v2517, 56
  %v4103 = vpop.permute.xlu0 %4102
  %4104 = vrot.lane.b32.xlu0 %v2519, 56
  %v4105 = vpop.permute.xlu0 %4104
  %4106 = vrot.lane.b32.xlu0 %v2630, 56
  %v4107 = vpop.permute.xlu0 %4106
  %4108 = vrot.lane.b32.xlu0 %v2632, 56
  %v4109 = vpop.permute.xlu0 %4108
  %4110 = vrot.lane.b32.xlu0 %v2743, 56
  %v4111 = vpop.permute.xlu0 %4110
  %4112 = vrot.lane.b32.xlu0 %v2745, 56
  %v4113 = vpop.permute.xlu0 %4112
  %4114 = vrot.lane.b32.xlu0 %v2856, 56
  %v4115 = vpop.permute.xlu0 %4114
  %4116 = vrot.lane.b32.xlu0 %v2858, 56
  %v4117 = vpop.permute.xlu0 %4116
  %4118 = vrot.lane.b32.xlu0 %v2969, 56
  %v4119 = vpop.permute.xlu0 %4118
  %4120 = vrot.lane.b32.xlu0 %v2971, 56
  %v4121 = vpop.permute.xlu0 %4120
  %4122 = vrot.lane.b32.xlu0 %v3082, 56
  %v4123 = vpop.permute.xlu0 %4122
  %4124 = vrot.lane.b32.xlu0 %v3084, 56
  %v4125 = vpop.permute.xlu0 %4124
  %4126 = vrot.lane.b32.xlu0 %v3195, 56
  %v4127 = vpop.permute.xlu0 %4126
  %4128 = vrot.lane.b32.xlu0 %v3197, 56
  %v4129 = vpop.permute.xlu0 %4128
  %4130 = vrot.lane.b32.xlu0 %v3308, 56
  %v4131 = vpop.permute.xlu0 %4130
  %4132 = vrot.lane.b32.xlu0 %v3310, 56
  %v4133 = vpop.permute.xlu0 %4132
  %4134 = vrot.lane.b32.xlu0 %v3421, 56
  %v4135 = vpop.permute.xlu0 %4134
  %4136 = vrot.lane.b32.xlu0 %v2182, 56
  %v4137 = vpop.permute.xlu0 %4136
  %4138 = vrot.lane.b32.xlu0 %v2184, 56
  %v4139 = vpop.permute.xlu0 %4138
  %4140 = vrot.lane.b32.xlu0 %v2295, 56
  %v4141 = vpop.permute.xlu0 %4140
  %4142 = vrot.lane.b32.xlu0 %v2297, 56
  %v4143 = vpop.permute.xlu0 %4142
  %4144 = vrot.lane.b32.xlu0 %v2408, 56
  %v4145 = vpop.permute.xlu0 %4144
  %4146 = vrot.lane.b32.xlu0 %v2410, 56
  %v4147 = vpop.permute.xlu0 %4146
  %4148 = vrot.lane.b32.xlu0 %v2521, 56
  %v4149 = vpop.permute.xlu0 %4148
  %4150 = vrot.lane.b32.xlu0 %v2523, 56
  %v4151 = vpop.permute.xlu0 %4150
  %4152 = vrot.lane.b32.xlu0 %v2634, 56
  %v4153 = vpop.permute.xlu0 %4152
  %4154 = vrot.lane.b32.xlu0 %v2636, 56
  %v4155 = vpop.permute.xlu0 %4154
  %4156 = vrot.lane.b32.xlu0 %v2747, 56
  %v4157 = vpop.permute.xlu0 %4156
  %4158 = vrot.lane.b32.xlu0 %v2749, 56
  %v4159 = vpop.permute.xlu0 %4158
  %4160 = vrot.lane.b32.xlu0 %v2860, 56
  %v4161 = vpop.permute.xlu0 %4160
  %4162 = vrot.lane.b32.xlu0 %v2862, 56
  %v4163 = vpop.permute.xlu0 %4162
  %4164 = vrot.lane.b32.xlu0 %v2973, 56
  %v4165 = vpop.permute.xlu0 %4164
  %4166 = vrot.lane.b32.xlu0 %v2975, 56
  %v4167 = vpop.permute.xlu0 %4166
  %4168 = vrot.lane.b32.xlu0 %v3086, 56
  %v4169 = vpop.permute.xlu0 %4168
  %4170 = vrot.lane.b32.xlu0 %v3088, 56
  %v4171 = vpop.permute.xlu0 %4170
  %4172 = vrot.lane.b32.xlu0 %v3199, 56
  %v4173 = vpop.permute.xlu0 %4172
  %4174 = vrot.lane.b32.xlu0 %v3201, 56
  %v4175 = vpop.permute.xlu0 %4174
  %4176 = vrot.lane.b32.xlu0 %v3312, 56
  %v4177 = vpop.permute.xlu0 %4176
  %4178 = vrot.lane.b32.xlu0 %v3314, 56
  %v4179 = vpop.permute.xlu0 %4178
  %4180 = vrot.lane.b32.xlu0 %v3425, 56
  %v4181 = vpop.permute.xlu0 %4180
  %4182 = vrot.lane.b32.xlu0 %v2188, 56
  %v4183 = vpop.permute.xlu0 %4182
  %4184 = vrot.lane.b32.xlu0 %v2190, 56
  %v4185 = vpop.permute.xlu0 %4184
  %4186 = vrot.lane.b32.xlu0 %v2301, 56
  %v4187 = vpop.permute.xlu0 %4186
  %4188 = vrot.lane.b32.xlu0 %v2303, 56
  %v4189 = vpop.permute.xlu0 %4188
  %4190 = vrot.lane.b32.xlu0 %v2414, 56
  %v4191 = vpop.permute.xlu0 %4190
  %4192 = vrot.lane.b32.xlu0 %v2416, 56
  %v4193 = vpop.permute.xlu0 %4192
  %4194 = vrot.lane.b32.xlu0 %v2527, 56
  %v4195 = vpop.permute.xlu0 %4194
  %4196 = vrot.lane.b32.xlu0 %v2529, 56
  %v4197 = vpop.permute.xlu0 %4196
  %4198 = vrot.lane.b32.xlu0 %v2640, 56
  %v4199 = vpop.permute.xlu0 %4198
  %4200 = vrot.lane.b32.xlu0 %v2642, 56
  %v4201 = vpop.permute.xlu0 %4200
  %4202 = vrot.lane.b32.xlu0 %v2753, 56
  %v4203 = vpop.permute.xlu0 %4202
  %4204 = vrot.lane.b32.xlu0 %v2755, 56
  %v4205 = vpop.permute.xlu0 %4204
  %4206 = vrot.lane.b32.xlu0 %v2866, 56
  %v4207 = vpop.permute.xlu0 %4206
  %4208 = vrot.lane.b32.xlu0 %v2868, 56
  %v4209 = vpop.permute.xlu0 %4208
  %4210 = vrot.lane.b32.xlu0 %v2979, 56
  %v4211 = vpop.permute.xlu0 %4210
  %4212 = vrot.lane.b32.xlu0 %v2981, 56
  %v4213 = vpop.permute.xlu0 %4212
  %4214 = vrot.lane.b32.xlu0 %v3092, 56
  %v4215 = vpop.permute.xlu0 %4214
  %4216 = vrot.lane.b32.xlu0 %v3094, 56
  %v4217 = vpop.permute.xlu0 %4216
  %4218 = vrot.lane.b32.xlu0 %v3205, 56
  %v4219 = vpop.permute.xlu0 %4218
  %4220 = vrot.lane.b32.xlu0 %v3207, 56
  %v4221 = vpop.permute.xlu0 %4220
  %4222 = vrot.lane.b32.xlu0 %v3318, 56
  %v4223 = vpop.permute.xlu0 %4222
  %4224 = vrot.lane.b32.xlu0 %v3320, 56
  %v4225 = vpop.permute.xlu0 %4224
  %4226 = vrot.lane.b32.xlu0 %v3431, 56
  %v4227 = vpop.permute.xlu0 %4226
  %4228 = vrot.lane.b32.xlu0 %v2192, 56
  %v4229 = vpop.permute.xlu0 %4228
  %4230 = vrot.lane.b32.xlu0 %v2194, 56
  %v4231 = vpop.permute.xlu0 %4230
  %4232 = vrot.lane.b32.xlu0 %v2305, 56
  %v4233 = vpop.permute.xlu0 %4232
  %4234 = vrot.lane.b32.xlu0 %v2307, 56
  %v4235 = vpop.permute.xlu0 %4234
  %4236 = vrot.lane.b32.xlu0 %v2418, 56
  %v4237 = vpop.permute.xlu0 %4236
  %4238 = vrot.lane.b32.xlu0 %v2420, 56
  %v4239 = vpop.permute.xlu0 %4238
  %4240 = vrot.lane.b32.xlu0 %v2531, 56
  %v4241 = vpop.permute.xlu0 %4240
  %4242 = vrot.lane.b32.xlu0 %v2533, 56
  %v4243 = vpop.permute.xlu0 %4242
  %4244 = vrot.lane.b32.xlu0 %v2644, 56
  %v4245 = vpop.permute.xlu0 %4244
  %4246 = vrot.lane.b32.xlu0 %v2646, 56
  %v4247 = vpop.permute.xlu0 %4246
  %4248 = vrot.lane.b32.xlu0 %v2757, 56
  %v4249 = vpop.permute.xlu0 %4248
  %4250 = vrot.lane.b32.xlu0 %v2759, 56
  %v4251 = vpop.permute.xlu0 %4250
  %4252 = vrot.lane.b32.xlu0 %v2870, 56
  %v4253 = vpop.permute.xlu0 %4252
  %4254 = vrot.lane.b32.xlu0 %v2872, 56
  %v4255 = vpop.permute.xlu0 %4254
  %4256 = vrot.lane.b32.xlu0 %v2983, 56
  %v4257 = vpop.permute.xlu0 %4256
  %4258 = vrot.lane.b32.xlu0 %v2985, 56
  %v4259 = vpop.permute.xlu0 %4258
  %4260 = vrot.lane.b32.xlu0 %v3096, 56
  %v4261 = vpop.permute.xlu0 %4260
  %4262 = vrot.lane.b32.xlu0 %v3098, 56
  %v4263 = vpop.permute.xlu0 %4262
  %4264 = vrot.lane.b32.xlu0 %v3209, 56
  %v4265 = vpop.permute.xlu0 %4264
  %4266 = vrot.lane.b32.xlu0 %v3211, 56
  %v4267 = vpop.permute.xlu0 %4266
  %4268 = vrot.lane.b32.xlu0 %v3322, 56
  %v4269 = vpop.permute.xlu0 %4268
  %4270 = vrot.lane.b32.xlu0 %v3324, 56
  %v4271 = vpop.permute.xlu0 %4270
  %4272 = vrot.lane.b32.xlu0 %v3435, 56
  %v4273 = vpop.permute.xlu0 %4272
  %v4274 = vsel %vm3584, %v3907, %v3909
  %v4275 = vsel %vm3584, %v3909, %v3911
  %v4276 = vsel %vm3584, %v3911, %v3913
  %v4277 = vsel %vm3584, %v3913, %v3915
  %v4278 = vsel %vm3584, %v3915, %v3917
  %v4279 = vsel %vm3584, %v3917, %v3919
  %v4280 = vsel %vm3584, %v3919, %v3921
  %v4281 = vsel %vm3584, %v3921, %v3923
  %v4282 = vsel %vm3584, %v3923, %v3925
  %v4283 = vsel %vm3584, %v3925, %v3927
  %v4284 = vsel %vm3584, %v3927, %v3929
  %v4285 = vsel %vm3584, %v3929, %v3931
  %v4286 = vsel %vm3584, %v3931, %v3933
  %v4287 = vsel %vm3584, %v3933, %v3935
  %v4288 = vsel %vm3584, %v3935, %v3937
  %v4289 = vsel %vm3584, %v3937, %v3939
  %v4290 = vsel %vm3584, %v3939, %v3941
  %v4291 = vsel %vm3584, %v3941, %v3943
  %v4292 = vsel %vm3584, %v3943, %v3945
  %v4293 = vsel %vm3584, %v3945, %v3947
  %v4294 = vsel %vm3584, %v3947, %v3949
  %v4295 = vsel %vm3584, %v3949, %v3951
  %v4296 = vsel %vm3584, %v3951, %v3553
  %v4297 = vsel %vm3584, %v3953, %v3955
  %v4298 = vsel %vm3584, %v3955, %v3957
  %v4299 = vsel %vm3584, %v3957, %v3959
  %v4300 = vsel %vm3584, %v3959, %v3961
  %v4301 = vsel %vm3584, %v3961, %v3963
  %v4302 = vsel %vm3584, %v3963, %v3965
  %v4303 = vsel %vm3584, %v3965, %v3967
  %v4304 = vsel %vm3584, %v3967, %v3969
  %v4305 = vsel %vm3584, %v3969, %v3971
  %v4306 = vsel %vm3584, %v3971, %v3973
  %v4307 = vsel %vm3584, %v3973, %v3975
  %v4308 = vsel %vm3584, %v3975, %v3977
  %v4309 = vsel %vm3584, %v3977, %v3979
  %v4310 = vsel %vm3584, %v3979, %v3981
  %v4311 = vsel %vm3584, %v3981, %v3983
  %v4312 = vsel %vm3584, %v3983, %v3985
  %v4313 = vsel %vm3584, %v3985, %v3987
  %v4314 = vsel %vm3584, %v3987, %v3989
  %v4315 = vsel %vm3584, %v3989, %v3991
  %v4316 = vsel %vm3584, %v3991, %v3993
  %v4317 = vsel %vm3584, %v3993, %v3995
  %v4318 = vsel %vm3584, %v3995, %v3997
  %v4319 = vsel %vm3584, %v3997, %v3557
  %v4320 = vsel %vm3584, %v3999, %v4001
  %v4321 = vsel %vm3584, %v4001, %v4003
  %v4322 = vsel %vm3584, %v4003, %v4005
  %v4323 = vsel %vm3584, %v4005, %v4007
  %v4324 = vsel %vm3584, %v4007, %v4009
  %v4325 = vsel %vm3584, %v4009, %v4011
  %v4326 = vsel %vm3584, %v4011, %v4013
  %v4327 = vsel %vm3584, %v4013, %v4015
  %v4328 = vsel %vm3584, %v4015, %v4017
  %v4329 = vsel %vm3584, %v4017, %v4019
  %v4330 = vsel %vm3584, %v4019, %v4021
  %v4331 = vsel %vm3584, %v4021, %v4023
  %v4332 = vsel %vm3584, %v4023, %v4025
  %v4333 = vsel %vm3584, %v4025, %v4027
  %v4334 = vsel %vm3584, %v4027, %v4029
  %v4335 = vsel %vm3584, %v4029, %v4031
  %v4336 = vsel %vm3584, %v4031, %v4033
  %v4337 = vsel %vm3584, %v4033, %v4035
  %v4338 = vsel %vm3584, %v4035, %v4037
  %v4339 = vsel %vm3584, %v4037, %v4039
  %v4340 = vsel %vm3584, %v4039, %v4041
  %v4341 = vsel %vm3584, %v4041, %v4043
  %v4342 = vsel %vm3584, %v4043, %v3561
  %v4343 = vsel %vm3584, %v4045, %v4047
  %v4344 = vsel %vm3584, %v4047, %v4049
  %v4345 = vsel %vm3584, %v4049, %v4051
  %v4346 = vsel %vm3584, %v4051, %v4053
  %v4347 = vsel %vm3584, %v4053, %v4055
  %v4348 = vsel %vm3584, %v4055, %v4057
  %v4349 = vsel %vm3584, %v4057, %v4059
  %v4350 = vsel %vm3584, %v4059, %v4061
  %v4351 = vsel %vm3584, %v4061, %v4063
  %v4352 = vsel %vm3584, %v4063, %v4065
  %v4353 = vsel %vm3584, %v4065, %v4067
  %v4354 = vsel %vm3584, %v4067, %v4069
  %v4355 = vsel %vm3584, %v4069, %v4071
  %v4356 = vsel %vm3584, %v4071, %v4073
  %v4357 = vsel %vm3584, %v4073, %v4075
  %v4358 = vsel %vm3584, %v4075, %v4077
  %v4359 = vsel %vm3584, %v4077, %v4079
  %v4360 = vsel %vm3584, %v4079, %v4081
  %v4361 = vsel %vm3584, %v4081, %v4083
  %v4362 = vsel %vm3584, %v4083, %v4085
  %v4363 = vsel %vm3584, %v4085, %v4087
  %v4364 = vsel %vm3584, %v4087, %v4089
  %v4365 = vsel %vm3584, %v4089, %v3565
  %v4366 = vsel %vm3584, %v4091, %v4093
  %v4367 = vsel %vm3584, %v4093, %v4095
  %v4368 = vsel %vm3584, %v4095, %v4097
  %v4369 = vsel %vm3584, %v4097, %v4099
  %v4370 = vsel %vm3584, %v4099, %v4101
  %v4371 = vsel %vm3584, %v4101, %v4103
  %v4372 = vsel %vm3584, %v4103, %v4105
  %v4373 = vsel %vm3584, %v4105, %v4107
  %v4374 = vsel %vm3584, %v4107, %v4109
  %v4375 = vsel %vm3584, %v4109, %v4111
  %v4376 = vsel %vm3584, %v4111, %v4113
  %v4377 = vsel %vm3584, %v4113, %v4115
  %v4378 = vsel %vm3584, %v4115, %v4117
  %v4379 = vsel %vm3584, %v4117, %v4119
  %v4380 = vsel %vm3584, %v4119, %v4121
  %v4381 = vsel %vm3584, %v4121, %v4123
  %v4382 = vsel %vm3584, %v4123, %v4125
  %v4383 = vsel %vm3584, %v4125, %v4127
  %v4384 = vsel %vm3584, %v4127, %v4129
  %v4385 = vsel %vm3584, %v4129, %v4131
  %v4386 = vsel %vm3584, %v4131, %v4133
  %v4387 = vsel %vm3584, %v4133, %v4135
  %v4388 = vsel %vm3584, %v4135, %v3569
  %v4389 = vsel %vm3584, %v4137, %v4139
  %v4390 = vsel %vm3584, %v4139, %v4141
  %v4391 = vsel %vm3584, %v4141, %v4143
  %v4392 = vsel %vm3584, %v4143, %v4145
  %v4393 = vsel %vm3584, %v4145, %v4147
  %v4394 = vsel %vm3584, %v4147, %v4149
  %v4395 = vsel %vm3584, %v4149, %v4151
  %v4396 = vsel %vm3584, %v4151, %v4153
  %v4397 = vsel %vm3584, %v4153, %v4155
  %v4398 = vsel %vm3584, %v4155, %v4157
  %v4399 = vsel %vm3584, %v4157, %v4159
  %v4400 = vsel %vm3584, %v4159, %v4161
  %v4401 = vsel %vm3584, %v4161, %v4163
  %v4402 = vsel %vm3584, %v4163, %v4165
  %v4403 = vsel %vm3584, %v4165, %v4167
  %v4404 = vsel %vm3584, %v4167, %v4169
  %v4405 = vsel %vm3584, %v4169, %v4171
  %v4406 = vsel %vm3584, %v4171, %v4173
  %v4407 = vsel %vm3584, %v4173, %v4175
  %v4408 = vsel %vm3584, %v4175, %v4177
  %v4409 = vsel %vm3584, %v4177, %v4179
  %v4410 = vsel %vm3584, %v4179, %v4181
  %v4411 = vsel %vm3584, %v4181, %v3573
  %v4412 = vsel %vm3584, %v4183, %v4185
  %v4413 = vsel %vm3584, %v4185, %v4187
  %v4414 = vsel %vm3584, %v4187, %v4189
  %v4415 = vsel %vm3584, %v4189, %v4191
  %v4416 = vsel %vm3584, %v4191, %v4193
  %v4417 = vsel %vm3584, %v4193, %v4195
  %v4418 = vsel %vm3584, %v4195, %v4197
  %v4419 = vsel %vm3584, %v4197, %v4199
  %v4420 = vsel %vm3584, %v4199, %v4201
  %v4421 = vsel %vm3584, %v4201, %v4203
  %v4422 = vsel %vm3584, %v4203, %v4205
  %v4423 = vsel %vm3584, %v4205, %v4207
  %v4424 = vsel %vm3584, %v4207, %v4209
  %v4425 = vsel %vm3584, %v4209, %v4211
  %v4426 = vsel %vm3584, %v4211, %v4213
  %v4427 = vsel %vm3584, %v4213, %v4215
  %v4428 = vsel %vm3584, %v4215, %v4217
  %v4429 = vsel %vm3584, %v4217, %v4219
  %v4430 = vsel %vm3584, %v4219, %v4221
  %v4431 = vsel %vm3584, %v4221, %v4223
  %v4432 = vsel %vm3584, %v4223, %v4225
  %v4433 = vsel %vm3584, %v4225, %v4227
  %v4434 = vsel %vm3584, %v4227, %v3577
  %v4435 = vsel %vm3584, %v4229, %v4231
  %v4436 = vsel %vm3584, %v4231, %v4233
  %v4437 = vsel %vm3584, %v4233, %v4235
  %v4438 = vsel %vm3584, %v4235, %v4237
  %v4439 = vsel %vm3584, %v4237, %v4239
  %v4440 = vsel %vm3584, %v4239, %v4241
  %v4441 = vsel %vm3584, %v4241, %v4243
  %v4442 = vsel %vm3584, %v4243, %v4245
  %v4443 = vsel %vm3584, %v4245, %v4247
  %v4444 = vsel %vm3584, %v4247, %v4249
  %v4445 = vsel %vm3584, %v4249, %v4251
  %v4446 = vsel %vm3584, %v4251, %v4253
  %v4447 = vsel %vm3584, %v4253, %v4255
  %v4448 = vsel %vm3584, %v4255, %v4257
  %v4449 = vsel %vm3584, %v4257, %v4259
  %v4450 = vsel %vm3584, %v4259, %v4261
  %v4451 = vsel %vm3584, %v4261, %v4263
  %v4452 = vsel %vm3584, %v4263, %v4265
  %v4453 = vsel %vm3584, %v4265, %v4267
  %v4454 = vsel %vm3584, %v4267, %v4269
  %v4455 = vsel %vm3584, %v4269, %v4271
  %v4456 = vsel %vm3584, %v4271, %v4273
  %v4457 = vsel %vm3584, %v4273, %v3581
  %v4658 = vadd.f32 %v2118, %v3907
  %v4659 = vadd.f32 %v2120, %v4274
  %v4660 = vadd.f32 %v2231, %v4275
  %v4661 = vadd.f32 %v2233, %v4276
  %v4662 = vadd.f32 %v2344, %v4277
  %v4663 = vadd.f32 %v2346, %v4278
  %v4664 = vadd.f32 %v2457, %v4279
  %v4665 = vadd.f32 %v2459, %v4280
  %v4666 = vadd.f32 %v2570, %v4281
  %v4667 = vadd.f32 %v2572, %v4282
  %v4668 = vadd.f32 %v2683, %v4283
  %v4669 = vadd.f32 %v2685, %v4284
  %v4670 = vadd.f32 %v2796, %v4285
  %v4671 = vadd.f32 %v2798, %v4286
  %v4672 = vadd.f32 %v2909, %v4287
  %v4673 = vadd.f32 %v2911, %v4288
  %v4674 = vadd.f32 %v3022, %v4289
  %v4675 = vadd.f32 %v3024, %v4290
  %v4676 = vadd.f32 %v3135, %v4291
  %v4677 = vadd.f32 %v3137, %v4292
  %v4678 = vadd.f32 %v3248, %v4293
  %v4679 = vadd.f32 %v3250, %v4294
  %v4680 = vadd.f32 %v3361, %v4295
  %v4681 = vadd.f32 %v3363, %v4296
  %v4682 = vadd.f32 %v3474, %v3553
  %v4683 = vadd.f32 %v2122, %v3953
  %v4684 = vadd.f32 %v2124, %v4297
  %v4685 = vadd.f32 %v2235, %v4298
  %v4686 = vadd.f32 %v2237, %v4299
  %v4687 = vadd.f32 %v2348, %v4300
  %v4688 = vadd.f32 %v2350, %v4301
  %v4689 = vadd.f32 %v2461, %v4302
  %v4690 = vadd.f32 %v2463, %v4303
  %v4691 = vadd.f32 %v2574, %v4304
  %v4692 = vadd.f32 %v2576, %v4305
  %v4693 = vadd.f32 %v2687, %v4306
  %v4694 = vadd.f32 %v2689, %v4307
  %v4695 = vadd.f32 %v2800, %v4308
  %v4696 = vadd.f32 %v2802, %v4309
  %v4697 = vadd.f32 %v2913, %v4310
  %v4698 = vadd.f32 %v2915, %v4311
  %v4699 = vadd.f32 %v3026, %v4312
  %v4700 = vadd.f32 %v3028, %v4313
  %v4701 = vadd.f32 %v3139, %v4314
  %v4702 = vadd.f32 %v3141, %v4315
  %v4703 = vadd.f32 %v3252, %v4316
  %v4704 = vadd.f32 %v3254, %v4317
  %v4705 = vadd.f32 %v3365, %v4318
  %v4706 = vadd.f32 %v3367, %v4319
  %v4707 = vadd.f32 %v3477, %v3557
  %v4708 = vadd.f32 %v2128, %v3999
  %v4709 = vadd.f32 %v2130, %v4320
  %v4710 = vadd.f32 %v2241, %v4321
  %v4711 = vadd.f32 %v2243, %v4322
  %v4712 = vadd.f32 %v2354, %v4323
  %v4713 = vadd.f32 %v2356, %v4324
  %v4714 = vadd.f32 %v2467, %v4325
  %v4715 = vadd.f32 %v2469, %v4326
  %v4716 = vadd.f32 %v2580, %v4327
  %v4717 = vadd.f32 %v2582, %v4328
  %v4718 = vadd.f32 %v2693, %v4329
  %v4719 = vadd.f32 %v2695, %v4330
  %v4720 = vadd.f32 %v2806, %v4331
  %v4721 = vadd.f32 %v2808, %v4332
  %v4722 = vadd.f32 %v2919, %v4333
  %v4723 = vadd.f32 %v2921, %v4334
  %v4724 = vadd.f32 %v3032, %v4335
  %v4725 = vadd.f32 %v3034, %v4336
  %v4726 = vadd.f32 %v3145, %v4337
  %v4727 = vadd.f32 %v3147, %v4338
  %v4728 = vadd.f32 %v3258, %v4339
  %v4729 = vadd.f32 %v3260, %v4340
  %v4730 = vadd.f32 %v3371, %v4341
  %v4731 = vadd.f32 %v3373, %v4342
  %v4732 = vadd.f32 %v3482, %v3561
  %v4733 = vadd.f32 %v2132, %v4045
  %v4734 = vadd.f32 %v2134, %v4343
  %v4735 = vadd.f32 %v2245, %v4344
  %v4736 = vadd.f32 %v2247, %v4345
  %v4737 = vadd.f32 %v2358, %v4346
  %v4738 = vadd.f32 %v2360, %v4347
  %v4739 = vadd.f32 %v2471, %v4348
  %v4740 = vadd.f32 %v2473, %v4349
  %v4741 = vadd.f32 %v2584, %v4350
  %v4742 = vadd.f32 %v2586, %v4351
  %v4743 = vadd.f32 %v2697, %v4352
  %v4744 = vadd.f32 %v2699, %v4353
  %v4745 = vadd.f32 %v2810, %v4354
  %v4746 = vadd.f32 %v2812, %v4355
  %v4747 = vadd.f32 %v2923, %v4356
  %v4748 = vadd.f32 %v2925, %v4357
  %v4749 = vadd.f32 %v3036, %v4358
  %v4750 = vadd.f32 %v3038, %v4359
  %v4751 = vadd.f32 %v3149, %v4360
  %v4752 = vadd.f32 %v3151, %v4361
  %v4753 = vadd.f32 %v3262, %v4362
  %v4754 = vadd.f32 %v3264, %v4363
  %v4755 = vadd.f32 %v3375, %v4364
  %v4756 = vadd.f32 %v3377, %v4365
  %v4757 = vadd.f32 %v3485, %v3565
  %v4758 = vadd.f32 %v2138, %v4091
  %v4759 = vadd.f32 %v2140, %v4366
  %v4760 = vadd.f32 %v2251, %v4367
  %v4761 = vadd.f32 %v2253, %v4368
  %v4762 = vadd.f32 %v2364, %v4369
  %v4763 = vadd.f32 %v2366, %v4370
  %v4764 = vadd.f32 %v2477, %v4371
  %v4765 = vadd.f32 %v2479, %v4372
  %v4766 = vadd.f32 %v2590, %v4373
  %v4767 = vadd.f32 %v2592, %v4374
  %v4768 = vadd.f32 %v2703, %v4375
  %v4769 = vadd.f32 %v2705, %v4376
  %v4770 = vadd.f32 %v2816, %v4377
  %v4771 = vadd.f32 %v2818, %v4378
  %v4772 = vadd.f32 %v2929, %v4379
  %v4773 = vadd.f32 %v2931, %v4380
  %v4774 = vadd.f32 %v3042, %v4381
  %v4775 = vadd.f32 %v3044, %v4382
  %v4776 = vadd.f32 %v3155, %v4383
  %v4777 = vadd.f32 %v3157, %v4384
  %v4778 = vadd.f32 %v3268, %v4385
  %v4779 = vadd.f32 %v3270, %v4386
  %v4780 = vadd.f32 %v3381, %v4387
  %v4781 = vadd.f32 %v3383, %v4388
  %v4782 = vadd.f32 %v3490, %v3569
  %v4783 = vadd.f32 %v2142, %v4137
  %v4784 = vadd.f32 %v2144, %v4389
  %v4785 = vadd.f32 %v2255, %v4390
  %v4786 = vadd.f32 %v2257, %v4391
  %v4787 = vadd.f32 %v2368, %v4392
  %v4788 = vadd.f32 %v2370, %v4393
  %v4789 = vadd.f32 %v2481, %v4394
  %v4790 = vadd.f32 %v2483, %v4395
  %v4791 = vadd.f32 %v2594, %v4396
  %v4792 = vadd.f32 %v2596, %v4397
  %v4793 = vadd.f32 %v2707, %v4398
  %v4794 = vadd.f32 %v2709, %v4399
  %v4795 = vadd.f32 %v2820, %v4400
  %v4796 = vadd.f32 %v2822, %v4401
  %v4797 = vadd.f32 %v2933, %v4402
  %v4798 = vadd.f32 %v2935, %v4403
  %v4799 = vadd.f32 %v3046, %v4404
  %v4800 = vadd.f32 %v3048, %v4405
  %v4801 = vadd.f32 %v3159, %v4406
  %v4802 = vadd.f32 %v3161, %v4407
  %v4803 = vadd.f32 %v3272, %v4408
  %v4804 = vadd.f32 %v3274, %v4409
  %v4805 = vadd.f32 %v3385, %v4410
  %v4806 = vadd.f32 %v3387, %v4411
  %v4807 = vadd.f32 %v3493, %v3573
  %v4808 = vadd.f32 %v2148, %v4183
  %v4809 = vadd.f32 %v2150, %v4412
  %v4810 = vadd.f32 %v2261, %v4413
  %v4811 = vadd.f32 %v2263, %v4414
  %v4812 = vadd.f32 %v2374, %v4415
  %v4813 = vadd.f32 %v2376, %v4416
  %v4814 = vadd.f32 %v2487, %v4417
  %v4815 = vadd.f32 %v2489, %v4418
  %v4816 = vadd.f32 %v2600, %v4419
  %v4817 = vadd.f32 %v2602, %v4420
  %v4818 = vadd.f32 %v2713, %v4421
  %v4819 = vadd.f32 %v2715, %v4422
  %v4820 = vadd.f32 %v2826, %v4423
  %v4821 = vadd.f32 %v2828, %v4424
  %v4822 = vadd.f32 %v2939, %v4425
  %v4823 = vadd.f32 %v2941, %v4426
  %v4824 = vadd.f32 %v3052, %v4427
  %v4825 = vadd.f32 %v3054, %v4428
  %v4826 = vadd.f32 %v3165, %v4429
  %v4827 = vadd.f32 %v3167, %v4430
  %v4828 = vadd.f32 %v3278, %v4431
  %v4829 = vadd.f32 %v3280, %v4432
  %v4830 = vadd.f32 %v3391, %v4433
  %v4831 = vadd.f32 %v3393, %v4434
  %v4832 = vadd.f32 %v3498, %v3577
  %v4833 = vadd.f32 %v2152, %v4229
  %v4834 = vadd.f32 %v2154, %v4435
  %v4835 = vadd.f32 %v2265, %v4436
  %v4836 = vadd.f32 %v2267, %v4437
  %v4837 = vadd.f32 %v2378, %v4438
  %v4838 = vadd.f32 %v2380, %v4439
  %v4839 = vadd.f32 %v2491, %v4440
  %v4840 = vadd.f32 %v2493, %v4441
  %v4841 = vadd.f32 %v2604, %v4442
  %v4842 = vadd.f32 %v2606, %v4443
  %v4843 = vadd.f32 %v2717, %v4444
  %v4844 = vadd.f32 %v2719, %v4445
  %v4845 = vadd.f32 %v2830, %v4446
  %v4846 = vadd.f32 %v2832, %v4447
  %v4847 = vadd.f32 %v2943, %v4448
  %v4848 = vadd.f32 %v2945, %v4449
  %v4849 = vadd.f32 %v3056, %v4450
  %v4850 = vadd.f32 %v3058, %v4451
  %v4851 = vadd.f32 %v3169, %v4452
  %v4852 = vadd.f32 %v3171, %v4453
  %v4853 = vadd.f32 %v3282, %v4454
  %v4854 = vadd.f32 %v3284, %v4455
  %v4855 = vadd.f32 %v3395, %v4456
  %v4856 = vadd.f32 %v3397, %v4457
  %v4857 = vadd.f32 %v3501, %v3581
  %5058 = vrot.lane.b32.xlu0 %v4658, 56
  %v5059 = vpop.permute.xlu0 %5058
  %5060 = vrot.lane.b32.xlu0 %v4659, 56
  %v5061 = vpop.permute.xlu0 %5060
  %5062 = vrot.lane.b32.xlu0 %v4660, 56
  %v5063 = vpop.permute.xlu0 %5062
  %5064 = vrot.lane.b32.xlu0 %v4661, 56
  %v5065 = vpop.permute.xlu0 %5064
  %5066 = vrot.lane.b32.xlu0 %v4662, 56
  %v5067 = vpop.permute.xlu0 %5066
  %5068 = vrot.lane.b32.xlu0 %v4663, 56
  %v5069 = vpop.permute.xlu0 %5068
  %5070 = vrot.lane.b32.xlu0 %v4664, 56
  %v5071 = vpop.permute.xlu0 %5070
  %5072 = vrot.lane.b32.xlu0 %v4665, 56
  %v5073 = vpop.permute.xlu0 %5072
  %5074 = vrot.lane.b32.xlu0 %v4666, 56
  %v5075 = vpop.permute.xlu0 %5074
  %5076 = vrot.lane.b32.xlu0 %v4667, 56
  %v5077 = vpop.permute.xlu0 %5076
  %5078 = vrot.lane.b32.xlu0 %v4668, 56
  %v5079 = vpop.permute.xlu0 %5078
  %5080 = vrot.lane.b32.xlu0 %v4669, 56
  %v5081 = vpop.permute.xlu0 %5080
  %5082 = vrot.lane.b32.xlu0 %v4670, 56
  %v5083 = vpop.permute.xlu0 %5082
  %5084 = vrot.lane.b32.xlu0 %v4671, 56
  %v5085 = vpop.permute.xlu0 %5084
  %5086 = vrot.lane.b32.xlu0 %v4672, 56
  %v5087 = vpop.permute.xlu0 %5086
  %5088 = vrot.lane.b32.xlu0 %v4673, 56
  %v5089 = vpop.permute.xlu0 %5088
  %5090 = vrot.lane.b32.xlu0 %v4674, 56
  %v5091 = vpop.permute.xlu0 %5090
  %5092 = vrot.lane.b32.xlu0 %v4675, 56
  %v5093 = vpop.permute.xlu0 %5092
  %5094 = vrot.lane.b32.xlu0 %v4676, 56
  %v5095 = vpop.permute.xlu0 %5094
  %5096 = vrot.lane.b32.xlu0 %v4677, 56
  %v5097 = vpop.permute.xlu0 %5096
  %5098 = vrot.lane.b32.xlu0 %v4678, 56
  %v5099 = vpop.permute.xlu0 %5098
  %5100 = vrot.lane.b32.xlu0 %v4679, 56
  %v5101 = vpop.permute.xlu0 %5100
  %5102 = vrot.lane.b32.xlu0 %v4680, 56
  %v5103 = vpop.permute.xlu0 %5102
  %5104 = vrot.lane.b32.xlu0 %v4681, 56
  %v5105 = vpop.permute.xlu0 %5104
  %5106 = vrot.lane.b32.xlu0 %v4682, 56
  %v5107 = vpop.permute.xlu0 %5106
  %5108 = vrot.lane.b32.xlu0 %v4683, 56
  %v5109 = vpop.permute.xlu0 %5108
  %5110 = vrot.lane.b32.xlu0 %v4684, 56
  %v5111 = vpop.permute.xlu0 %5110
  %5112 = vrot.lane.b32.xlu0 %v4685, 56
  %v5113 = vpop.permute.xlu0 %5112
  %5114 = vrot.lane.b32.xlu0 %v4686, 56
  %v5115 = vpop.permute.xlu0 %5114
  %5116 = vrot.lane.b32.xlu0 %v4687, 56
  %v5117 = vpop.permute.xlu0 %5116
  %5118 = vrot.lane.b32.xlu0 %v4688, 56
  %v5119 = vpop.permute.xlu0 %5118
  %5120 = vrot.lane.b32.xlu0 %v4689, 56
  %v5121 = vpop.permute.xlu0 %5120
  %5122 = vrot.lane.b32.xlu0 %v4690, 56
  %v5123 = vpop.permute.xlu0 %5122
  %5124 = vrot.lane.b32.xlu0 %v4691, 56
  %v5125 = vpop.permute.xlu0 %5124
  %5126 = vrot.lane.b32.xlu0 %v4692, 56
  %v5127 = vpop.permute.xlu0 %5126
  %5128 = vrot.lane.b32.xlu0 %v4693, 56
  %v5129 = vpop.permute.xlu0 %5128
  %5130 = vrot.lane.b32.xlu0 %v4694, 56
  %v5131 = vpop.permute.xlu0 %5130
  %5132 = vrot.lane.b32.xlu0 %v4695, 56
  %v5133 = vpop.permute.xlu0 %5132
  %5134 = vrot.lane.b32.xlu0 %v4696, 56
  %v5135 = vpop.permute.xlu0 %5134
  %5136 = vrot.lane.b32.xlu0 %v4697, 56
  %v5137 = vpop.permute.xlu0 %5136
  %5138 = vrot.lane.b32.xlu0 %v4698, 56
  %v5139 = vpop.permute.xlu0 %5138
  %5140 = vrot.lane.b32.xlu0 %v4699, 56
  %v5141 = vpop.permute.xlu0 %5140
  %5142 = vrot.lane.b32.xlu0 %v4700, 56
  %v5143 = vpop.permute.xlu0 %5142
  %5144 = vrot.lane.b32.xlu0 %v4701, 56
  %v5145 = vpop.permute.xlu0 %5144
  %5146 = vrot.lane.b32.xlu0 %v4702, 56
  %v5147 = vpop.permute.xlu0 %5146
  %5148 = vrot.lane.b32.xlu0 %v4703, 56
  %v5149 = vpop.permute.xlu0 %5148
  %5150 = vrot.lane.b32.xlu0 %v4704, 56
  %v5151 = vpop.permute.xlu0 %5150
  %5152 = vrot.lane.b32.xlu0 %v4705, 56
  %v5153 = vpop.permute.xlu0 %5152
  %5154 = vrot.lane.b32.xlu0 %v4706, 56
  %v5155 = vpop.permute.xlu0 %5154
  %5156 = vrot.lane.b32.xlu0 %v4707, 56
  %v5157 = vpop.permute.xlu0 %5156
  %5158 = vrot.lane.b32.xlu0 %v4708, 56
  %v5159 = vpop.permute.xlu0 %5158
  %5160 = vrot.lane.b32.xlu0 %v4709, 56
  %v5161 = vpop.permute.xlu0 %5160
  %5162 = vrot.lane.b32.xlu0 %v4710, 56
  %v5163 = vpop.permute.xlu0 %5162
  %5164 = vrot.lane.b32.xlu0 %v4711, 56
  %v5165 = vpop.permute.xlu0 %5164
  %5166 = vrot.lane.b32.xlu0 %v4712, 56
  %v5167 = vpop.permute.xlu0 %5166
  %5168 = vrot.lane.b32.xlu0 %v4713, 56
  %v5169 = vpop.permute.xlu0 %5168
  %5170 = vrot.lane.b32.xlu0 %v4714, 56
  %v5171 = vpop.permute.xlu0 %5170
  %5172 = vrot.lane.b32.xlu0 %v4715, 56
  %v5173 = vpop.permute.xlu0 %5172
  %5174 = vrot.lane.b32.xlu0 %v4716, 56
  %v5175 = vpop.permute.xlu0 %5174
  %5176 = vrot.lane.b32.xlu0 %v4717, 56
  %v5177 = vpop.permute.xlu0 %5176
  %5178 = vrot.lane.b32.xlu0 %v4718, 56
  %v5179 = vpop.permute.xlu0 %5178
  %5180 = vrot.lane.b32.xlu0 %v4719, 56
  %v5181 = vpop.permute.xlu0 %5180
  %5182 = vrot.lane.b32.xlu0 %v4720, 56
  %v5183 = vpop.permute.xlu0 %5182
  %5184 = vrot.lane.b32.xlu0 %v4721, 56
  %v5185 = vpop.permute.xlu0 %5184
  %5186 = vrot.lane.b32.xlu0 %v4722, 56
  %v5187 = vpop.permute.xlu0 %5186
  %5188 = vrot.lane.b32.xlu0 %v4723, 56
  %v5189 = vpop.permute.xlu0 %5188
  %5190 = vrot.lane.b32.xlu0 %v4724, 56
  %v5191 = vpop.permute.xlu0 %5190
  %5192 = vrot.lane.b32.xlu0 %v4725, 56
  %v5193 = vpop.permute.xlu0 %5192
  %5194 = vrot.lane.b32.xlu0 %v4726, 56
  %v5195 = vpop.permute.xlu0 %5194
  %5196 = vrot.lane.b32.xlu0 %v4727, 56
  %v5197 = vpop.permute.xlu0 %5196
  %5198 = vrot.lane.b32.xlu0 %v4728, 56
  %v5199 = vpop.permute.xlu0 %5198
  %5200 = vrot.lane.b32.xlu0 %v4729, 56
  %v5201 = vpop.permute.xlu0 %5200
  %5202 = vrot.lane.b32.xlu0 %v4730, 56
  %v5203 = vpop.permute.xlu0 %5202
  %5204 = vrot.lane.b32.xlu0 %v4731, 56
  %v5205 = vpop.permute.xlu0 %5204
  %5206 = vrot.lane.b32.xlu0 %v4732, 56
  %v5207 = vpop.permute.xlu0 %5206
  %5208 = vrot.lane.b32.xlu0 %v4733, 56
  %v5209 = vpop.permute.xlu0 %5208
  %5210 = vrot.lane.b32.xlu0 %v4734, 56
  %v5211 = vpop.permute.xlu0 %5210
  %5212 = vrot.lane.b32.xlu0 %v4735, 56
  %v5213 = vpop.permute.xlu0 %5212
  %5214 = vrot.lane.b32.xlu0 %v4736, 56
  %v5215 = vpop.permute.xlu0 %5214
  %5216 = vrot.lane.b32.xlu0 %v4737, 56
  %v5217 = vpop.permute.xlu0 %5216
  %5218 = vrot.lane.b32.xlu0 %v4738, 56
  %v5219 = vpop.permute.xlu0 %5218
  %5220 = vrot.lane.b32.xlu0 %v4739, 56
  %v5221 = vpop.permute.xlu0 %5220
  %5222 = vrot.lane.b32.xlu0 %v4740, 56
  %v5223 = vpop.permute.xlu0 %5222
  %5224 = vrot.lane.b32.xlu0 %v4741, 56
  %v5225 = vpop.permute.xlu0 %5224
  %5226 = vrot.lane.b32.xlu0 %v4742, 56
  %v5227 = vpop.permute.xlu0 %5226
  %5228 = vrot.lane.b32.xlu0 %v4743, 56
  %v5229 = vpop.permute.xlu0 %5228
  %5230 = vrot.lane.b32.xlu0 %v4744, 56
  %v5231 = vpop.permute.xlu0 %5230
  %5232 = vrot.lane.b32.xlu0 %v4745, 56
  %v5233 = vpop.permute.xlu0 %5232
  %5234 = vrot.lane.b32.xlu0 %v4746, 56
  %v5235 = vpop.permute.xlu0 %5234
  %5236 = vrot.lane.b32.xlu0 %v4747, 56
  %v5237 = vpop.permute.xlu0 %5236
  %5238 = vrot.lane.b32.xlu0 %v4748, 56
  %v5239 = vpop.permute.xlu0 %5238
  %5240 = vrot.lane.b32.xlu0 %v4749, 56
  %v5241 = vpop.permute.xlu0 %5240
  %5242 = vrot.lane.b32.xlu0 %v4750, 56
  %v5243 = vpop.permute.xlu0 %5242
  %5244 = vrot.lane.b32.xlu0 %v4751, 56
  %v5245 = vpop.permute.xlu0 %5244
  %5246 = vrot.lane.b32.xlu0 %v4752, 56
  %v5247 = vpop.permute.xlu0 %5246
  %5248 = vrot.lane.b32.xlu0 %v4753, 56
  %v5249 = vpop.permute.xlu0 %5248
  %5250 = vrot.lane.b32.xlu0 %v4754, 56
  %v5251 = vpop.permute.xlu0 %5250
  %5252 = vrot.lane.b32.xlu0 %v4755, 56
  %v5253 = vpop.permute.xlu0 %5252
  %5254 = vrot.lane.b32.xlu0 %v4756, 56
  %v5255 = vpop.permute.xlu0 %5254
  %5256 = vrot.lane.b32.xlu0 %v4757, 56
  %v5257 = vpop.permute.xlu0 %5256
  %5258 = vrot.lane.b32.xlu0 %v4758, 56
  %v5259 = vpop.permute.xlu0 %5258
  %5260 = vrot.lane.b32.xlu0 %v4759, 56
  %v5261 = vpop.permute.xlu0 %5260
  %5262 = vrot.lane.b32.xlu0 %v4760, 56
  %v5263 = vpop.permute.xlu0 %5262
  %5264 = vrot.lane.b32.xlu0 %v4761, 56
  %v5265 = vpop.permute.xlu0 %5264
  %5266 = vrot.lane.b32.xlu0 %v4762, 56
  %v5267 = vpop.permute.xlu0 %5266
  %5268 = vrot.lane.b32.xlu0 %v4763, 56
  %v5269 = vpop.permute.xlu0 %5268
  %5270 = vrot.lane.b32.xlu0 %v4764, 56
  %v5271 = vpop.permute.xlu0 %5270
  %5272 = vrot.lane.b32.xlu0 %v4765, 56
  %v5273 = vpop.permute.xlu0 %5272
  %5274 = vrot.lane.b32.xlu0 %v4766, 56
  %v5275 = vpop.permute.xlu0 %5274
  %5276 = vrot.lane.b32.xlu0 %v4767, 56
  %v5277 = vpop.permute.xlu0 %5276
  %5278 = vrot.lane.b32.xlu0 %v4768, 56
  %v5279 = vpop.permute.xlu0 %5278
  %5280 = vrot.lane.b32.xlu0 %v4769, 56
  %v5281 = vpop.permute.xlu0 %5280
  %5282 = vrot.lane.b32.xlu0 %v4770, 56
  %v5283 = vpop.permute.xlu0 %5282
  %5284 = vrot.lane.b32.xlu0 %v4771, 56
  %v5285 = vpop.permute.xlu0 %5284
  %5286 = vrot.lane.b32.xlu0 %v4772, 56
  %v5287 = vpop.permute.xlu0 %5286
  %5288 = vrot.lane.b32.xlu0 %v4773, 56
  %v5289 = vpop.permute.xlu0 %5288
  %5290 = vrot.lane.b32.xlu0 %v4774, 56
  %v5291 = vpop.permute.xlu0 %5290
  %5292 = vrot.lane.b32.xlu0 %v4775, 56
  %v5293 = vpop.permute.xlu0 %5292
  %5294 = vrot.lane.b32.xlu0 %v4776, 56
  %v5295 = vpop.permute.xlu0 %5294
  %5296 = vrot.lane.b32.xlu0 %v4777, 56
  %v5297 = vpop.permute.xlu0 %5296
  %5298 = vrot.lane.b32.xlu0 %v4778, 56
  %v5299 = vpop.permute.xlu0 %5298
  %5300 = vrot.lane.b32.xlu0 %v4779, 56
  %v5301 = vpop.permute.xlu0 %5300
  %5302 = vrot.lane.b32.xlu0 %v4780, 56
  %v5303 = vpop.permute.xlu0 %5302
  %5304 = vrot.lane.b32.xlu0 %v4781, 56
  %v5305 = vpop.permute.xlu0 %5304
  %5306 = vrot.lane.b32.xlu0 %v4782, 56
  %v5307 = vpop.permute.xlu0 %5306
  %5308 = vrot.lane.b32.xlu0 %v4783, 56
  %v5309 = vpop.permute.xlu0 %5308
  %5310 = vrot.lane.b32.xlu0 %v4784, 56
  %v5311 = vpop.permute.xlu0 %5310
  %5312 = vrot.lane.b32.xlu0 %v4785, 56
  %v5313 = vpop.permute.xlu0 %5312
  %5314 = vrot.lane.b32.xlu0 %v4786, 56
  %v5315 = vpop.permute.xlu0 %5314
  %5316 = vrot.lane.b32.xlu0 %v4787, 56
  %v5317 = vpop.permute.xlu0 %5316
  %5318 = vrot.lane.b32.xlu0 %v4788, 56
  %v5319 = vpop.permute.xlu0 %5318
  %5320 = vrot.lane.b32.xlu0 %v4789, 56
  %v5321 = vpop.permute.xlu0 %5320
  %5322 = vrot.lane.b32.xlu0 %v4790, 56
  %v5323 = vpop.permute.xlu0 %5322
  %5324 = vrot.lane.b32.xlu0 %v4791, 56
  %v5325 = vpop.permute.xlu0 %5324
  %5326 = vrot.lane.b32.xlu0 %v4792, 56
  %v5327 = vpop.permute.xlu0 %5326
  %5328 = vrot.lane.b32.xlu0 %v4793, 56
  %v5329 = vpop.permute.xlu0 %5328
  %5330 = vrot.lane.b32.xlu0 %v4794, 56
  %v5331 = vpop.permute.xlu0 %5330
  %5332 = vrot.lane.b32.xlu0 %v4795, 56
  %v5333 = vpop.permute.xlu0 %5332
  %5334 = vrot.lane.b32.xlu0 %v4796, 56
  %v5335 = vpop.permute.xlu0 %5334
  %5336 = vrot.lane.b32.xlu0 %v4797, 56
  %v5337 = vpop.permute.xlu0 %5336
  %5338 = vrot.lane.b32.xlu0 %v4798, 56
  %v5339 = vpop.permute.xlu0 %5338
  %5340 = vrot.lane.b32.xlu0 %v4799, 56
  %v5341 = vpop.permute.xlu0 %5340
  %5342 = vrot.lane.b32.xlu0 %v4800, 56
  %v5343 = vpop.permute.xlu0 %5342
  %5344 = vrot.lane.b32.xlu0 %v4801, 56
  %v5345 = vpop.permute.xlu0 %5344
  %5346 = vrot.lane.b32.xlu0 %v4802, 56
  %v5347 = vpop.permute.xlu0 %5346
  %5348 = vrot.lane.b32.xlu0 %v4803, 56
  %v5349 = vpop.permute.xlu0 %5348
  %5350 = vrot.lane.b32.xlu0 %v4804, 56
  %v5351 = vpop.permute.xlu0 %5350
  %5352 = vrot.lane.b32.xlu0 %v4805, 56
  %v5353 = vpop.permute.xlu0 %5352
  %5354 = vrot.lane.b32.xlu0 %v4806, 56
  %v5355 = vpop.permute.xlu0 %5354
  %5356 = vrot.lane.b32.xlu0 %v4807, 56
  %v5357 = vpop.permute.xlu0 %5356
  %5358 = vrot.lane.b32.xlu0 %v4808, 56
  %v5359 = vpop.permute.xlu0 %5358
  %5360 = vrot.lane.b32.xlu0 %v4809, 56
  %v5361 = vpop.permute.xlu0 %5360
  %5362 = vrot.lane.b32.xlu0 %v4810, 56
  %v5363 = vpop.permute.xlu0 %5362
  %5364 = vrot.lane.b32.xlu0 %v4811, 56
  %v5365 = vpop.permute.xlu0 %5364
  %5366 = vrot.lane.b32.xlu0 %v4812, 56
  %v5367 = vpop.permute.xlu0 %5366
  %5368 = vrot.lane.b32.xlu0 %v4813, 56
  %v5369 = vpop.permute.xlu0 %5368
  %5370 = vrot.lane.b32.xlu0 %v4814, 56
  %v5371 = vpop.permute.xlu0 %5370
  %5372 = vrot.lane.b32.xlu0 %v4815, 56
  %v5373 = vpop.permute.xlu0 %5372
  %5374 = vrot.lane.b32.xlu0 %v4816, 56
  %v5375 = vpop.permute.xlu0 %5374
  %5376 = vrot.lane.b32.xlu0 %v4817, 56
  %v5377 = vpop.permute.xlu0 %5376
  %5378 = vrot.lane.b32.xlu0 %v4818, 56
  %v5379 = vpop.permute.xlu0 %5378
  %5380 = vrot.lane.b32.xlu0 %v4819, 56
  %v5381 = vpop.permute.xlu0 %5380
  %5382 = vrot.lane.b32.xlu0 %v4820, 56
  %v5383 = vpop.permute.xlu0 %5382
  %5384 = vrot.lane.b32.xlu0 %v4821, 56
  %v5385 = vpop.permute.xlu0 %5384
  %5386 = vrot.lane.b32.xlu0 %v4822, 56
  %v5387 = vpop.permute.xlu0 %5386
  %5388 = vrot.lane.b32.xlu0 %v4823, 56
  %v5389 = vpop.permute.xlu0 %5388
  %5390 = vrot.lane.b32.xlu0 %v4824, 56
  %v5391 = vpop.permute.xlu0 %5390
  %5392 = vrot.lane.b32.xlu0 %v4825, 56
  %v5393 = vpop.permute.xlu0 %5392
  %5394 = vrot.lane.b32.xlu0 %v4826, 56
  %v5395 = vpop.permute.xlu0 %5394
  %5396 = vrot.lane.b32.xlu0 %v4827, 56
  %v5397 = vpop.permute.xlu0 %5396
  %5398 = vrot.lane.b32.xlu0 %v4828, 56
  %v5399 = vpop.permute.xlu0 %5398
  %5400 = vrot.lane.b32.xlu0 %v4829, 56
  %v5401 = vpop.permute.xlu0 %5400
  %5402 = vrot.lane.b32.xlu0 %v4830, 56
  %v5403 = vpop.permute.xlu0 %5402
  %5404 = vrot.lane.b32.xlu0 %v4831, 56
  %v5405 = vpop.permute.xlu0 %5404
  %5406 = vrot.lane.b32.xlu0 %v4832, 56
  %v5407 = vpop.permute.xlu0 %5406
  %5408 = vrot.lane.b32.xlu0 %v4833, 56
  %v5409 = vpop.permute.xlu0 %5408
  %5410 = vrot.lane.b32.xlu0 %v4834, 56
  %v5411 = vpop.permute.xlu0 %5410
  %5412 = vrot.lane.b32.xlu0 %v4835, 56
  %v5413 = vpop.permute.xlu0 %5412
  %5414 = vrot.lane.b32.xlu0 %v4836, 56
  %v5415 = vpop.permute.xlu0 %5414
  %5416 = vrot.lane.b32.xlu0 %v4837, 56
  %v5417 = vpop.permute.xlu0 %5416
  %5418 = vrot.lane.b32.xlu0 %v4838, 56
  %v5419 = vpop.permute.xlu0 %5418
  %5420 = vrot.lane.b32.xlu0 %v4839, 56
  %v5421 = vpop.permute.xlu0 %5420
  %5422 = vrot.lane.b32.xlu0 %v4840, 56
  %v5423 = vpop.permute.xlu0 %5422
  %5424 = vrot.lane.b32.xlu0 %v4841, 56
  %v5425 = vpop.permute.xlu0 %5424
  %5426 = vrot.lane.b32.xlu0 %v4842, 56
  %v5427 = vpop.permute.xlu0 %5426
  %5428 = vrot.lane.b32.xlu0 %v4843, 56
  %v5429 = vpop.permute.xlu0 %5428
  %5430 = vrot.lane.b32.xlu0 %v4844, 56
  %v5431 = vpop.permute.xlu0 %5430
  %5432 = vrot.lane.b32.xlu0 %v4845, 56
  %v5433 = vpop.permute.xlu0 %5432
  %5434 = vrot.lane.b32.xlu0 %v4846, 56
  %v5435 = vpop.permute.xlu0 %5434
  %5436 = vrot.lane.b32.xlu0 %v4847, 56
  %v5437 = vpop.permute.xlu0 %5436
  %5438 = vrot.lane.b32.xlu0 %v4848, 56
  %v5439 = vpop.permute.xlu0 %5438
  %5440 = vrot.lane.b32.xlu0 %v4849, 56
  %v5441 = vpop.permute.xlu0 %5440
  %5442 = vrot.lane.b32.xlu0 %v4850, 56
  %v5443 = vpop.permute.xlu0 %5442
  %5444 = vrot.lane.b32.xlu0 %v4851, 56
  %v5445 = vpop.permute.xlu0 %5444
  %5446 = vrot.lane.b32.xlu0 %v4852, 56
  %v5447 = vpop.permute.xlu0 %5446
  %5448 = vrot.lane.b32.xlu0 %v4853, 56
  %v5449 = vpop.permute.xlu0 %5448
  %5450 = vrot.lane.b32.xlu0 %v4854, 56
  %v5451 = vpop.permute.xlu0 %5450
  %5452 = vrot.lane.b32.xlu0 %v4855, 56
  %v5453 = vpop.permute.xlu0 %5452
  %5454 = vrot.lane.b32.xlu0 %v4856, 56
  %v5455 = vpop.permute.xlu0 %5454
  %5456 = vrot.lane.b32.xlu0 %v4857, 56
  %v5457 = vpop.permute.xlu0 %5456
  %v5458 = vsel %vm3584, %v5059, %v5061
  %v5459 = vsel %vm3584, %v5061, %v5063
  %v5460 = vsel %vm3584, %v5063, %v5065
  %v5461 = vsel %vm3584, %v5065, %v5067
  %v5462 = vsel %vm3584, %v5067, %v5069
  %v5463 = vsel %vm3584, %v5069, %v5071
  %v5464 = vsel %vm3584, %v5071, %v5073
  %v5465 = vsel %vm3584, %v5073, %v5075
  %v5466 = vsel %vm3584, %v5075, %v5077
  %v5467 = vsel %vm3584, %v5077, %v5079
  %v5468 = vsel %vm3584, %v5079, %v5081
  %v5469 = vsel %vm3584, %v5081, %v5083
  %v5470 = vsel %vm3584, %v5083, %v5085
  %v5471 = vsel %vm3584, %v5085, %v5087
  %v5472 = vsel %vm3584, %v5087, %v5089
  %v5473 = vsel %vm3584, %v5089, %v5091
  %v5474 = vsel %vm3584, %v5091, %v5093
  %v5475 = vsel %vm3584, %v5093, %v5095
  %v5476 = vsel %vm3584, %v5095, %v5097
  %v5477 = vsel %vm3584, %v5097, %v5099
  %v5478 = vsel %vm3584, %v5099, %v5101
  %v5479 = vsel %vm3584, %v5101, %v5103
  %v5480 = vsel %vm3584, %v5103, %v5105
  %v5481 = vsel %vm3584, %v5105, %v5107
  %v5482 = vsel %vm3584, %v5109, %v5111
  %v5483 = vsel %vm3584, %v5111, %v5113
  %v5484 = vsel %vm3584, %v5113, %v5115
  %v5485 = vsel %vm3584, %v5115, %v5117
  %v5486 = vsel %vm3584, %v5117, %v5119
  %v5487 = vsel %vm3584, %v5119, %v5121
  %v5488 = vsel %vm3584, %v5121, %v5123
  %v5489 = vsel %vm3584, %v5123, %v5125
  %v5490 = vsel %vm3584, %v5125, %v5127
  %v5491 = vsel %vm3584, %v5127, %v5129
  %v5492 = vsel %vm3584, %v5129, %v5131
  %v5493 = vsel %vm3584, %v5131, %v5133
  %v5494 = vsel %vm3584, %v5133, %v5135
  %v5495 = vsel %vm3584, %v5135, %v5137
  %v5496 = vsel %vm3584, %v5137, %v5139
  %v5497 = vsel %vm3584, %v5139, %v5141
  %v5498 = vsel %vm3584, %v5141, %v5143
  %v5499 = vsel %vm3584, %v5143, %v5145
  %v5500 = vsel %vm3584, %v5145, %v5147
  %v5501 = vsel %vm3584, %v5147, %v5149
  %v5502 = vsel %vm3584, %v5149, %v5151
  %v5503 = vsel %vm3584, %v5151, %v5153
  %v5504 = vsel %vm3584, %v5153, %v5155
  %v5505 = vsel %vm3584, %v5155, %v5157
  %v5506 = vsel %vm3584, %v5159, %v5161
  %v5507 = vsel %vm3584, %v5161, %v5163
  %v5508 = vsel %vm3584, %v5163, %v5165
  %v5509 = vsel %vm3584, %v5165, %v5167
  %v5510 = vsel %vm3584, %v5167, %v5169
  %v5511 = vsel %vm3584, %v5169, %v5171
  %v5512 = vsel %vm3584, %v5171, %v5173
  %v5513 = vsel %vm3584, %v5173, %v5175
  %v5514 = vsel %vm3584, %v5175, %v5177
  %v5515 = vsel %vm3584, %v5177, %v5179
  %v5516 = vsel %vm3584, %v5179, %v5181
  %v5517 = vsel %vm3584, %v5181, %v5183
  %v5518 = vsel %vm3584, %v5183, %v5185
  %v5519 = vsel %vm3584, %v5185, %v5187
  %v5520 = vsel %vm3584, %v5187, %v5189
  %v5521 = vsel %vm3584, %v5189, %v5191
  %v5522 = vsel %vm3584, %v5191, %v5193
  %v5523 = vsel %vm3584, %v5193, %v5195
  %v5524 = vsel %vm3584, %v5195, %v5197
  %v5525 = vsel %vm3584, %v5197, %v5199
  %v5526 = vsel %vm3584, %v5199, %v5201
  %v5527 = vsel %vm3584, %v5201, %v5203
  %v5528 = vsel %vm3584, %v5203, %v5205
  %v5529 = vsel %vm3584, %v5205, %v5207
  %v5530 = vsel %vm3584, %v5209, %v5211
  %v5531 = vsel %vm3584, %v5211, %v5213
  %v5532 = vsel %vm3584, %v5213, %v5215
  %v5533 = vsel %vm3584, %v5215, %v5217
  %v5534 = vsel %vm3584, %v5217, %v5219
  %v5535 = vsel %vm3584, %v5219, %v5221
  %v5536 = vsel %vm3584, %v5221, %v5223
  %v5537 = vsel %vm3584, %v5223, %v5225
  %v5538 = vsel %vm3584, %v5225, %v5227
  %v5539 = vsel %vm3584, %v5227, %v5229
  %v5540 = vsel %vm3584, %v5229, %v5231
  %v5541 = vsel %vm3584, %v5231, %v5233
  %v5542 = vsel %vm3584, %v5233, %v5235
  %v5543 = vsel %vm3584, %v5235, %v5237
  %v5544 = vsel %vm3584, %v5237, %v5239
  %v5545 = vsel %vm3584, %v5239, %v5241
  %v5546 = vsel %vm3584, %v5241, %v5243
  %v5547 = vsel %vm3584, %v5243, %v5245
  %v5548 = vsel %vm3584, %v5245, %v5247
  %v5549 = vsel %vm3584, %v5247, %v5249
  %v5550 = vsel %vm3584, %v5249, %v5251
  %v5551 = vsel %vm3584, %v5251, %v5253
  %v5552 = vsel %vm3584, %v5253, %v5255
  %v5553 = vsel %vm3584, %v5255, %v5257
  %v5554 = vsel %vm3584, %v5259, %v5261
  %v5555 = vsel %vm3584, %v5261, %v5263
  %v5556 = vsel %vm3584, %v5263, %v5265
  %v5557 = vsel %vm3584, %v5265, %v5267
  %v5558 = vsel %vm3584, %v5267, %v5269
  %v5559 = vsel %vm3584, %v5269, %v5271
  %v5560 = vsel %vm3584, %v5271, %v5273
  %v5561 = vsel %vm3584, %v5273, %v5275
  %v5562 = vsel %vm3584, %v5275, %v5277
  %v5563 = vsel %vm3584, %v5277, %v5279
  %v5564 = vsel %vm3584, %v5279, %v5281
  %v5565 = vsel %vm3584, %v5281, %v5283
  %v5566 = vsel %vm3584, %v5283, %v5285
  %v5567 = vsel %vm3584, %v5285, %v5287
  %v5568 = vsel %vm3584, %v5287, %v5289
  %v5569 = vsel %vm3584, %v5289, %v5291
  %v5570 = vsel %vm3584, %v5291, %v5293
  %v5571 = vsel %vm3584, %v5293, %v5295
  %v5572 = vsel %vm3584, %v5295, %v5297
  %v5573 = vsel %vm3584, %v5297, %v5299
  %v5574 = vsel %vm3584, %v5299, %v5301
  %v5575 = vsel %vm3584, %v5301, %v5303
  %v5576 = vsel %vm3584, %v5303, %v5305
  %v5577 = vsel %vm3584, %v5305, %v5307
  %v5578 = vsel %vm3584, %v5309, %v5311
  %v5579 = vsel %vm3584, %v5311, %v5313
  %v5580 = vsel %vm3584, %v5313, %v5315
  %v5581 = vsel %vm3584, %v5315, %v5317
  %v5582 = vsel %vm3584, %v5317, %v5319
  %v5583 = vsel %vm3584, %v5319, %v5321
  %v5584 = vsel %vm3584, %v5321, %v5323
  %v5585 = vsel %vm3584, %v5323, %v5325
  %v5586 = vsel %vm3584, %v5325, %v5327
  %v5587 = vsel %vm3584, %v5327, %v5329
  %v5588 = vsel %vm3584, %v5329, %v5331
  %v5589 = vsel %vm3584, %v5331, %v5333
  %v5590 = vsel %vm3584, %v5333, %v5335
  %v5591 = vsel %vm3584, %v5335, %v5337
  %v5592 = vsel %vm3584, %v5337, %v5339
  %v5593 = vsel %vm3584, %v5339, %v5341
  %v5594 = vsel %vm3584, %v5341, %v5343
  %v5595 = vsel %vm3584, %v5343, %v5345
  %v5596 = vsel %vm3584, %v5345, %v5347
  %v5597 = vsel %vm3584, %v5347, %v5349
  %v5598 = vsel %vm3584, %v5349, %v5351
  %v5599 = vsel %vm3584, %v5351, %v5353
  %v5600 = vsel %vm3584, %v5353, %v5355
  %v5601 = vsel %vm3584, %v5355, %v5357
  %v5602 = vsel %vm3584, %v5359, %v5361
  %v5603 = vsel %vm3584, %v5361, %v5363
  %v5604 = vsel %vm3584, %v5363, %v5365
  %v5605 = vsel %vm3584, %v5365, %v5367
  %v5606 = vsel %vm3584, %v5367, %v5369
  %v5607 = vsel %vm3584, %v5369, %v5371
  %v5608 = vsel %vm3584, %v5371, %v5373
  %v5609 = vsel %vm3584, %v5373, %v5375
  %v5610 = vsel %vm3584, %v5375, %v5377
  %v5611 = vsel %vm3584, %v5377, %v5379
  %v5612 = vsel %vm3584, %v5379, %v5381
  %v5613 = vsel %vm3584, %v5381, %v5383
  %v5614 = vsel %vm3584, %v5383, %v5385
  %v5615 = vsel %vm3584, %v5385, %v5387
  %v5616 = vsel %vm3584, %v5387, %v5389
  %v5617 = vsel %vm3584, %v5389, %v5391
  %v5618 = vsel %vm3584, %v5391, %v5393
  %v5619 = vsel %vm3584, %v5393, %v5395
  %v5620 = vsel %vm3584, %v5395, %v5397
  %v5621 = vsel %vm3584, %v5397, %v5399
  %v5622 = vsel %vm3584, %v5399, %v5401
  %v5623 = vsel %vm3584, %v5401, %v5403
  %v5624 = vsel %vm3584, %v5403, %v5405
  %v5625 = vsel %vm3584, %v5405, %v5407
  %v5626 = vsel %vm3584, %v5409, %v5411
  %v5627 = vsel %vm3584, %v5411, %v5413
  %v5628 = vsel %vm3584, %v5413, %v5415
  %v5629 = vsel %vm3584, %v5415, %v5417
  %v5630 = vsel %vm3584, %v5417, %v5419
  %v5631 = vsel %vm3584, %v5419, %v5421
  %v5632 = vsel %vm3584, %v5421, %v5423
  %v5633 = vsel %vm3584, %v5423, %v5425
  %v5634 = vsel %vm3584, %v5425, %v5427
  %v5635 = vsel %vm3584, %v5427, %v5429
  %v5636 = vsel %vm3584, %v5429, %v5431
  %v5637 = vsel %vm3584, %v5431, %v5433
  %v5638 = vsel %vm3584, %v5433, %v5435
  %v5639 = vsel %vm3584, %v5435, %v5437
  %v5640 = vsel %vm3584, %v5437, %v5439
  %v5641 = vsel %vm3584, %v5439, %v5441
  %v5642 = vsel %vm3584, %v5441, %v5443
  %v5643 = vsel %vm3584, %v5443, %v5445
  %v5644 = vsel %vm3584, %v5445, %v5447
  %v5645 = vsel %vm3584, %v5447, %v5449
  %v5646 = vsel %vm3584, %v5449, %v5451
  %v5647 = vsel %vm3584, %v5451, %v5453
  %v5648 = vsel %vm3584, %v5453, %v5455
  %v5649 = vsel %vm3584, %v5455, %v5457
  %vm5850 = vcmask 1048448
  %5851 = vst.msk [vmem:[%s3] sm:$0xff] %vm5850, %v5059
  %5852 = vst [vmem:[%s3 + $0x8] sm:$0xff] %v5458
  %5853 = vst [vmem:[%s3 + $0x10] sm:$0xff] %v5459
  %5854 = vst [vmem:[%s3 + $0x18] sm:$0xff] %v5460
  %5855 = vst [vmem:[%s3 + $0x20] sm:$0xff] %v5461
  %5856 = vst [vmem:[%s3 + $0x28] sm:$0xff] %v5462
  %5857 = vst [vmem:[%s3 + $0x30] sm:$0xff] %v5463
  %5858 = vst [vmem:[%s3 + $0x38] sm:$0xff] %v5464
  %5859 = vst [vmem:[%s3 + $0x40] sm:$0xff] %v5465
  %5860 = vst [vmem:[%s3 + $0x48] sm:$0xff] %v5466
  %5861 = vst [vmem:[%s3 + $0x50] sm:$0xff] %v5467
  %5862 = vst [vmem:[%s3 + $0x58] sm:$0xff] %v5468
  %5863 = vst [vmem:[%s3 + $0x60] sm:$0xff] %v5469
  %5864 = vst [vmem:[%s3 + $0x68] sm:$0xff] %v5470
  %5865 = vst [vmem:[%s3 + $0x70] sm:$0xff] %v5471
  %5866 = vst [vmem:[%s3 + $0x78] sm:$0xff] %v5472
  %5867 = vst [vmem:[%s3 + $0x80] sm:$0xff] %v5473
  %5868 = vst [vmem:[%s3 + $0x88] sm:$0xff] %v5474
  %5869 = vst [vmem:[%s3 + $0x90] sm:$0xff] %v5475
  %5870 = vst [vmem:[%s3 + $0x98] sm:$0xff] %v5476
  %5871 = vst [vmem:[%s3 + $0xa0] sm:$0xff] %v5477
  %5872 = vst [vmem:[%s3 + $0xa8] sm:$0xff] %v5478
  %5873 = vst [vmem:[%s3 + $0xb0] sm:$0xff] %v5479
  %5874 = vst [vmem:[%s3 + $0xb8] sm:$0xff] %v5480
  %5875 = vst.msk [vmem:[%s3 + $0xc0] sm:$0xff] %vm2058, %v5481
  %5876 = vst.msk [vmem:[%s3 + $0xc8] sm:$0xff] %vm5850, %v5109
  %5877 = vst [vmem:[%s3 + $0xd0] sm:$0xff] %v5482
  %5878 = vst [vmem:[%s3 + $0xd8] sm:$0xff] %v5483
  %5879 = vst [vmem:[%s3 + $0xe0] sm:$0xff] %v5484
  %5880 = vst [vmem:[%s3 + $0xe8] sm:$0xff] %v5485
  %5881 = vst [vmem:[%s3 + $0xf0] sm:$0xff] %v5486
  %5882 = vst [vmem:[%s3 + $0xf8] sm:$0xff] %v5487
  %5883 = vst [vmem:[%s3 + $0x100] sm:$0xff] %v5488
  %5884 = vst [vmem:[%s3 + $0x108] sm:$0xff] %v5489
  %5885 = vst [vmem:[%s3 + $0x110] sm:$0xff] %v5490
  %5886 = vst [vmem:[%s3 + $0x118] sm:$0xff] %v5491
  %5887 = vst [vmem:[%s3 + $0x120] sm:$0xff] %v5492
  %5888 = vst [vmem:[%s3 + $0x128] sm:$0xff] %v5493
  %5889 = vst [vmem:[%s3 + $0x130] sm:$0xff] %v5494
  %5890 = vst [vmem:[%s3 + $0x138] sm:$0xff] %v5495
  %5891 = vst [vmem:[%s3 + $0x140] sm:$0xff] %v5496
  %5892 = vst [vmem:[%s3 + $0x148] sm:$0xff] %v5497
  %5893 = vst [vmem:[%s3 + $0x150] sm:$0xff] %v5498
  %5894 = vst [vmem:[%s3 + $0x158] sm:$0xff] %v5499
  %5895 = vst [vmem:[%s3 + $0x160] sm:$0xff] %v5500
  %5896 = vst [vmem:[%s3 + $0x168] sm:$0xff] %v5501
  %5897 = vst [vmem:[%s3 + $0x170] sm:$0xff] %v5502
  %5898 = vst [vmem:[%s3 + $0x178] sm:$0xff] %v5503
  %5899 = vst [vmem:[%s3 + $0x180] sm:$0xff] %v5504
  %5900 = vst.msk [vmem:[%s3 + $0x188] sm:$0xff] %vm2058, %v5505
  %5901 = vst.msk [vmem:[%s3 + $0x190] sm:$0xff] %vm5850, %v5159
  %5902 = vst [vmem:[%s3 + $0x198] sm:$0xff] %v5506
  %5903 = vst [vmem:[%s3 + $0x1a0] sm:$0xff] %v5507
  %5904 = vst [vmem:[%s3 + $0x1a8] sm:$0xff] %v5508
  %5905 = vst [vmem:[%s3 + $0x1b0] sm:$0xff] %v5509
  %5906 = vst [vmem:[%s3 + $0x1b8] sm:$0xff] %v5510
  %5907 = vst [vmem:[%s3 + $0x1c0] sm:$0xff] %v5511
  %5908 = vst [vmem:[%s3 + $0x1c8] sm:$0xff] %v5512
  %5909 = vst [vmem:[%s3 + $0x1d0] sm:$0xff] %v5513
  %5910 = vst [vmem:[%s3 + $0x1d8] sm:$0xff] %v5514
  %5911 = vst [vmem:[%s3 + $0x1e0] sm:$0xff] %v5515
  %5912 = vst [vmem:[%s3 + $0x1e8] sm:$0xff] %v5516
  %5913 = vst [vmem:[%s3 + $0x1f0] sm:$0xff] %v5517
  %5914 = vst [vmem:[%s3 + $0x1f8] sm:$0xff] %v5518
  %5915 = vst [vmem:[%s3 + $0x200] sm:$0xff] %v5519
  %5916 = vst [vmem:[%s3 + $0x208] sm:$0xff] %v5520
  %5917 = vst [vmem:[%s3 + $0x210] sm:$0xff] %v5521
  %5918 = vst [vmem:[%s3 + $0x218] sm:$0xff] %v5522
  %5919 = vst [vmem:[%s3 + $0x220] sm:$0xff] %v5523
  %5920 = vst [vmem:[%s3 + $0x228] sm:$0xff] %v5524
  %5921 = vst [vmem:[%s3 + $0x230] sm:$0xff] %v5525
  %5922 = vst [vmem:[%s3 + $0x238] sm:$0xff] %v5526
  %5923 = vst [vmem:[%s3 + $0x240] sm:$0xff] %v5527
  %5924 = vst [vmem:[%s3 + $0x248] sm:$0xff] %v5528
  %5925 = vst.msk [vmem:[%s3 + $0x250] sm:$0xff] %vm2058, %v5529
  %5926 = vst.msk [vmem:[%s3 + $0x258] sm:$0xff] %vm5850, %v5209
  %5927 = vst [vmem:[%s3 + $0x260] sm:$0xff] %v5530
  %5928 = vst [vmem:[%s3 + $0x268] sm:$0xff] %v5531
  %5929 = vst [vmem:[%s3 + $0x270] sm:$0xff] %v5532
  %5930 = vst [vmem:[%s3 + $0x278] sm:$0xff] %v5533
  %5931 = vst [vmem:[%s3 + $0x280] sm:$0xff] %v5534
  %5932 = vst [vmem:[%s3 + $0x288] sm:$0xff] %v5535
  %5933 = vst [vmem:[%s3 + $0x290] sm:$0xff] %v5536
  %5934 = vst [vmem:[%s3 + $0x298] sm:$0xff] %v5537
  %5935 = vst [vmem:[%s3 + $0x2a0] sm:$0xff] %v5538
  %5936 = vst [vmem:[%s3 + $0x2a8] sm:$0xff] %v5539
  %5937 = vst [vmem:[%s3 + $0x2b0] sm:$0xff] %v5540
  %5938 = vst [vmem:[%s3 + $0x2b8] sm:$0xff] %v5541
  %5939 = vst [vmem:[%s3 + $0x2c0] sm:$0xff] %v5542
  %5940 = vst [vmem:[%s3 + $0x2c8] sm:$0xff] %v5543
  %5941 = vst [vmem:[%s3 + $0x2d0] sm:$0xff] %v5544
  %5942 = vst [vmem:[%s3 + $0x2d8] sm:$0xff] %v5545
  %5943 = vst [vmem:[%s3 + $0x2e0] sm:$0xff] %v5546
  %5944 = vst [vmem:[%s3 + $0x2e8] sm:$0xff] %v5547
  %5945 = vst [vmem:[%s3 + $0x2f0] sm:$0xff] %v5548
  %5946 = vst [vmem:[%s3 + $0x2f8] sm:$0xff] %v5549
  %5947 = vst [vmem:[%s3 + $0x300] sm:$0xff] %v5550
  %5948 = vst [vmem:[%s3 + $0x308] sm:$0xff] %v5551
  %5949 = vst [vmem:[%s3 + $0x310] sm:$0xff] %v5552
  %5950 = vst.msk [vmem:[%s3 + $0x318] sm:$0xff] %vm2058, %v5553
  %5951 = vst.msk [vmem:[%s3 + $0x320] sm:$0xff] %vm5850, %v5259
  %5952 = vst [vmem:[%s3 + $0x328] sm:$0xff] %v5554
  %5953 = vst [vmem:[%s3 + $0x330] sm:$0xff] %v5555
  %5954 = vst [vmem:[%s3 + $0x338] sm:$0xff] %v5556
  %5955 = vst [vmem:[%s3 + $0x340] sm:$0xff] %v5557
  %5956 = vst [vmem:[%s3 + $0x348] sm:$0xff] %v5558
  %5957 = vst [vmem:[%s3 + $0x350] sm:$0xff] %v5559
  %5958 = vst [vmem:[%s3 + $0x358] sm:$0xff] %v5560
  %5959 = vst [vmem:[%s3 + $0x360] sm:$0xff] %v5561
  %5960 = vst [vmem:[%s3 + $0x368] sm:$0xff] %v5562
  %5961 = vst [vmem:[%s3 + $0x370] sm:$0xff] %v5563
  %5962 = vst [vmem:[%s3 + $0x378] sm:$0xff] %v5564
  %5963 = vst [vmem:[%s3 + $0x380] sm:$0xff] %v5565
  %5964 = vst [vmem:[%s3 + $0x388] sm:$0xff] %v5566
  %5965 = vst [vmem:[%s3 + $0x390] sm:$0xff] %v5567
  %5966 = vst [vmem:[%s3 + $0x398] sm:$0xff] %v5568
  %5967 = vst [vmem:[%s3 + $0x3a0] sm:$0xff] %v5569
  %5968 = vst [vmem:[%s3 + $0x3a8] sm:$0xff] %v5570
  %5969 = vst [vmem:[%s3 + $0x3b0] sm:$0xff] %v5571
  %5970 = vst [vmem:[%s3 + $0x3b8] sm:$0xff] %v5572
  %5971 = vst [vmem:[%s3 + $0x3c0] sm:$0xff] %v5573
  %5972 = vst [vmem:[%s3 + $0x3c8] sm:$0xff] %v5574
  %5973 = vst [vmem:[%s3 + $0x3d0] sm:$0xff] %v5575
  %5974 = vst [vmem:[%s3 + $0x3d8] sm:$0xff] %v5576
  %5975 = vst.msk [vmem:[%s3 + $0x3e0] sm:$0xff] %vm2058, %v5577
  %5976 = vst.msk [vmem:[%s3 + $0x3e8] sm:$0xff] %vm5850, %v5309
  %5977 = vst [vmem:[%s3 + $0x3f0] sm:$0xff] %v5578
  %5978 = vst [vmem:[%s3 + $0x3f8] sm:$0xff] %v5579
  %5979 = vst [vmem:[%s3 + $0x400] sm:$0xff] %v5580
  %5980 = vst [vmem:[%s3 + $0x408] sm:$0xff] %v5581
  %5981 = vst [vmem:[%s3 + $0x410] sm:$0xff] %v5582
  %5982 = vst [vmem:[%s3 + $0x418] sm:$0xff] %v5583
  %5983 = vst [vmem:[%s3 + $0x420] sm:$0xff] %v5584
  %5984 = vst [vmem:[%s3 + $0x428] sm:$0xff] %v5585
  %5985 = vst [vmem:[%s3 + $0x430] sm:$0xff] %v5586
  %5986 = vst [vmem:[%s3 + $0x438] sm:$0xff] %v5587
  %5987 = vst [vmem:[%s3 + $0x440] sm:$0xff] %v5588
  %5988 = vst [vmem:[%s3 + $0x448] sm:$0xff] %v5589
  %5989 = vst [vmem:[%s3 + $0x450] sm:$0xff] %v5590
  %5990 = vst [vmem:[%s3 + $0x458] sm:$0xff] %v5591
  %5991 = vst [vmem:[%s3 + $0x460] sm:$0xff] %v5592
  %5992 = vst [vmem:[%s3 + $0x468] sm:$0xff] %v5593
  %5993 = vst [vmem:[%s3 + $0x470] sm:$0xff] %v5594
  %5994 = vst [vmem:[%s3 + $0x478] sm:$0xff] %v5595
  %5995 = vst [vmem:[%s3 + $0x480] sm:$0xff] %v5596
  %5996 = vst [vmem:[%s3 + $0x488] sm:$0xff] %v5597
  %5997 = vst [vmem:[%s3 + $0x490] sm:$0xff] %v5598
  %5998 = vst [vmem:[%s3 + $0x498] sm:$0xff] %v5599
  %5999 = vst [vmem:[%s3 + $0x4a0] sm:$0xff] %v5600
  %6000 = vst.msk [vmem:[%s3 + $0x4a8] sm:$0xff] %vm2058, %v5601
  %6001 = vst.msk [vmem:[%s3 + $0x4b0] sm:$0xff] %vm5850, %v5359
  %6002 = vst [vmem:[%s3 + $0x4b8] sm:$0xff] %v5602
  %6003 = vst [vmem:[%s3 + $0x4c0] sm:$0xff] %v5603
  %6004 = vst [vmem:[%s3 + $0x4c8] sm:$0xff] %v5604
  %6005 = vst [vmem:[%s3 + $0x4d0] sm:$0xff] %v5605
  %6006 = vst [vmem:[%s3 + $0x4d8] sm:$0xff] %v5606
  %6007 = vst [vmem:[%s3 + $0x4e0] sm:$0xff] %v5607
  %6008 = vst [vmem:[%s3 + $0x4e8] sm:$0xff] %v5608
  %6009 = vst [vmem:[%s3 + $0x4f0] sm:$0xff] %v5609
  %6010 = vst [vmem:[%s3 + $0x4f8] sm:$0xff] %v5610
  %6011 = vst [vmem:[%s3 + $0x500] sm:$0xff] %v5611
  %6012 = vst [vmem:[%s3 + $0x508] sm:$0xff] %v5612
  %6013 = vst [vmem:[%s3 + $0x510] sm:$0xff] %v5613
  %6014 = vst [vmem:[%s3 + $0x518] sm:$0xff] %v5614
  %6015 = vst [vmem:[%s3 + $0x520] sm:$0xff] %v5615
  %6016 = vst [vmem:[%s3 + $0x528] sm:$0xff] %v5616
  %6017 = vst [vmem:[%s3 + $0x530] sm:$0xff] %v5617
  %6018 = vst [vmem:[%s3 + $0x538] sm:$0xff] %v5618
  %6019 = vst [vmem:[%s3 + $0x540] sm:$0xff] %v5619
  %6020 = vst [vmem:[%s3 + $0x548] sm:$0xff] %v5620
  %6021 = vst [vmem:[%s3 + $0x550] sm:$0xff] %v5621
  %6022 = vst [vmem:[%s3 + $0x558] sm:$0xff] %v5622
  %6023 = vst [vmem:[%s3 + $0x560] sm:$0xff] %v5623
  %6024 = vst [vmem:[%s3 + $0x568] sm:$0xff] %v5624
  %6025 = vst.msk [vmem:[%s3 + $0x570] sm:$0xff] %vm2058, %v5625
  %6026 = vst.msk [vmem:[%s3 + $0x578] sm:$0xff] %vm5850, %v5409
  %6027 = vst [vmem:[%s3 + $0x580] sm:$0xff] %v5626
  %6028 = vst [vmem:[%s3 + $0x588] sm:$0xff] %v5627
  %6029 = vst [vmem:[%s3 + $0x590] sm:$0xff] %v5628
  %6030 = vst [vmem:[%s3 + $0x598] sm:$0xff] %v5629
  %6031 = vst [vmem:[%s3 + $0x5a0] sm:$0xff] %v5630
  %6032 = vst [vmem:[%s3 + $0x5a8] sm:$0xff] %v5631
  %6033 = vst [vmem:[%s3 + $0x5b0] sm:$0xff] %v5632
  %6034 = vst [vmem:[%s3 + $0x5b8] sm:$0xff] %v5633
  %6035 = vst [vmem:[%s3 + $0x5c0] sm:$0xff] %v5634
  %6036 = vst [vmem:[%s3 + $0x5c8] sm:$0xff] %v5635
  %6037 = vst [vmem:[%s3 + $0x5d0] sm:$0xff] %v5636
  %6038 = vst [vmem:[%s3 + $0x5d8] sm:$0xff] %v5637
  %6039 = vst [vmem:[%s3 + $0x5e0] sm:$0xff] %v5638
  %6040 = vst [vmem:[%s3 + $0x5e8] sm:$0xff] %v5639
  %6041 = vst [vmem:[%s3 + $0x5f0] sm:$0xff] %v5640
  %6042 = vst [vmem:[%s3 + $0x5f8] sm:$0xff] %v5641
  %6043 = vst [vmem:[%s3 + $0x600] sm:$0xff] %v5642
  %6044 = vst [vmem:[%s3 + $0x608] sm:$0xff] %v5643
  %6045 = vst [vmem:[%s3 + $0x610] sm:$0xff] %v5644
  %6046 = vst [vmem:[%s3 + $0x618] sm:$0xff] %v5645
  %6047 = vst [vmem:[%s3 + $0x620] sm:$0xff] %v5646
  %6048 = vst [vmem:[%s3 + $0x628] sm:$0xff] %v5647
  %6049 = vst [vmem:[%s3 + $0x630] sm:$0xff] %v5648
  %6050 = vst.msk [vmem:[%s3 + $0x638] sm:$0xff] %vm2058, %v5649
  // Predicated region
  $region14: #{kernel_generated_0_forward.1} parent=0 // pred_check
    _
  $region15: #{kernel_generated_0_forward.1} parent=0 // pred_check_branch
    %6052 = sbr.rel (0) target = $region17
  $region16: #{kernel_generated_0_forward.1} parent=0 // pred_region
    _
  $region17: #{kernel_generated_0_forward.1} parent=0 // pred_fallthru
    _
  // Predicated region
  $region18: #{kernel_generated_0_forward.1} parent=0 // pred_check
    _
  $region19: #{kernel_generated_0_forward.1} parent=0 // pred_check_branch
    %6054 = sbr.rel (0) target = $region21
  $region20: #{kernel_generated_0_forward.1} parent=0 // pred_region
    _
  $region21: #{kernel_generated_0_forward.1} parent=0 // pred_fallthru
    _

</llo_original>
